<compile_context>
chip_gen: v7x
topology: tpu7x:2x2x1
jax: 0.10.0
libtpu: 0.0.40
codegen_flags: <defaults>
</compile_context>

<pallas_src>
import functools

import jax
import jax.numpy as jnp
from jax.experimental import pallas as pl
from jax.experimental.pallas import tpu as pltpu


# ------------------------------ fused forward kernel ------------------------------
def _fused_forward_kernel(ids_ref, emb_ref, wih_ref, wm_ref, bias_ref, att_ref,
                          out_ref, xbuf_ref, gxbuf_ref, ctx_ref, *, T, B, H, D):
    f32 = jnp.float32
    H4 = 4 * H

    # ---- in-kernel embedding gather, time-major row order r = t*B + b ----
    for t in range(T):
        for b in range(B):
            idx = ids_ref[b, t]                                   # scalar from SMEM
            xbuf_ref[pl.ds(t * B + b, 1), :] = emb_ref[pl.ds(idx, 1), :]

    def act(gates):
        # gate columns pre-reordered to [i, f, o, g]: one sigmoid slab + one tanh slab
        sg = jax.nn.sigmoid(gates[:, :3 * H])
        g = jnp.tanh(gates[:, 3 * H:])
        return sg[:, :H], sg[:, H:2 * H], sg[:, 2 * H:], g        # i, f, o, g

    def run_stack(get_gx, m_blk, b_b, rows, n_steps, store_fn=None):
        """Two stacked LSTM layers, interleaved per step.

        Per step: layer-a gates = hoisted input projection + (h_a @ U_a carried
        from the previous step's fused matmul); then ONE (rows,2H)@(2H,8H) MXU
        push on [h_a(t) | h_b(t-1)] yields [h_a@U_a | h_a@W_b + h_b@U_b], i.e.
        layer-a's next-step recurrent term and layer-b's current gates.
        """
        ra = jnp.zeros((rows, H4), f32)                           # h_a(t-1) @ U_a
        ca = jnp.zeros((rows, H), f32)
        hb = jnp.zeros((rows, H), f32)
        cb = jnp.zeros((rows, H), f32)
        for t in range(n_steps):                                  # unrolled serial chain
            ia, fa, oa, ga = act(get_gx(t) + ra)
            ca = fa * ca + ia * ga
            ha = oa * jnp.tanh(ca)
            z = jnp.dot(jnp.concatenate([ha, hb], axis=1), m_blk,
                        preferred_element_type=f32)               # (rows, 8H)
            ra = z[:, :H4]
            ib, fb, ob, gb = act(z[:, H4:] + b_b)
            cb = fb * cb + ib * gb
            hb = ob * jnp.tanh(cb)
            if store_fn is not None:
                store_fn(t, hb)
        return hb

    # ---- LSTM stack 1: over time (T steps, batch B rows) ----
    w1a = wih_ref[0:D, :]
    m1 = wm_ref[0:2 * H, :]
    b1a = bias_ref[0:1, :]
    b1b = bias_ref[1:2, :]
    gxbuf_ref[...] = jnp.dot(xbuf_ref[...], w1a, preferred_element_type=f32) + b1a
    post = run_stack(lambda t: gxbuf_ref[pl.ds(t * B, B), :], m1, b1b, B, T)  # (B, H)

    # ---- LSTM stack 2: over the batch of last hidden states (B steps, 1 row) ----
    w2a = wih_ref[D:D + H, :]
    m2 = wm_ref[2 * H:4 * H, :]
    b2a = bias_ref[2:3, :]
    b2b = bias_ref[3:4, :]
    gxbuf_ref[0:B, :] = jnp.dot(post, w2a, preferred_element_type=f32) + b2a

    def store_ctx(s, h):
        ctx_ref[pl.ds(s, 1), :] = h                               # vst slot is idle

    run_stack(lambda s: gxbuf_ref[pl.ds(s, 1), :], m2, b2b, 1, B, store_ctx)
    ctx = ctx_ref[...]                                            # (B, H)

    # ---- additive attention over the B context rows + final projection ----
    wah = att_ref[0:H, 0:H]
    wac = att_ref[H:2 * H, 0:H]
    ba = att_ref[2 * H:2 * H + 1, 0:H]
    v_row = att_ref[2 * H + 1:2 * H + 2, 0:H]
    wfc = att_ref[2 * H + 2:2 * H + 3, 0:H]
    bfc = att_ref[2 * H + 3:2 * H + 4, 0:1]

    hidden = post[B - 1:B, :]                                     # (1,H) == post_vectors[-1]
    hproj = jnp.dot(hidden, wah, preferred_element_type=f32) + ba
    energy = jnp.tanh(jnp.dot(ctx, wac, preferred_element_type=f32) + hproj)  # (B, H)
    scores = jnp.sum(energy * v_row, axis=1, keepdims=True)       # VPU mul + lane reduce
    m = jnp.max(scores, axis=0, keepdims=True)
    e = jnp.exp(scores - m)
    w = e / jnp.sum(e, axis=0, keepdims=True)                     # exact softmax denominator
    attended = jnp.sum(w * ctx, axis=0, keepdims=True)            # (1, H)
    out_ref[...] = jnp.sum(attended * wfc, axis=1, keepdims=True) + bfc


# ------------------------ one-time weight repacking (outside jit) -------------------
def _reorder_gates(a, H):
    """PyTorch gate order [i, f, g, o] along axis 0 -> [i, f, o, g]."""
    return jnp.concatenate([a[:2 * H], a[3 * H:], a[2 * H:3 * H]], axis=0)


def _prep_layer(w_ih, w_hh, b_ih, b_hh, H):
    w = _reorder_gates(jnp.asarray(w_ih, jnp.float32), H).T       # (Din, 4H)
    u = _reorder_gates(jnp.asarray(w_hh, jnp.float32), H).T       # (H, 4H)
    b = _reorder_gates(jnp.asarray(b_ih + b_hh, jnp.float32), H)  # (4H,)
    return w, u, b


def prepare_params(params):
    """Repack PyTorch-layout weights into a few lane-dense slabs (done once)."""
    H = params["lstm1_l0"][1].shape[1]

    w1a, u1a, b1a = _prep_layer(*params["lstm1_l0"], H)
    w1b, u1b, b1b = _prep_layer(*params["lstm1_l1"], H)
    w2a, u2a, b2a = _prep_layer(*params["lstm2_l0"], H)
    w2b, u2b, b2b = _prep_layer(*params["lstm2_l1"], H)

    def block(u_a, w_b, u_b):  # [[U_a, W_b], [0, U_b]] -> (2H, 8H)
        top = jnp.concatenate([u_a, w_b], axis=1)
        bot = jnp.concatenate([jnp.zeros_like(u_b), u_b], axis=1)
        return jnp.concatenate([top, bot], axis=0)

    wih = jnp.concatenate([w1a, w2a], axis=0)                     # (D+H, 4H)
    wm = jnp.concatenate([block(u1a, w1b, u1b),
                          block(u2a, w2b, u2b)], axis=0)          # (4H, 8H)
    bias = jnp.stack([b1a, b1b, b2a, b2b], axis=0)                # (4, 4H)

    att = jnp.zeros((2 * H + 4, 4 * H), jnp.float32)              # padded lane-dense slab
    att = att.at[0:H, 0:H].set(jnp.asarray(params["attn_w"][:, :H].T, jnp.float32))
    att = att.at[H:2 * H, 0:H].set(jnp.asarray(params["attn_w"][:, H:].T, jnp.float32))
    att = att.at[2 * H, 0:H].set(jnp.asarray(params["attn_b"], jnp.float32))
    att = att.at[2 * H + 1, 0:H].set(jnp.asarray(params["v"], jnp.float32))
    att = att.at[2 * H + 2, 0:H].set(jnp.asarray(params["fc_w"][0], jnp.float32))
    att = att.at[2 * H + 3, 0].set(jnp.asarray(params["fc_b"][0], jnp.float32))

    return {"emb": jnp.asarray(params["embed"], jnp.float32),
            "wih": wih, "wm": wm, "bias": bias, "att": att}


# --------------------------------- jitted forward ----------------------------------
@jax.jit
def forward(packed, x_ids):
    """x_ids: (B, T) int32 token ids; the torch model's unused `extra` arg is dropped."""
    B, T = x_ids.shape
    D = packed["emb"].shape[1]
    H = packed["bias"].shape[1] // 4

    kernel = functools.partial(_fused_forward_kernel, T=T, B=B, H=H, D=D)
    return pl.pallas_call(
        kernel,
        out_shape=jax.ShapeDtypeStruct((1, 1), jnp.float32),
        in_specs=[
            pl.BlockSpec(memory_space=pltpu.MemorySpace.SMEM),    # token ids (B, T)
            pl.BlockSpec(memory_space=pltpu.MemorySpace.VMEM),    # embedding table (V, D)
            pl.BlockSpec(memory_space=pltpu.MemorySpace.VMEM),    # packed W_ih slab
            pl.BlockSpec(memory_space=pltpu.MemorySpace.VMEM),    # packed recurrent block mats
            pl.BlockSpec(memory_space=pltpu.MemorySpace.VMEM),    # packed biases
            pl.BlockSpec(memory_space=pltpu.MemorySpace.VMEM),    # packed attention / fc slab
        ],
        out_specs=pl.BlockSpec(memory_space=pltpu.MemorySpace.VMEM),
        scratch_shapes=[
            pltpu.VMEM((T * B, D), jnp.float32),                  # gathered embeddings
            pltpu.VMEM((T * B, 4 * H), jnp.float32),              # hoisted input projections
            pltpu.VMEM((B, H), jnp.float32),                      # stack-2 context rows
        ],
    )(x_ids, packed["emb"], packed["wih"], packed["wm"], packed["bias"], packed["att"])


# ------------------------------- pure-JAX reference --------------------------------
def _lstm_layer_ref(x, w_ih, w_hh, b_ih, b_hh):
    T, B, _ = x.shape
    H = w_hh.shape[1]

    def step(carry, x_t):
        h, c = carry
        gates = x_t @ w_ih.T + h @ w_hh.T + b_ih + b_hh
        i, f, g, o = jnp.split(gates, 4, axis=-1)
        c = jax.nn.sigmoid(f) * c + jax.nn.sigmoid(i) * jnp.tanh(g)
        h = jax.nn.sigmoid(o) * jnp.tanh(c)
        return (h, c), h

    init = (jnp.zeros((B, H), jnp.float32), jnp.zeros((B, H), jnp.float32))
    _, ys = jax.lax.scan(step, init, x)
    return ys


def forward_ref(params, x_ids):
    emb = jnp.take(params["embed"], x_ids, axis=0)
    x = jnp.transpose(emb, (1, 0, 2))
    h = _lstm_layer_ref(x, *params["lstm1_l0"])
    h = _lstm_layer_ref(h, *params["lstm1_l1"])
    post = h[-1]
    pv = post[:, None, :]
    ctx = _lstm_layer_ref(pv, *params["lstm2_l0"])
    ctx = _lstm_layer_ref(ctx, *params["lstm2_l1"])
    hidden = pv[-1]
    ctx2d = ctx[:, 0, :]
    cat = jnp.concatenate([jnp.broadcast_to(hidden, ctx2d.shape), ctx2d], axis=1)
    energy = jnp.tanh(cat @ params["attn_w"].T + params["attn_b"])
    scores = energy @ params["v"]
    w = jax.nn.softmax(scores)
    attended = w @ ctx2d
    return (attended @ params["fc_w"].T + params["fc_b"]).reshape(1, 1)


# ----------------------------------- parameters ------------------------------------
def init_params(key, V, D, H):
    ks = jax.random.split(key, 24)
    s = 1.0 / (H ** 0.5)

    def u(k, shape):
        return jax.random.uniform(k, shape, jnp.float32, -s, s)

    def lstm(k0, k1, k2, k3, din):
        return (u(ks[k0], (4 * H, din)), u(ks[k1], (4 * H, H)),
                u(ks[k2], (4 * H,)), u(ks[k3], (4 * H,)))

    return {
        "embed": jax.random.normal(ks[0], (V, D), jnp.float32) * 0.1,
        "lstm1_l0": lstm(1, 2, 3, 4, D),
        "lstm1_l1": lstm(5, 6, 7, 8, H),
        "lstm2_l0": lstm(9, 10, 11, 12, H),
        "lstm2_l1": lstm(13, 14, 15, 16, H),
        "attn_w": u(ks[17], (H, 2 * H)),
        "attn_b": u(ks[18], (H,)),
        "v": jax.random.normal(ks[19], (H,), jnp.float32) * s,
        "fc_w": u(ks[20], (1, H)),
        "fc_b": u(ks[21], (1,)),
    }


if __name__ == "__main__":
    V, D, H = 50, 32, 32      # embed_num, embed_dim, hidden
    B, T = 4, 8               # batch, sequence length

    key = jax.random.PRNGKey(0)
    params = init_params(key, V, D, H)
    packed = prepare_params(params)    # one-time repack, outside the jitted path
    x_ids = jax.random.randint(jax.random.fold_in(key, 999), (B, T), 0, V,
                               dtype=jnp.int32)

    logit = jax.block_until_ready(forward(packed, x_ids))
    assert logit.shape == (1, 1)

    ref = jax.block_until_ready(forward_ref(params, x_ids))
    assert jnp.allclose(logit, ref, rtol=2e-4, atol=2e-4), (logit, ref)

    print("KERNEL_OK")
</pallas_src>

<mosaic_0001>
module attributes {stable_mosaic.version = 11 : i64} {
  func.func @_fused_forward_kernel(%arg0: memref<4x8xi32, #tpu.memory_space<smem>>, %arg1: memref<50x32xf32, #tpu.memory_space<vmem>>, %arg2: memref<64x128xf32, #tpu.memory_space<vmem>>, %arg3: memref<128x256xf32, #tpu.memory_space<vmem>>, %arg4: memref<4x128xf32, #tpu.memory_space<vmem>>, %arg5: memref<68x128xf32, #tpu.memory_space<vmem>>, %arg6: memref<1x1xf32, #tpu.memory_space<vmem>>, %arg7: memref<32x32xf32, #tpu.memory_space<vmem>>, %arg8: memref<32x128xf32, #tpu.memory_space<vmem>>, %arg9: memref<4x32xf32, #tpu.memory_space<vmem>>) attributes {dimension_semantics = [], scalar_prefetch = 0 : i64, scratch_operands = 3 : i64, tpu.core_type = #tpu.core_type<tc>} {
    %c0 = arith.constant 0 : index
    %c0_0 = arith.constant 0 : index
    %0 = memref.load %arg0[%c0, %c0_0] : memref<4x8xi32, #tpu.memory_space<smem>>
    %1 = arith.index_cast %0 : i32 to index
    %c0_1 = arith.constant 0 : index
    %2 = vector.load %arg1[%1, %c0_1] : memref<50x32xf32, #tpu.memory_space<vmem>>, vector<1x32xf32>
    %c0_2 = arith.constant 0 : index
    %c0_3 = arith.constant 0 : index
    %3 = vector.load %arg7[%c0_2, %c0_3] : memref<32x32xf32, #tpu.memory_space<vmem>>, vector<1x32xf32>
    tpu.vector_store %arg7[%c0_2, %c0_3], %2 {strides = array<i32>} : memref<32x32xf32, #tpu.memory_space<vmem>>, vector<1x32xf32>,
    %c1 = arith.constant 1 : index
    %c0_4 = arith.constant 0 : index
    %4 = memref.load %arg0[%c1, %c0_4] : memref<4x8xi32, #tpu.memory_space<smem>>
    %5 = arith.index_cast %4 : i32 to index
    %c0_5 = arith.constant 0 : index
    %6 = vector.load %arg1[%5, %c0_5] : memref<50x32xf32, #tpu.memory_space<vmem>>, vector<1x32xf32>
    %c1_6 = arith.constant 1 : index
    %c0_7 = arith.constant 0 : index
    %7 = vector.load %arg7[%c1_6, %c0_7] : memref<32x32xf32, #tpu.memory_space<vmem>>, vector<1x32xf32>
    tpu.vector_store %arg7[%c1_6, %c0_7], %6 {strides = array<i32>} : memref<32x32xf32, #tpu.memory_space<vmem>>, vector<1x32xf32>,
    %c2 = arith.constant 2 : index
    %c0_8 = arith.constant 0 : index
    %8 = memref.load %arg0[%c2, %c0_8] : memref<4x8xi32, #tpu.memory_space<smem>>
    %9 = arith.index_cast %8 : i32 to index
    %c0_9 = arith.constant 0 : index
    %10 = vector.load %arg1[%9, %c0_9] : memref<50x32xf32, #tpu.memory_space<vmem>>, vector<1x32xf32>
    %c2_10 = arith.constant 2 : index
    %c0_11 = arith.constant 0 : index
    %11 = vector.load %arg7[%c2_10, %c0_11] : memref<32x32xf32, #tpu.memory_space<vmem>>, vector<1x32xf32>
    tpu.vector_store %arg7[%c2_10, %c0_11], %10 {strides = array<i32>} : memref<32x32xf32, #tpu.memory_space<vmem>>, vector<1x32xf32>,
    %c3 = arith.constant 3 : index
    %c0_12 = arith.constant 0 : index
    %12 = memref.load %arg0[%c3, %c0_12] : memref<4x8xi32, #tpu.memory_space<smem>>
    %13 = arith.index_cast %12 : i32 to index
    %c0_13 = arith.constant 0 : index
    %14 = vector.load %arg1[%13, %c0_13] : memref<50x32xf32, #tpu.memory_space<vmem>>, vector<1x32xf32>
    %c3_14 = arith.constant 3 : index
    %c0_15 = arith.constant 0 : index
    %15 = vector.load %arg7[%c3_14, %c0_15] : memref<32x32xf32, #tpu.memory_space<vmem>>, vector<1x32xf32>
    tpu.vector_store %arg7[%c3_14, %c0_15], %14 {strides = array<i32>} : memref<32x32xf32, #tpu.memory_space<vmem>>, vector<1x32xf32>,
    %c0_16 = arith.constant 0 : index
    %c1_17 = arith.constant 1 : index
    %16 = memref.load %arg0[%c0_16, %c1_17] : memref<4x8xi32, #tpu.memory_space<smem>>
    %17 = arith.index_cast %16 : i32 to index
    %c0_18 = arith.constant 0 : index
    %18 = vector.load %arg1[%17, %c0_18] : memref<50x32xf32, #tpu.memory_space<vmem>>, vector<1x32xf32>
    %c4 = arith.constant 4 : index
    %c0_19 = arith.constant 0 : index
    %19 = vector.load %arg7[%c4, %c0_19] : memref<32x32xf32, #tpu.memory_space<vmem>>, vector<1x32xf32>
    tpu.vector_store %arg7[%c4, %c0_19], %18 {strides = array<i32>} : memref<32x32xf32, #tpu.memory_space<vmem>>, vector<1x32xf32>,
    %c1_20 = arith.constant 1 : index
    %c1_21 = arith.constant 1 : index
    %20 = memref.load %arg0[%c1_20, %c1_21] : memref<4x8xi32, #tpu.memory_space<smem>>
    %21 = arith.index_cast %20 : i32 to index
    %c0_22 = arith.constant 0 : index
    %22 = vector.load %arg1[%21, %c0_22] : memref<50x32xf32, #tpu.memory_space<vmem>>, vector<1x32xf32>
    %c5 = arith.constant 5 : index
    %c0_23 = arith.constant 0 : index
    %23 = vector.load %arg7[%c5, %c0_23] : memref<32x32xf32, #tpu.memory_space<vmem>>, vector<1x32xf32>
    tpu.vector_store %arg7[%c5, %c0_23], %22 {strides = array<i32>} : memref<32x32xf32, #tpu.memory_space<vmem>>, vector<1x32xf32>,
    %c2_24 = arith.constant 2 : index
    %c1_25 = arith.constant 1 : index
    %24 = memref.load %arg0[%c2_24, %c1_25] : memref<4x8xi32, #tpu.memory_space<smem>>
    %25 = arith.index_cast %24 : i32 to index
    %c0_26 = arith.constant 0 : index
    %26 = vector.load %arg1[%25, %c0_26] : memref<50x32xf32, #tpu.memory_space<vmem>>, vector<1x32xf32>
    %c6 = arith.constant 6 : index
    %c0_27 = arith.constant 0 : index
    %27 = vector.load %arg7[%c6, %c0_27] : memref<32x32xf32, #tpu.memory_space<vmem>>, vector<1x32xf32>
    tpu.vector_store %arg7[%c6, %c0_27], %26 {strides = array<i32>} : memref<32x32xf32, #tpu.memory_space<vmem>>, vector<1x32xf32>,
    %c3_28 = arith.constant 3 : index
    %c1_29 = arith.constant 1 : index
    %28 = memref.load %arg0[%c3_28, %c1_29] : memref<4x8xi32, #tpu.memory_space<smem>>
    %29 = arith.index_cast %28 : i32 to index
    %c0_30 = arith.constant 0 : index
    %30 = vector.load %arg1[%29, %c0_30] : memref<50x32xf32, #tpu.memory_space<vmem>>, vector<1x32xf32>
    %c7 = arith.constant 7 : index
    %c0_31 = arith.constant 0 : index
    %31 = vector.load %arg7[%c7, %c0_31] : memref<32x32xf32, #tpu.memory_space<vmem>>, vector<1x32xf32>
    tpu.vector_store %arg7[%c7, %c0_31], %30 {strides = array<i32>} : memref<32x32xf32, #tpu.memory_space<vmem>>, vector<1x32xf32>,
    %c0_32 = arith.constant 0 : index
    %c2_33 = arith.constant 2 : index
    %32 = memref.load %arg0[%c0_32, %c2_33] : memref<4x8xi32, #tpu.memory_space<smem>>
    %33 = arith.index_cast %32 : i32 to index
    %c0_34 = arith.constant 0 : index
    %34 = vector.load %arg1[%33, %c0_34] : memref<50x32xf32, #tpu.memory_space<vmem>>, vector<1x32xf32>
    %c8 = arith.constant 8 : index
    %c0_35 = arith.constant 0 : index
    %35 = vector.load %arg7[%c8, %c0_35] : memref<32x32xf32, #tpu.memory_space<vmem>>, vector<1x32xf32>
    tpu.vector_store %arg7[%c8, %c0_35], %34 {strides = array<i32>} : memref<32x32xf32, #tpu.memory_space<vmem>>, vector<1x32xf32>,
    %c1_36 = arith.constant 1 : index
    %c2_37 = arith.constant 2 : index
    %36 = memref.load %arg0[%c1_36, %c2_37] : memref<4x8xi32, #tpu.memory_space<smem>>
    %37 = arith.index_cast %36 : i32 to index
    %c0_38 = arith.constant 0 : index
    %38 = vector.load %arg1[%37, %c0_38] : memref<50x32xf32, #tpu.memory_space<vmem>>, vector<1x32xf32>
    %c9 = arith.constant 9 : index
    %c0_39 = arith.constant 0 : index
    %39 = vector.load %arg7[%c9, %c0_39] : memref<32x32xf32, #tpu.memory_space<vmem>>, vector<1x32xf32>
    tpu.vector_store %arg7[%c9, %c0_39], %38 {strides = array<i32>} : memref<32x32xf32, #tpu.memory_space<vmem>>, vector<1x32xf32>,
    %c2_40 = arith.constant 2 : index
    %c2_41 = arith.constant 2 : index
    %40 = memref.load %arg0[%c2_40, %c2_41] : memref<4x8xi32, #tpu.memory_space<smem>>
    %41 = arith.index_cast %40 : i32 to index
    %c0_42 = arith.constant 0 : index
    %42 = vector.load %arg1[%41, %c0_42] : memref<50x32xf32, #tpu.memory_space<vmem>>, vector<1x32xf32>
    %c10 = arith.constant 10 : index
    %c0_43 = arith.constant 0 : index
    %43 = vector.load %arg7[%c10, %c0_43] : memref<32x32xf32, #tpu.memory_space<vmem>>, vector<1x32xf32>
    tpu.vector_store %arg7[%c10, %c0_43], %42 {strides = array<i32>} : memref<32x32xf32, #tpu.memory_space<vmem>>, vector<1x32xf32>,
    %c3_44 = arith.constant 3 : index
    %c2_45 = arith.constant 2 : index
    %44 = memref.load %arg0[%c3_44, %c2_45] : memref<4x8xi32, #tpu.memory_space<smem>>
    %45 = arith.index_cast %44 : i32 to index
    %c0_46 = arith.constant 0 : index
    %46 = vector.load %arg1[%45, %c0_46] : memref<50x32xf32, #tpu.memory_space<vmem>>, vector<1x32xf32>
    %c11 = arith.constant 11 : index
    %c0_47 = arith.constant 0 : index
    %47 = vector.load %arg7[%c11, %c0_47] : memref<32x32xf32, #tpu.memory_space<vmem>>, vector<1x32xf32>
    tpu.vector_store %arg7[%c11, %c0_47], %46 {strides = array<i32>} : memref<32x32xf32, #tpu.memory_space<vmem>>, vector<1x32xf32>,
    %c0_48 = arith.constant 0 : index
    %c3_49 = arith.constant 3 : index
    %48 = memref.load %arg0[%c0_48, %c3_49] : memref<4x8xi32, #tpu.memory_space<smem>>
    %49 = arith.index_cast %48 : i32 to index
    %c0_50 = arith.constant 0 : index
    %50 = vector.load %arg1[%49, %c0_50] : memref<50x32xf32, #tpu.memory_space<vmem>>, vector<1x32xf32>
    %c12 = arith.constant 12 : index
    %c0_51 = arith.constant 0 : index
    %51 = vector.load %arg7[%c12, %c0_51] : memref<32x32xf32, #tpu.memory_space<vmem>>, vector<1x32xf32>
    tpu.vector_store %arg7[%c12, %c0_51], %50 {strides = array<i32>} : memref<32x32xf32, #tpu.memory_space<vmem>>, vector<1x32xf32>,
    %c1_52 = arith.constant 1 : index
    %c3_53 = arith.constant 3 : index
    %52 = memref.load %arg0[%c1_52, %c3_53] : memref<4x8xi32, #tpu.memory_space<smem>>
    %53 = arith.index_cast %52 : i32 to index
    %c0_54 = arith.constant 0 : index
    %54 = vector.load %arg1[%53, %c0_54] : memref<50x32xf32, #tpu.memory_space<vmem>>, vector<1x32xf32>
    %c13 = arith.constant 13 : index
    %c0_55 = arith.constant 0 : index
    %55 = vector.load %arg7[%c13, %c0_55] : memref<32x32xf32, #tpu.memory_space<vmem>>, vector<1x32xf32>
    tpu.vector_store %arg7[%c13, %c0_55], %54 {strides = array<i32>} : memref<32x32xf32, #tpu.memory_space<vmem>>, vector<1x32xf32>,
    %c2_56 = arith.constant 2 : index
    %c3_57 = arith.constant 3 : index
    %56 = memref.load %arg0[%c2_56, %c3_57] : memref<4x8xi32, #tpu.memory_space<smem>>
    %57 = arith.index_cast %56 : i32 to index
    %c0_58 = arith.constant 0 : index
    %58 = vector.load %arg1[%57, %c0_58] : memref<50x32xf32, #tpu.memory_space<vmem>>, vector<1x32xf32>
    %c14 = arith.constant 14 : index
    %c0_59 = arith.constant 0 : index
    %59 = vector.load %arg7[%c14, %c0_59] : memref<32x32xf32, #tpu.memory_space<vmem>>, vector<1x32xf32>
    tpu.vector_store %arg7[%c14, %c0_59], %58 {strides = array<i32>} : memref<32x32xf32, #tpu.memory_space<vmem>>, vector<1x32xf32>,
    %c3_60 = arith.constant 3 : index
    %c3_61 = arith.constant 3 : index
    %60 = memref.load %arg0[%c3_60, %c3_61] : memref<4x8xi32, #tpu.memory_space<smem>>
    %61 = arith.index_cast %60 : i32 to index
    %c0_62 = arith.constant 0 : index
    %62 = vector.load %arg1[%61, %c0_62] : memref<50x32xf32, #tpu.memory_space<vmem>>, vector<1x32xf32>
    %c15 = arith.constant 15 : index
    %c0_63 = arith.constant 0 : index
    %63 = vector.load %arg7[%c15, %c0_63] : memref<32x32xf32, #tpu.memory_space<vmem>>, vector<1x32xf32>
    tpu.vector_store %arg7[%c15, %c0_63], %62 {strides = array<i32>} : memref<32x32xf32, #tpu.memory_space<vmem>>, vector<1x32xf32>,
    %c0_64 = arith.constant 0 : index
    %c4_65 = arith.constant 4 : index
    %64 = memref.load %arg0[%c0_64, %c4_65] : memref<4x8xi32, #tpu.memory_space<smem>>
    %65 = arith.index_cast %64 : i32 to index
    %c0_66 = arith.constant 0 : index
    %66 = vector.load %arg1[%65, %c0_66] : memref<50x32xf32, #tpu.memory_space<vmem>>, vector<1x32xf32>
    %c16 = arith.constant 16 : index
    %c0_67 = arith.constant 0 : index
    %67 = vector.load %arg7[%c16, %c0_67] : memref<32x32xf32, #tpu.memory_space<vmem>>, vector<1x32xf32>
    tpu.vector_store %arg7[%c16, %c0_67], %66 {strides = array<i32>} : memref<32x32xf32, #tpu.memory_space<vmem>>, vector<1x32xf32>,
    %c1_68 = arith.constant 1 : index
    %c4_69 = arith.constant 4 : index
    %68 = memref.load %arg0[%c1_68, %c4_69] : memref<4x8xi32, #tpu.memory_space<smem>>
    %69 = arith.index_cast %68 : i32 to index
    %c0_70 = arith.constant 0 : index
    %70 = vector.load %arg1[%69, %c0_70] : memref<50x32xf32, #tpu.memory_space<vmem>>, vector<1x32xf32>
    %c17 = arith.constant 17 : index
    %c0_71 = arith.constant 0 : index
    %71 = vector.load %arg7[%c17, %c0_71] : memref<32x32xf32, #tpu.memory_space<vmem>>, vector<1x32xf32>
    tpu.vector_store %arg7[%c17, %c0_71], %70 {strides = array<i32>} : memref<32x32xf32, #tpu.memory_space<vmem>>, vector<1x32xf32>,
    %c2_72 = arith.constant 2 : index
    %c4_73 = arith.constant 4 : index
    %72 = memref.load %arg0[%c2_72, %c4_73] : memref<4x8xi32, #tpu.memory_space<smem>>
    %73 = arith.index_cast %72 : i32 to index
    %c0_74 = arith.constant 0 : index
    %74 = vector.load %arg1[%73, %c0_74] : memref<50x32xf32, #tpu.memory_space<vmem>>, vector<1x32xf32>
    %c18 = arith.constant 18 : index
    %c0_75 = arith.constant 0 : index
    %75 = vector.load %arg7[%c18, %c0_75] : memref<32x32xf32, #tpu.memory_space<vmem>>, vector<1x32xf32>
    tpu.vector_store %arg7[%c18, %c0_75], %74 {strides = array<i32>} : memref<32x32xf32, #tpu.memory_space<vmem>>, vector<1x32xf32>,
    %c3_76 = arith.constant 3 : index
    %c4_77 = arith.constant 4 : index
    %76 = memref.load %arg0[%c3_76, %c4_77] : memref<4x8xi32, #tpu.memory_space<smem>>
    %77 = arith.index_cast %76 : i32 to index
    %c0_78 = arith.constant 0 : index
    %78 = vector.load %arg1[%77, %c0_78] : memref<50x32xf32, #tpu.memory_space<vmem>>, vector<1x32xf32>
    %c19 = arith.constant 19 : index
    %c0_79 = arith.constant 0 : index
    %79 = vector.load %arg7[%c19, %c0_79] : memref<32x32xf32, #tpu.memory_space<vmem>>, vector<1x32xf32>
    tpu.vector_store %arg7[%c19, %c0_79], %78 {strides = array<i32>} : memref<32x32xf32, #tpu.memory_space<vmem>>, vector<1x32xf32>,
    %c0_80 = arith.constant 0 : index
    %c5_81 = arith.constant 5 : index
    %80 = memref.load %arg0[%c0_80, %c5_81] : memref<4x8xi32, #tpu.memory_space<smem>>
    %81 = arith.index_cast %80 : i32 to index
    %c0_82 = arith.constant 0 : index
    %82 = vector.load %arg1[%81, %c0_82] : memref<50x32xf32, #tpu.memory_space<vmem>>, vector<1x32xf32>
    %c20 = arith.constant 20 : index
    %c0_83 = arith.constant 0 : index
    %83 = vector.load %arg7[%c20, %c0_83] : memref<32x32xf32, #tpu.memory_space<vmem>>, vector<1x32xf32>
    tpu.vector_store %arg7[%c20, %c0_83], %82 {strides = array<i32>} : memref<32x32xf32, #tpu.memory_space<vmem>>, vector<1x32xf32>,
    %c1_84 = arith.constant 1 : index
    %c5_85 = arith.constant 5 : index
    %84 = memref.load %arg0[%c1_84, %c5_85] : memref<4x8xi32, #tpu.memory_space<smem>>
    %85 = arith.index_cast %84 : i32 to index
    %c0_86 = arith.constant 0 : index
    %86 = vector.load %arg1[%85, %c0_86] : memref<50x32xf32, #tpu.memory_space<vmem>>, vector<1x32xf32>
    %c21 = arith.constant 21 : index
    %c0_87 = arith.constant 0 : index
    %87 = vector.load %arg7[%c21, %c0_87] : memref<32x32xf32, #tpu.memory_space<vmem>>, vector<1x32xf32>
    tpu.vector_store %arg7[%c21, %c0_87], %86 {strides = array<i32>} : memref<32x32xf32, #tpu.memory_space<vmem>>, vector<1x32xf32>,
    %c2_88 = arith.constant 2 : index
    %c5_89 = arith.constant 5 : index
    %88 = memref.load %arg0[%c2_88, %c5_89] : memref<4x8xi32, #tpu.memory_space<smem>>
    %89 = arith.index_cast %88 : i32 to index
    %c0_90 = arith.constant 0 : index
    %90 = vector.load %arg1[%89, %c0_90] : memref<50x32xf32, #tpu.memory_space<vmem>>, vector<1x32xf32>
    %c22 = arith.constant 22 : index
    %c0_91 = arith.constant 0 : index
    %91 = vector.load %arg7[%c22, %c0_91] : memref<32x32xf32, #tpu.memory_space<vmem>>, vector<1x32xf32>
    tpu.vector_store %arg7[%c22, %c0_91], %90 {strides = array<i32>} : memref<32x32xf32, #tpu.memory_space<vmem>>, vector<1x32xf32>,
    %c3_92 = arith.constant 3 : index
    %c5_93 = arith.constant 5 : index
    %92 = memref.load %arg0[%c3_92, %c5_93] : memref<4x8xi32, #tpu.memory_space<smem>>
    %93 = arith.index_cast %92 : i32 to index
    %c0_94 = arith.constant 0 : index
    %94 = vector.load %arg1[%93, %c0_94] : memref<50x32xf32, #tpu.memory_space<vmem>>, vector<1x32xf32>
    %c23 = arith.constant 23 : index
    %c0_95 = arith.constant 0 : index
    %95 = vector.load %arg7[%c23, %c0_95] : memref<32x32xf32, #tpu.memory_space<vmem>>, vector<1x32xf32>
    tpu.vector_store %arg7[%c23, %c0_95], %94 {strides = array<i32>} : memref<32x32xf32, #tpu.memory_space<vmem>>, vector<1x32xf32>,
    %c0_96 = arith.constant 0 : index
    %c6_97 = arith.constant 6 : index
    %96 = memref.load %arg0[%c0_96, %c6_97] : memref<4x8xi32, #tpu.memory_space<smem>>
    %97 = arith.index_cast %96 : i32 to index
    %c0_98 = arith.constant 0 : index
    %98 = vector.load %arg1[%97, %c0_98] : memref<50x32xf32, #tpu.memory_space<vmem>>, vector<1x32xf32>
    %c24 = arith.constant 24 : index
    %c0_99 = arith.constant 0 : index
    %99 = vector.load %arg7[%c24, %c0_99] : memref<32x32xf32, #tpu.memory_space<vmem>>, vector<1x32xf32>
    tpu.vector_store %arg7[%c24, %c0_99], %98 {strides = array<i32>} : memref<32x32xf32, #tpu.memory_space<vmem>>, vector<1x32xf32>,
    %c1_100 = arith.constant 1 : index
    %c6_101 = arith.constant 6 : index
    %100 = memref.load %arg0[%c1_100, %c6_101] : memref<4x8xi32, #tpu.memory_space<smem>>
    %101 = arith.index_cast %100 : i32 to index
    %c0_102 = arith.constant 0 : index
    %102 = vector.load %arg1[%101, %c0_102] : memref<50x32xf32, #tpu.memory_space<vmem>>, vector<1x32xf32>
    %c25 = arith.constant 25 : index
    %c0_103 = arith.constant 0 : index
    %103 = vector.load %arg7[%c25, %c0_103] : memref<32x32xf32, #tpu.memory_space<vmem>>, vector<1x32xf32>
    tpu.vector_store %arg7[%c25, %c0_103], %102 {strides = array<i32>} : memref<32x32xf32, #tpu.memory_space<vmem>>, vector<1x32xf32>,
    %c2_104 = arith.constant 2 : index
    %c6_105 = arith.constant 6 : index
    %104 = memref.load %arg0[%c2_104, %c6_105] : memref<4x8xi32, #tpu.memory_space<smem>>
    %105 = arith.index_cast %104 : i32 to index
    %c0_106 = arith.constant 0 : index
    %106 = vector.load %arg1[%105, %c0_106] : memref<50x32xf32, #tpu.memory_space<vmem>>, vector<1x32xf32>
    %c26 = arith.constant 26 : index
    %c0_107 = arith.constant 0 : index
    %107 = vector.load %arg7[%c26, %c0_107] : memref<32x32xf32, #tpu.memory_space<vmem>>, vector<1x32xf32>
    tpu.vector_store %arg7[%c26, %c0_107], %106 {strides = array<i32>} : memref<32x32xf32, #tpu.memory_space<vmem>>, vector<1x32xf32>,
    %c3_108 = arith.constant 3 : index
    %c6_109 = arith.constant 6 : index
    %108 = memref.load %arg0[%c3_108, %c6_109] : memref<4x8xi32, #tpu.memory_space<smem>>
    %109 = arith.index_cast %108 : i32 to index
    %c0_110 = arith.constant 0 : index
    %110 = vector.load %arg1[%109, %c0_110] : memref<50x32xf32, #tpu.memory_space<vmem>>, vector<1x32xf32>
    %c27 = arith.constant 27 : index
    %c0_111 = arith.constant 0 : index
    %111 = vector.load %arg7[%c27, %c0_111] : memref<32x32xf32, #tpu.memory_space<vmem>>, vector<1x32xf32>
    tpu.vector_store %arg7[%c27, %c0_111], %110 {strides = array<i32>} : memref<32x32xf32, #tpu.memory_space<vmem>>, vector<1x32xf32>,
    %c0_112 = arith.constant 0 : index
    %c7_113 = arith.constant 7 : index
    %112 = memref.load %arg0[%c0_112, %c7_113] : memref<4x8xi32, #tpu.memory_space<smem>>
    %113 = arith.index_cast %112 : i32 to index
    %c0_114 = arith.constant 0 : index
    %114 = vector.load %arg1[%113, %c0_114] : memref<50x32xf32, #tpu.memory_space<vmem>>, vector<1x32xf32>
    %c28 = arith.constant 28 : index
    %c0_115 = arith.constant 0 : index
    %115 = vector.load %arg7[%c28, %c0_115] : memref<32x32xf32, #tpu.memory_space<vmem>>, vector<1x32xf32>
    tpu.vector_store %arg7[%c28, %c0_115], %114 {strides = array<i32>} : memref<32x32xf32, #tpu.memory_space<vmem>>, vector<1x32xf32>,
    %c1_116 = arith.constant 1 : index
    %c7_117 = arith.constant 7 : index
    %116 = memref.load %arg0[%c1_116, %c7_117] : memref<4x8xi32, #tpu.memory_space<smem>>
    %117 = arith.index_cast %116 : i32 to index
    %c0_118 = arith.constant 0 : index
    %118 = vector.load %arg1[%117, %c0_118] : memref<50x32xf32, #tpu.memory_space<vmem>>, vector<1x32xf32>
    %c29 = arith.constant 29 : index
    %c0_119 = arith.constant 0 : index
    %119 = vector.load %arg7[%c29, %c0_119] : memref<32x32xf32, #tpu.memory_space<vmem>>, vector<1x32xf32>
    tpu.vector_store %arg7[%c29, %c0_119], %118 {strides = array<i32>} : memref<32x32xf32, #tpu.memory_space<vmem>>, vector<1x32xf32>,
    %c2_120 = arith.constant 2 : index
    %c7_121 = arith.constant 7 : index
    %120 = memref.load %arg0[%c2_120, %c7_121] : memref<4x8xi32, #tpu.memory_space<smem>>
    %121 = arith.index_cast %120 : i32 to index
    %c0_122 = arith.constant 0 : index
    %122 = vector.load %arg1[%121, %c0_122] : memref<50x32xf32, #tpu.memory_space<vmem>>, vector<1x32xf32>
    %c30 = arith.constant 30 : index
    %c0_123 = arith.constant 0 : index
    %123 = vector.load %arg7[%c30, %c0_123] : memref<32x32xf32, #tpu.memory_space<vmem>>, vector<1x32xf32>
    tpu.vector_store %arg7[%c30, %c0_123], %122 {strides = array<i32>} : memref<32x32xf32, #tpu.memory_space<vmem>>, vector<1x32xf32>,
    %c3_124 = arith.constant 3 : index
    %c7_125 = arith.constant 7 : index
    %124 = memref.load %arg0[%c3_124, %c7_125] : memref<4x8xi32, #tpu.memory_space<smem>>
    %125 = arith.index_cast %124 : i32 to index
    %c0_126 = arith.constant 0 : index
    %126 = vector.load %arg1[%125, %c0_126] : memref<50x32xf32, #tpu.memory_space<vmem>>, vector<1x32xf32>
    %c31 = arith.constant 31 : index
    %c0_127 = arith.constant 0 : index
    %127 = vector.load %arg7[%c31, %c0_127] : memref<32x32xf32, #tpu.memory_space<vmem>>, vector<1x32xf32>
    tpu.vector_store %arg7[%c31, %c0_127], %126 {strides = array<i32>} : memref<32x32xf32, #tpu.memory_space<vmem>>, vector<1x32xf32>,
    %c0_128 = arith.constant 0 : index
    %c0_129 = arith.constant 0 : index
    %128 = vector.load %arg2[%c0_128, %c0_129] : memref<64x128xf32, #tpu.memory_space<vmem>>, vector<32x128xf32>
    %c0_130 = arith.constant 0 : index
    %c0_131 = arith.constant 0 : index
    %129 = vector.load %arg3[%c0_130, %c0_131] : memref<128x256xf32, #tpu.memory_space<vmem>>, vector<64x256xf32>
    %c0_132 = arith.constant 0 : index
    %c0_133 = arith.constant 0 : index
    %130 = vector.load %arg4[%c0_132, %c0_133] : memref<4x128xf32, #tpu.memory_space<vmem>>, vector<1x128xf32>
    %c1_134 = arith.constant 1 : index
    %c0_135 = arith.constant 0 : index
    %131 = vector.load %arg4[%c1_134, %c0_135] : memref<4x128xf32, #tpu.memory_space<vmem>>, vector<1x128xf32>
    %c0_136 = arith.constant 0 : index
    %c0_137 = arith.constant 0 : index
    %132 = vector.load %arg7[%c0_136, %c0_137] : memref<32x32xf32, #tpu.memory_space<vmem>>, vector<32x32xf32>
    %cst = arith.constant dense<0.000000e+00> : vector<32x128xf32>
    %133 = tpu.matmul %132, %128, %cst {dimension_numbers = #tpu.dot_dimension_numbers<[1], [0], [0], [1], [0, 0, 1, 1], [], []>} : vector<32x32xf32>, vector<32x128xf32>, vector<32x128xf32> -> vector<32x128xf32>
    %134 = vector.broadcast %130 : vector<1x128xf32> to vector<32x128xf32>
    %135 = arith.addf %133, %134 : vector<32x128xf32>
    %c0_138 = arith.constant 0 : index
    %c0_139 = arith.constant 0 : index
    %136 = vector.load %arg8[%c0_138, %c0_139] : memref<32x128xf32, #tpu.memory_space<vmem>>, vector<32x128xf32>
    tpu.vector_store %arg8[%c0_138, %c0_139], %135 {strides = array<i32>} : memref<32x128xf32, #tpu.memory_space<vmem>>, vector<32x128xf32>,
    %cst_140 = arith.constant 0.000000e+00 : f32
    %137 = vector.broadcast %cst_140 : f32 to vector<4x128xf32>
    %cst_141 = arith.constant 0.000000e+00 : f32
    %138 = vector.broadcast %cst_141 : f32 to vector<4x32xf32>
    %cst_142 = arith.constant 0.000000e+00 : f32
    %139 = vector.broadcast %cst_142 : f32 to vector<4x32xf32>
    %cst_143 = arith.constant 0.000000e+00 : f32
    %140 = vector.broadcast %cst_143 : f32 to vector<4x32xf32>
    %c0_144 = arith.constant 0 : index
    %c0_145 = arith.constant 0 : index
    %141 = vector.load %arg8[%c0_144, %c0_145] : memref<32x128xf32, #tpu.memory_space<vmem>>, vector<4x128xf32>
    %142 = arith.addf %141, %137 : vector<4x128xf32>
    %143 = vector.extract_strided_slice %142 {offsets = [0, 0], sizes = [4, 96], strides = [1, 1]} : vector<4x128xf32> to vector<4x96xf32>
    %144 = arith.negf %143 : vector<4x96xf32>
    %145 = math.exp %144 : vector<4x96xf32>
    %cst_146 = arith.constant 1.000000e+00 : f32
    %146 = vector.broadcast %cst_146 : f32 to vector<4x96xf32>
    %147 = arith.addf %146, %145 : vector<4x96xf32>
    %148 = arith.divf %146, %147 : vector<4x96xf32>
    %149 = vector.extract_strided_slice %142 {offsets = [0, 96], sizes = [4, 32], strides = [1, 1]} : vector<4x128xf32> to vector<4x32xf32>
    %150 = math.tanh %149 : vector<4x32xf32>
    %151 = vector.extract_strided_slice %148 {offsets = [0, 0], sizes = [4, 32], strides = [1, 1]} : vector<4x96xf32> to vector<4x32xf32>
    %152 = vector.extract_strided_slice %148 {offsets = [0, 32], sizes = [4, 32], strides = [1, 1]} : vector<4x96xf32> to vector<4x32xf32>
    %153 = vector.extract_strided_slice %148 {offsets = [0, 64], sizes = [4, 32], strides = [1, 1]} : vector<4x96xf32> to vector<4x32xf32>
    %154 = arith.mulf %152, %138 : vector<4x32xf32>
    %155 = arith.mulf %151, %150 : vector<4x32xf32>
    %156 = arith.addf %154, %155 : vector<4x32xf32>
    %157 = math.tanh %156 : vector<4x32xf32>
    %158 = arith.mulf %153, %157 : vector<4x32xf32>
    %159 = tpu.concatenate %158, %139 in 1 : vector<4x32xf32>, vector<4x32xf32> -> vector<4x64xf32>
    %cst_147 = arith.constant dense<0.000000e+00> : vector<4x256xf32>
    %160 = tpu.matmul %159, %129, %cst_147 {dimension_numbers = #tpu.dot_dimension_numbers<[1], [0], [0], [1], [0, 0, 1, 1], [], []>} : vector<4x64xf32>, vector<64x256xf32>, vector<4x256xf32> -> vector<4x256xf32>
    %161 = vector.extract_strided_slice %160 {offsets = [0, 0], sizes = [4, 128], strides = [1, 1]} : vector<4x256xf32> to vector<4x128xf32>
    %162 = vector.extract_strided_slice %160 {offsets = [0, 128], sizes = [4, 128], strides = [1, 1]} : vector<4x256xf32> to vector<4x128xf32>
    %163 = vector.broadcast %131 : vector<1x128xf32> to vector<4x128xf32>
    %164 = arith.addf %162, %163 : vector<4x128xf32>
    %165 = vector.extract_strided_slice %164 {offsets = [0, 0], sizes = [4, 96], strides = [1, 1]} : vector<4x128xf32> to vector<4x96xf32>
    %166 = arith.negf %165 : vector<4x96xf32>
    %167 = math.exp %166 : vector<4x96xf32>
    %cst_148 = arith.constant 1.000000e+00 : f32
    %168 = vector.broadcast %cst_148 : f32 to vector<4x96xf32>
    %169 = arith.addf %168, %167 : vector<4x96xf32>
    %170 = arith.divf %168, %169 : vector<4x96xf32>
    %171 = vector.extract_strided_slice %164 {offsets = [0, 96], sizes = [4, 32], strides = [1, 1]} : vector<4x128xf32> to vector<4x32xf32>
    %172 = math.tanh %171 : vector<4x32xf32>
    %173 = vector.extract_strided_slice %170 {offsets = [0, 0], sizes = [4, 32], strides = [1, 1]} : vector<4x96xf32> to vector<4x32xf32>
    %174 = vector.extract_strided_slice %170 {offsets = [0, 32], sizes = [4, 32], strides = [1, 1]} : vector<4x96xf32> to vector<4x32xf32>
    %175 = vector.extract_strided_slice %170 {offsets = [0, 64], sizes = [4, 32], strides = [1, 1]} : vector<4x96xf32> to vector<4x32xf32>
    %176 = arith.mulf %174, %140 : vector<4x32xf32>
    %177 = arith.mulf %173, %172 : vector<4x32xf32>
    %178 = arith.addf %176, %177 : vector<4x32xf32>
    %179 = math.tanh %178 : vector<4x32xf32>
    %180 = arith.mulf %175, %179 : vector<4x32xf32>
    %c4_149 = arith.constant 4 : index
    %c0_150 = arith.constant 0 : index
    %181 = vector.load %arg8[%c4_149, %c0_150] : memref<32x128xf32, #tpu.memory_space<vmem>>, vector<4x128xf32>
    %182 = arith.addf %181, %161 : vector<4x128xf32>
    %183 = vector.extract_strided_slice %182 {offsets = [0, 0], sizes = [4, 96], strides = [1, 1]} : vector<4x128xf32> to vector<4x96xf32>
    %184 = arith.negf %183 : vector<4x96xf32>
    %185 = math.exp %184 : vector<4x96xf32>
    %cst_151 = arith.constant 1.000000e+00 : f32
    %186 = vector.broadcast %cst_151 : f32 to vector<4x96xf32>
    %187 = arith.addf %186, %185 : vector<4x96xf32>
    %188 = arith.divf %186, %187 : vector<4x96xf32>
    %189 = vector.extract_strided_slice %182 {offsets = [0, 96], sizes = [4, 32], strides = [1, 1]} : vector<4x128xf32> to vector<4x32xf32>
    %190 = math.tanh %189 : vector<4x32xf32>
    %191 = vector.extract_strided_slice %188 {offsets = [0, 0], sizes = [4, 32], strides = [1, 1]} : vector<4x96xf32> to vector<4x32xf32>
    %192 = vector.extract_strided_slice %188 {offsets = [0, 32], sizes = [4, 32], strides = [1, 1]} : vector<4x96xf32> to vector<4x32xf32>
    %193 = vector.extract_strided_slice %188 {offsets = [0, 64], sizes = [4, 32], strides = [1, 1]} : vector<4x96xf32> to vector<4x32xf32>
    %194 = arith.mulf %192, %156 : vector<4x32xf32>
    %195 = arith.mulf %191, %190 : vector<4x32xf32>
    %196 = arith.addf %194, %195 : vector<4x32xf32>
    %197 = math.tanh %196 : vector<4x32xf32>
    %198 = arith.mulf %193, %197 : vector<4x32xf32>
    %199 = tpu.concatenate %198, %180 in 1 : vector<4x32xf32>, vector<4x32xf32> -> vector<4x64xf32>
    %cst_152 = arith.constant dense<0.000000e+00> : vector<4x256xf32>
    %200 = tpu.matmul %199, %129, %cst_152 {dimension_numbers = #tpu.dot_dimension_numbers<[1], [0], [0], [1], [0, 0, 1, 1], [], []>} : vector<4x64xf32>, vector<64x256xf32>, vector<4x256xf32> -> vector<4x256xf32>
    %201 = vector.extract_strided_slice %200 {offsets = [0, 0], sizes = [4, 128], strides = [1, 1]} : vector<4x256xf32> to vector<4x128xf32>
    %202 = vector.extract_strided_slice %200 {offsets = [0, 128], sizes = [4, 128], strides = [1, 1]} : vector<4x256xf32> to vector<4x128xf32>
    %203 = vector.broadcast %131 : vector<1x128xf32> to vector<4x128xf32>
    %204 = arith.addf %202, %203 : vector<4x128xf32>
    %205 = vector.extract_strided_slice %204 {offsets = [0, 0], sizes = [4, 96], strides = [1, 1]} : vector<4x128xf32> to vector<4x96xf32>
    %206 = arith.negf %205 : vector<4x96xf32>
    %207 = math.exp %206 : vector<4x96xf32>
    %cst_153 = arith.constant 1.000000e+00 : f32
    %208 = vector.broadcast %cst_153 : f32 to vector<4x96xf32>
    %209 = arith.addf %208, %207 : vector<4x96xf32>
    %210 = arith.divf %208, %209 : vector<4x96xf32>
    %211 = vector.extract_strided_slice %204 {offsets = [0, 96], sizes = [4, 32], strides = [1, 1]} : vector<4x128xf32> to vector<4x32xf32>
    %212 = math.tanh %211 : vector<4x32xf32>
    %213 = vector.extract_strided_slice %210 {offsets = [0, 0], sizes = [4, 32], strides = [1, 1]} : vector<4x96xf32> to vector<4x32xf32>
    %214 = vector.extract_strided_slice %210 {offsets = [0, 32], sizes = [4, 32], strides = [1, 1]} : vector<4x96xf32> to vector<4x32xf32>
    %215 = vector.extract_strided_slice %210 {offsets = [0, 64], sizes = [4, 32], strides = [1, 1]} : vector<4x96xf32> to vector<4x32xf32>
    %216 = arith.mulf %214, %178 : vector<4x32xf32>
    %217 = arith.mulf %213, %212 : vector<4x32xf32>
    %218 = arith.addf %216, %217 : vector<4x32xf32>
    %219 = math.tanh %218 : vector<4x32xf32>
    %220 = arith.mulf %215, %219 : vector<4x32xf32>
    %c8_154 = arith.constant 8 : index
    %c0_155 = arith.constant 0 : index
    %221 = vector.load %arg8[%c8_154, %c0_155] : memref<32x128xf32, #tpu.memory_space<vmem>>, vector<4x128xf32>
    %222 = arith.addf %221, %201 : vector<4x128xf32>
    %223 = vector.extract_strided_slice %222 {offsets = [0, 0], sizes = [4, 96], strides = [1, 1]} : vector<4x128xf32> to vector<4x96xf32>
    %224 = arith.negf %223 : vector<4x96xf32>
    %225 = math.exp %224 : vector<4x96xf32>
    %cst_156 = arith.constant 1.000000e+00 : f32
    %226 = vector.broadcast %cst_156 : f32 to vector<4x96xf32>
    %227 = arith.addf %226, %225 : vector<4x96xf32>
    %228 = arith.divf %226, %227 : vector<4x96xf32>
    %229 = vector.extract_strided_slice %222 {offsets = [0, 96], sizes = [4, 32], strides = [1, 1]} : vector<4x128xf32> to vector<4x32xf32>
    %230 = math.tanh %229 : vector<4x32xf32>
    %231 = vector.extract_strided_slice %228 {offsets = [0, 0], sizes = [4, 32], strides = [1, 1]} : vector<4x96xf32> to vector<4x32xf32>
    %232 = vector.extract_strided_slice %228 {offsets = [0, 32], sizes = [4, 32], strides = [1, 1]} : vector<4x96xf32> to vector<4x32xf32>
    %233 = vector.extract_strided_slice %228 {offsets = [0, 64], sizes = [4, 32], strides = [1, 1]} : vector<4x96xf32> to vector<4x32xf32>
    %234 = arith.mulf %232, %196 : vector<4x32xf32>
    %235 = arith.mulf %231, %230 : vector<4x32xf32>
    %236 = arith.addf %234, %235 : vector<4x32xf32>
    %237 = math.tanh %236 : vector<4x32xf32>
    %238 = arith.mulf %233, %237 : vector<4x32xf32>
    %239 = tpu.concatenate %238, %220 in 1 : vector<4x32xf32>, vector<4x32xf32> -> vector<4x64xf32>
    %cst_157 = arith.constant dense<0.000000e+00> : vector<4x256xf32>
    %240 = tpu.matmul %239, %129, %cst_157 {dimension_numbers = #tpu.dot_dimension_numbers<[1], [0], [0], [1], [0, 0, 1, 1], [], []>} : vector<4x64xf32>, vector<64x256xf32>, vector<4x256xf32> -> vector<4x256xf32>
    %241 = vector.extract_strided_slice %240 {offsets = [0, 0], sizes = [4, 128], strides = [1, 1]} : vector<4x256xf32> to vector<4x128xf32>
    %242 = vector.extract_strided_slice %240 {offsets = [0, 128], sizes = [4, 128], strides = [1, 1]} : vector<4x256xf32> to vector<4x128xf32>
    %243 = vector.broadcast %131 : vector<1x128xf32> to vector<4x128xf32>
    %244 = arith.addf %242, %243 : vector<4x128xf32>
    %245 = vector.extract_strided_slice %244 {offsets = [0, 0], sizes = [4, 96], strides = [1, 1]} : vector<4x128xf32> to vector<4x96xf32>
    %246 = arith.negf %245 : vector<4x96xf32>
    %247 = math.exp %246 : vector<4x96xf32>
    %cst_158 = arith.constant 1.000000e+00 : f32
    %248 = vector.broadcast %cst_158 : f32 to vector<4x96xf32>
    %249 = arith.addf %248, %247 : vector<4x96xf32>
    %250 = arith.divf %248, %249 : vector<4x96xf32>
    %251 = vector.extract_strided_slice %244 {offsets = [0, 96], sizes = [4, 32], strides = [1, 1]} : vector<4x128xf32> to vector<4x32xf32>
    %252 = math.tanh %251 : vector<4x32xf32>
    %253 = vector.extract_strided_slice %250 {offsets = [0, 0], sizes = [4, 32], strides = [1, 1]} : vector<4x96xf32> to vector<4x32xf32>
    %254 = vector.extract_strided_slice %250 {offsets = [0, 32], sizes = [4, 32], strides = [1, 1]} : vector<4x96xf32> to vector<4x32xf32>
    %255 = vector.extract_strided_slice %250 {offsets = [0, 64], sizes = [4, 32], strides = [1, 1]} : vector<4x96xf32> to vector<4x32xf32>
    %256 = arith.mulf %254, %218 : vector<4x32xf32>
    %257 = arith.mulf %253, %252 : vector<4x32xf32>
    %258 = arith.addf %256, %257 : vector<4x32xf32>
    %259 = math.tanh %258 : vector<4x32xf32>
    %260 = arith.mulf %255, %259 : vector<4x32xf32>
    %c12_159 = arith.constant 12 : index
    %c0_160 = arith.constant 0 : index
    %261 = vector.load %arg8[%c12_159, %c0_160] : memref<32x128xf32, #tpu.memory_space<vmem>>, vector<4x128xf32>
    %262 = arith.addf %261, %241 : vector<4x128xf32>
    %263 = vector.extract_strided_slice %262 {offsets = [0, 0], sizes = [4, 96], strides = [1, 1]} : vector<4x128xf32> to vector<4x96xf32>
    %264 = arith.negf %263 : vector<4x96xf32>
    %265 = math.exp %264 : vector<4x96xf32>
    %cst_161 = arith.constant 1.000000e+00 : f32
    %266 = vector.broadcast %cst_161 : f32 to vector<4x96xf32>
    %267 = arith.addf %266, %265 : vector<4x96xf32>
    %268 = arith.divf %266, %267 : vector<4x96xf32>
    %269 = vector.extract_strided_slice %262 {offsets = [0, 96], sizes = [4, 32], strides = [1, 1]} : vector<4x128xf32> to vector<4x32xf32>
    %270 = math.tanh %269 : vector<4x32xf32>
    %271 = vector.extract_strided_slice %268 {offsets = [0, 0], sizes = [4, 32], strides = [1, 1]} : vector<4x96xf32> to vector<4x32xf32>
    %272 = vector.extract_strided_slice %268 {offsets = [0, 32], sizes = [4, 32], strides = [1, 1]} : vector<4x96xf32> to vector<4x32xf32>
    %273 = vector.extract_strided_slice %268 {offsets = [0, 64], sizes = [4, 32], strides = [1, 1]} : vector<4x96xf32> to vector<4x32xf32>
    %274 = arith.mulf %272, %236 : vector<4x32xf32>
    %275 = arith.mulf %271, %270 : vector<4x32xf32>
    %276 = arith.addf %274, %275 : vector<4x32xf32>
    %277 = math.tanh %276 : vector<4x32xf32>
    %278 = arith.mulf %273, %277 : vector<4x32xf32>
    %279 = tpu.concatenate %278, %260 in 1 : vector<4x32xf32>, vector<4x32xf32> -> vector<4x64xf32>
    %cst_162 = arith.constant dense<0.000000e+00> : vector<4x256xf32>
    %280 = tpu.matmul %279, %129, %cst_162 {dimension_numbers = #tpu.dot_dimension_numbers<[1], [0], [0], [1], [0, 0, 1, 1], [], []>} : vector<4x64xf32>, vector<64x256xf32>, vector<4x256xf32> -> vector<4x256xf32>
    %281 = vector.extract_strided_slice %280 {offsets = [0, 0], sizes = [4, 128], strides = [1, 1]} : vector<4x256xf32> to vector<4x128xf32>
    %282 = vector.extract_strided_slice %280 {offsets = [0, 128], sizes = [4, 128], strides = [1, 1]} : vector<4x256xf32> to vector<4x128xf32>
    %283 = vector.broadcast %131 : vector<1x128xf32> to vector<4x128xf32>
    %284 = arith.addf %282, %283 : vector<4x128xf32>
    %285 = vector.extract_strided_slice %284 {offsets = [0, 0], sizes = [4, 96], strides = [1, 1]} : vector<4x128xf32> to vector<4x96xf32>
    %286 = arith.negf %285 : vector<4x96xf32>
    %287 = math.exp %286 : vector<4x96xf32>
    %cst_163 = arith.constant 1.000000e+00 : f32
    %288 = vector.broadcast %cst_163 : f32 to vector<4x96xf32>
    %289 = arith.addf %288, %287 : vector<4x96xf32>
    %290 = arith.divf %288, %289 : vector<4x96xf32>
    %291 = vector.extract_strided_slice %284 {offsets = [0, 96], sizes = [4, 32], strides = [1, 1]} : vector<4x128xf32> to vector<4x32xf32>
    %292 = math.tanh %291 : vector<4x32xf32>
    %293 = vector.extract_strided_slice %290 {offsets = [0, 0], sizes = [4, 32], strides = [1, 1]} : vector<4x96xf32> to vector<4x32xf32>
    %294 = vector.extract_strided_slice %290 {offsets = [0, 32], sizes = [4, 32], strides = [1, 1]} : vector<4x96xf32> to vector<4x32xf32>
    %295 = vector.extract_strided_slice %290 {offsets = [0, 64], sizes = [4, 32], strides = [1, 1]} : vector<4x96xf32> to vector<4x32xf32>
    %296 = arith.mulf %294, %258 : vector<4x32xf32>
    %297 = arith.mulf %293, %292 : vector<4x32xf32>
    %298 = arith.addf %296, %297 : vector<4x32xf32>
    %299 = math.tanh %298 : vector<4x32xf32>
    %300 = arith.mulf %295, %299 : vector<4x32xf32>
    %c16_164 = arith.constant 16 : index
    %c0_165 = arith.constant 0 : index
    %301 = vector.load %arg8[%c16_164, %c0_165] : memref<32x128xf32, #tpu.memory_space<vmem>>, vector<4x128xf32>
    %302 = arith.addf %301, %281 : vector<4x128xf32>
    %303 = vector.extract_strided_slice %302 {offsets = [0, 0], sizes = [4, 96], strides = [1, 1]} : vector<4x128xf32> to vector<4x96xf32>
    %304 = arith.negf %303 : vector<4x96xf32>
    %305 = math.exp %304 : vector<4x96xf32>
    %cst_166 = arith.constant 1.000000e+00 : f32
    %306 = vector.broadcast %cst_166 : f32 to vector<4x96xf32>
    %307 = arith.addf %306, %305 : vector<4x96xf32>
    %308 = arith.divf %306, %307 : vector<4x96xf32>
    %309 = vector.extract_strided_slice %302 {offsets = [0, 96], sizes = [4, 32], strides = [1, 1]} : vector<4x128xf32> to vector<4x32xf32>
    %310 = math.tanh %309 : vector<4x32xf32>
    %311 = vector.extract_strided_slice %308 {offsets = [0, 0], sizes = [4, 32], strides = [1, 1]} : vector<4x96xf32> to vector<4x32xf32>
    %312 = vector.extract_strided_slice %308 {offsets = [0, 32], sizes = [4, 32], strides = [1, 1]} : vector<4x96xf32> to vector<4x32xf32>
    %313 = vector.extract_strided_slice %308 {offsets = [0, 64], sizes = [4, 32], strides = [1, 1]} : vector<4x96xf32> to vector<4x32xf32>
    %314 = arith.mulf %312, %276 : vector<4x32xf32>
    %315 = arith.mulf %311, %310 : vector<4x32xf32>
    %316 = arith.addf %314, %315 : vector<4x32xf32>
    %317 = math.tanh %316 : vector<4x32xf32>
    %318 = arith.mulf %313, %317 : vector<4x32xf32>
    %319 = tpu.concatenate %318, %300 in 1 : vector<4x32xf32>, vector<4x32xf32> -> vector<4x64xf32>
    %cst_167 = arith.constant dense<0.000000e+00> : vector<4x256xf32>
    %320 = tpu.matmul %319, %129, %cst_167 {dimension_numbers = #tpu.dot_dimension_numbers<[1], [0], [0], [1], [0, 0, 1, 1], [], []>} : vector<4x64xf32>, vector<64x256xf32>, vector<4x256xf32> -> vector<4x256xf32>
    %321 = vector.extract_strided_slice %320 {offsets = [0, 0], sizes = [4, 128], strides = [1, 1]} : vector<4x256xf32> to vector<4x128xf32>
    %322 = vector.extract_strided_slice %320 {offsets = [0, 128], sizes = [4, 128], strides = [1, 1]} : vector<4x256xf32> to vector<4x128xf32>
    %323 = vector.broadcast %131 : vector<1x128xf32> to vector<4x128xf32>
    %324 = arith.addf %322, %323 : vector<4x128xf32>
    %325 = vector.extract_strided_slice %324 {offsets = [0, 0], sizes = [4, 96], strides = [1, 1]} : vector<4x128xf32> to vector<4x96xf32>
    %326 = arith.negf %325 : vector<4x96xf32>
    %327 = math.exp %326 : vector<4x96xf32>
    %cst_168 = arith.constant 1.000000e+00 : f32
    %328 = vector.broadcast %cst_168 : f32 to vector<4x96xf32>
    %329 = arith.addf %328, %327 : vector<4x96xf32>
    %330 = arith.divf %328, %329 : vector<4x96xf32>
    %331 = vector.extract_strided_slice %324 {offsets = [0, 96], sizes = [4, 32], strides = [1, 1]} : vector<4x128xf32> to vector<4x32xf32>
    %332 = math.tanh %331 : vector<4x32xf32>
    %333 = vector.extract_strided_slice %330 {offsets = [0, 0], sizes = [4, 32], strides = [1, 1]} : vector<4x96xf32> to vector<4x32xf32>
    %334 = vector.extract_strided_slice %330 {offsets = [0, 32], sizes = [4, 32], strides = [1, 1]} : vector<4x96xf32> to vector<4x32xf32>
    %335 = vector.extract_strided_slice %330 {offsets = [0, 64], sizes = [4, 32], strides = [1, 1]} : vector<4x96xf32> to vector<4x32xf32>
    %336 = arith.mulf %334, %298 : vector<4x32xf32>
    %337 = arith.mulf %333, %332 : vector<4x32xf32>
    %338 = arith.addf %336, %337 : vector<4x32xf32>
    %339 = math.tanh %338 : vector<4x32xf32>
    %340 = arith.mulf %335, %339 : vector<4x32xf32>
    %c20_169 = arith.constant 20 : index
    %c0_170 = arith.constant 0 : index
    %341 = vector.load %arg8[%c20_169, %c0_170] : memref<32x128xf32, #tpu.memory_space<vmem>>, vector<4x128xf32>
    %342 = arith.addf %341, %321 : vector<4x128xf32>
    %343 = vector.extract_strided_slice %342 {offsets = [0, 0], sizes = [4, 96], strides = [1, 1]} : vector<4x128xf32> to vector<4x96xf32>
    %344 = arith.negf %343 : vector<4x96xf32>
    %345 = math.exp %344 : vector<4x96xf32>
    %cst_171 = arith.constant 1.000000e+00 : f32
    %346 = vector.broadcast %cst_171 : f32 to vector<4x96xf32>
    %347 = arith.addf %346, %345 : vector<4x96xf32>
    %348 = arith.divf %346, %347 : vector<4x96xf32>
    %349 = vector.extract_strided_slice %342 {offsets = [0, 96], sizes = [4, 32], strides = [1, 1]} : vector<4x128xf32> to vector<4x32xf32>
    %350 = math.tanh %349 : vector<4x32xf32>
    %351 = vector.extract_strided_slice %348 {offsets = [0, 0], sizes = [4, 32], strides = [1, 1]} : vector<4x96xf32> to vector<4x32xf32>
    %352 = vector.extract_strided_slice %348 {offsets = [0, 32], sizes = [4, 32], strides = [1, 1]} : vector<4x96xf32> to vector<4x32xf32>
    %353 = vector.extract_strided_slice %348 {offsets = [0, 64], sizes = [4, 32], strides = [1, 1]} : vector<4x96xf32> to vector<4x32xf32>
    %354 = arith.mulf %352, %316 : vector<4x32xf32>
    %355 = arith.mulf %351, %350 : vector<4x32xf32>
    %356 = arith.addf %354, %355 : vector<4x32xf32>
    %357 = math.tanh %356 : vector<4x32xf32>
    %358 = arith.mulf %353, %357 : vector<4x32xf32>
    %359 = tpu.concatenate %358, %340 in 1 : vector<4x32xf32>, vector<4x32xf32> -> vector<4x64xf32>
    %cst_172 = arith.constant dense<0.000000e+00> : vector<4x256xf32>
    %360 = tpu.matmul %359, %129, %cst_172 {dimension_numbers = #tpu.dot_dimension_numbers<[1], [0], [0], [1], [0, 0, 1, 1], [], []>} : vector<4x64xf32>, vector<64x256xf32>, vector<4x256xf32> -> vector<4x256xf32>
    %361 = vector.extract_strided_slice %360 {offsets = [0, 0], sizes = [4, 128], strides = [1, 1]} : vector<4x256xf32> to vector<4x128xf32>
    %362 = vector.extract_strided_slice %360 {offsets = [0, 128], sizes = [4, 128], strides = [1, 1]} : vector<4x256xf32> to vector<4x128xf32>
    %363 = vector.broadcast %131 : vector<1x128xf32> to vector<4x128xf32>
    %364 = arith.addf %362, %363 : vector<4x128xf32>
    %365 = vector.extract_strided_slice %364 {offsets = [0, 0], sizes = [4, 96], strides = [1, 1]} : vector<4x128xf32> to vector<4x96xf32>
    %366 = arith.negf %365 : vector<4x96xf32>
    %367 = math.exp %366 : vector<4x96xf32>
    %cst_173 = arith.constant 1.000000e+00 : f32
    %368 = vector.broadcast %cst_173 : f32 to vector<4x96xf32>
    %369 = arith.addf %368, %367 : vector<4x96xf32>
    %370 = arith.divf %368, %369 : vector<4x96xf32>
    %371 = vector.extract_strided_slice %364 {offsets = [0, 96], sizes = [4, 32], strides = [1, 1]} : vector<4x128xf32> to vector<4x32xf32>
    %372 = math.tanh %371 : vector<4x32xf32>
    %373 = vector.extract_strided_slice %370 {offsets = [0, 0], sizes = [4, 32], strides = [1, 1]} : vector<4x96xf32> to vector<4x32xf32>
    %374 = vector.extract_strided_slice %370 {offsets = [0, 32], sizes = [4, 32], strides = [1, 1]} : vector<4x96xf32> to vector<4x32xf32>
    %375 = vector.extract_strided_slice %370 {offsets = [0, 64], sizes = [4, 32], strides = [1, 1]} : vector<4x96xf32> to vector<4x32xf32>
    %376 = arith.mulf %374, %338 : vector<4x32xf32>
    %377 = arith.mulf %373, %372 : vector<4x32xf32>
    %378 = arith.addf %376, %377 : vector<4x32xf32>
    %379 = math.tanh %378 : vector<4x32xf32>
    %380 = arith.mulf %375, %379 : vector<4x32xf32>
    %c24_174 = arith.constant 24 : index
    %c0_175 = arith.constant 0 : index
    %381 = vector.load %arg8[%c24_174, %c0_175] : memref<32x128xf32, #tpu.memory_space<vmem>>, vector<4x128xf32>
    %382 = arith.addf %381, %361 : vector<4x128xf32>
    %383 = vector.extract_strided_slice %382 {offsets = [0, 0], sizes = [4, 96], strides = [1, 1]} : vector<4x128xf32> to vector<4x96xf32>
    %384 = arith.negf %383 : vector<4x96xf32>
    %385 = math.exp %384 : vector<4x96xf32>
    %cst_176 = arith.constant 1.000000e+00 : f32
    %386 = vector.broadcast %cst_176 : f32 to vector<4x96xf32>
    %387 = arith.addf %386, %385 : vector<4x96xf32>
    %388 = arith.divf %386, %387 : vector<4x96xf32>
    %389 = vector.extract_strided_slice %382 {offsets = [0, 96], sizes = [4, 32], strides = [1, 1]} : vector<4x128xf32> to vector<4x32xf32>
    %390 = math.tanh %389 : vector<4x32xf32>
    %391 = vector.extract_strided_slice %388 {offsets = [0, 0], sizes = [4, 32], strides = [1, 1]} : vector<4x96xf32> to vector<4x32xf32>
    %392 = vector.extract_strided_slice %388 {offsets = [0, 32], sizes = [4, 32], strides = [1, 1]} : vector<4x96xf32> to vector<4x32xf32>
    %393 = vector.extract_strided_slice %388 {offsets = [0, 64], sizes = [4, 32], strides = [1, 1]} : vector<4x96xf32> to vector<4x32xf32>
    %394 = arith.mulf %392, %356 : vector<4x32xf32>
    %395 = arith.mulf %391, %390 : vector<4x32xf32>
    %396 = arith.addf %394, %395 : vector<4x32xf32>
    %397 = math.tanh %396 : vector<4x32xf32>
    %398 = arith.mulf %393, %397 : vector<4x32xf32>
    %399 = tpu.concatenate %398, %380 in 1 : vector<4x32xf32>, vector<4x32xf32> -> vector<4x64xf32>
    %cst_177 = arith.constant dense<0.000000e+00> : vector<4x256xf32>
    %400 = tpu.matmul %399, %129, %cst_177 {dimension_numbers = #tpu.dot_dimension_numbers<[1], [0], [0], [1], [0, 0, 1, 1], [], []>} : vector<4x64xf32>, vector<64x256xf32>, vector<4x256xf32> -> vector<4x256xf32>
    %401 = vector.extract_strided_slice %400 {offsets = [0, 0], sizes = [4, 128], strides = [1, 1]} : vector<4x256xf32> to vector<4x128xf32>
    %402 = vector.extract_strided_slice %400 {offsets = [0, 128], sizes = [4, 128], strides = [1, 1]} : vector<4x256xf32> to vector<4x128xf32>
    %403 = vector.broadcast %131 : vector<1x128xf32> to vector<4x128xf32>
    %404 = arith.addf %402, %403 : vector<4x128xf32>
    %405 = vector.extract_strided_slice %404 {offsets = [0, 0], sizes = [4, 96], strides = [1, 1]} : vector<4x128xf32> to vector<4x96xf32>
    %406 = arith.negf %405 : vector<4x96xf32>
    %407 = math.exp %406 : vector<4x96xf32>
    %cst_178 = arith.constant 1.000000e+00 : f32
    %408 = vector.broadcast %cst_178 : f32 to vector<4x96xf32>
    %409 = arith.addf %408, %407 : vector<4x96xf32>
    %410 = arith.divf %408, %409 : vector<4x96xf32>
    %411 = vector.extract_strided_slice %404 {offsets = [0, 96], sizes = [4, 32], strides = [1, 1]} : vector<4x128xf32> to vector<4x32xf32>
    %412 = math.tanh %411 : vector<4x32xf32>
    %413 = vector.extract_strided_slice %410 {offsets = [0, 0], sizes = [4, 32], strides = [1, 1]} : vector<4x96xf32> to vector<4x32xf32>
    %414 = vector.extract_strided_slice %410 {offsets = [0, 32], sizes = [4, 32], strides = [1, 1]} : vector<4x96xf32> to vector<4x32xf32>
    %415 = vector.extract_strided_slice %410 {offsets = [0, 64], sizes = [4, 32], strides = [1, 1]} : vector<4x96xf32> to vector<4x32xf32>
    %416 = arith.mulf %414, %378 : vector<4x32xf32>
    %417 = arith.mulf %413, %412 : vector<4x32xf32>
    %418 = arith.addf %416, %417 : vector<4x32xf32>
    %419 = math.tanh %418 : vector<4x32xf32>
    %420 = arith.mulf %415, %419 : vector<4x32xf32>
    %c28_179 = arith.constant 28 : index
    %c0_180 = arith.constant 0 : index
    %421 = vector.load %arg8[%c28_179, %c0_180] : memref<32x128xf32, #tpu.memory_space<vmem>>, vector<4x128xf32>
    %422 = arith.addf %421, %401 : vector<4x128xf32>
    %423 = vector.extract_strided_slice %422 {offsets = [0, 0], sizes = [4, 96], strides = [1, 1]} : vector<4x128xf32> to vector<4x96xf32>
    %424 = arith.negf %423 : vector<4x96xf32>
    %425 = math.exp %424 : vector<4x96xf32>
    %cst_181 = arith.constant 1.000000e+00 : f32
    %426 = vector.broadcast %cst_181 : f32 to vector<4x96xf32>
    %427 = arith.addf %426, %425 : vector<4x96xf32>
    %428 = arith.divf %426, %427 : vector<4x96xf32>
    %429 = vector.extract_strided_slice %422 {offsets = [0, 96], sizes = [4, 32], strides = [1, 1]} : vector<4x128xf32> to vector<4x32xf32>
    %430 = math.tanh %429 : vector<4x32xf32>
    %431 = vector.extract_strided_slice %428 {offsets = [0, 0], sizes = [4, 32], strides = [1, 1]} : vector<4x96xf32> to vector<4x32xf32>
    %432 = vector.extract_strided_slice %428 {offsets = [0, 32], sizes = [4, 32], strides = [1, 1]} : vector<4x96xf32> to vector<4x32xf32>
    %433 = vector.extract_strided_slice %428 {offsets = [0, 64], sizes = [4, 32], strides = [1, 1]} : vector<4x96xf32> to vector<4x32xf32>
    %434 = arith.mulf %432, %396 : vector<4x32xf32>
    %435 = arith.mulf %431, %430 : vector<4x32xf32>
    %436 = arith.addf %434, %435 : vector<4x32xf32>
    %437 = math.tanh %436 : vector<4x32xf32>
    %438 = arith.mulf %433, %437 : vector<4x32xf32>
    %439 = tpu.concatenate %438, %420 in 1 : vector<4x32xf32>, vector<4x32xf32> -> vector<4x64xf32>
    %cst_182 = arith.constant dense<0.000000e+00> : vector<4x256xf32>
    %440 = tpu.matmul %439, %129, %cst_182 {dimension_numbers = #tpu.dot_dimension_numbers<[1], [0], [0], [1], [0, 0, 1, 1], [], []>} : vector<4x64xf32>, vector<64x256xf32>, vector<4x256xf32> -> vector<4x256xf32>
    %441 = vector.extract_strided_slice %440 {offsets = [0, 128], sizes = [4, 128], strides = [1, 1]} : vector<4x256xf32> to vector<4x128xf32>
    %442 = vector.broadcast %131 : vector<1x128xf32> to vector<4x128xf32>
    %443 = arith.addf %441, %442 : vector<4x128xf32>
    %444 = vector.extract_strided_slice %443 {offsets = [0, 0], sizes = [4, 96], strides = [1, 1]} : vector<4x128xf32> to vector<4x96xf32>
    %445 = arith.negf %444 : vector<4x96xf32>
    %446 = math.exp %445 : vector<4x96xf32>
    %cst_183 = arith.constant 1.000000e+00 : f32
    %447 = vector.broadcast %cst_183 : f32 to vector<4x96xf32>
    %448 = arith.addf %447, %446 : vector<4x96xf32>
    %449 = arith.divf %447, %448 : vector<4x96xf32>
    %450 = vector.extract_strided_slice %443 {offsets = [0, 96], sizes = [4, 32], strides = [1, 1]} : vector<4x128xf32> to vector<4x32xf32>
    %451 = math.tanh %450 : vector<4x32xf32>
    %452 = vector.extract_strided_slice %449 {offsets = [0, 0], sizes = [4, 32], strides = [1, 1]} : vector<4x96xf32> to vector<4x32xf32>
    %453 = vector.extract_strided_slice %449 {offsets = [0, 32], sizes = [4, 32], strides = [1, 1]} : vector<4x96xf32> to vector<4x32xf32>
    %454 = vector.extract_strided_slice %449 {offsets = [0, 64], sizes = [4, 32], strides = [1, 1]} : vector<4x96xf32> to vector<4x32xf32>
    %455 = arith.mulf %453, %418 : vector<4x32xf32>
    %456 = arith.mulf %452, %451 : vector<4x32xf32>
    %457 = arith.addf %455, %456 : vector<4x32xf32>
    %458 = math.tanh %457 : vector<4x32xf32>
    %459 = arith.mulf %454, %458 : vector<4x32xf32>
    %c32 = arith.constant 32 : index
    %c0_184 = arith.constant 0 : index
    %460 = vector.load %arg2[%c32, %c0_184] : memref<64x128xf32, #tpu.memory_space<vmem>>, vector<32x128xf32>
    %c64 = arith.constant 64 : index
    %c0_185 = arith.constant 0 : index
    %461 = vector.load %arg3[%c64, %c0_185] : memref<128x256xf32, #tpu.memory_space<vmem>>, vector<64x256xf32>
    %c2_186 = arith.constant 2 : index
    %c0_187 = arith.constant 0 : index
    %462 = vector.load %arg4[%c2_186, %c0_187] : memref<4x128xf32, #tpu.memory_space<vmem>>, vector<1x128xf32>
    %c3_188 = arith.constant 3 : index
    %c0_189 = arith.constant 0 : index
    %463 = vector.load %arg4[%c3_188, %c0_189] : memref<4x128xf32, #tpu.memory_space<vmem>>, vector<1x128xf32>
    %cst_190 = arith.constant dense<0.000000e+00> : vector<4x128xf32>
    %464 = tpu.matmul %459, %460, %cst_190 {dimension_numbers = #tpu.dot_dimension_numbers<[1], [0], [0], [1], [0, 0, 1, 1], [], []>} : vector<4x32xf32>, vector<32x128xf32>, vector<4x128xf32> -> vector<4x128xf32>
    %465 = vector.broadcast %462 : vector<1x128xf32> to vector<4x128xf32>
    %466 = arith.addf %464, %465 : vector<4x128xf32>
    %c0_191 = arith.constant 0 : index
    %c0_192 = arith.constant 0 : index
    %467 = vector.load %arg8[%c0_191, %c0_192] : memref<32x128xf32, #tpu.memory_space<vmem>>, vector<4x128xf32>
    tpu.vector_store %arg8[%c0_191, %c0_192], %466 {strides = array<i32>} : memref<32x128xf32, #tpu.memory_space<vmem>>, vector<4x128xf32>,
    %cst_193 = arith.constant 0.000000e+00 : f32
    %468 = vector.broadcast %cst_193 : f32 to vector<1x128xf32>
    %cst_194 = arith.constant 0.000000e+00 : f32
    %469 = vector.broadcast %cst_194 : f32 to vector<1x32xf32>
    %cst_195 = arith.constant 0.000000e+00 : f32
    %470 = vector.broadcast %cst_195 : f32 to vector<1x32xf32>
    %cst_196 = arith.constant 0.000000e+00 : f32
    %471 = vector.broadcast %cst_196 : f32 to vector<1x32xf32>
    %c0_197 = arith.constant 0 : index
    %c0_198 = arith.constant 0 : index
    %472 = vector.load %arg8[%c0_197, %c0_198] : memref<32x128xf32, #tpu.memory_space<vmem>>, vector<1x128xf32>
    %473 = arith.addf %472, %468 : vector<1x128xf32>
    %474 = vector.extract_strided_slice %473 {offsets = [0, 0], sizes = [1, 96], strides = [1, 1]} : vector<1x128xf32> to vector<1x96xf32>
    %475 = arith.negf %474 : vector<1x96xf32>
    %476 = math.exp %475 : vector<1x96xf32>
    %cst_199 = arith.constant 1.000000e+00 : f32
    %477 = vector.broadcast %cst_199 : f32 to vector<1x96xf32>
    %478 = arith.addf %477, %476 : vector<1x96xf32>
    %479 = arith.divf %477, %478 : vector<1x96xf32>
    %480 = vector.extract_strided_slice %473 {offsets = [0, 96], sizes = [1, 32], strides = [1, 1]} : vector<1x128xf32> to vector<1x32xf32>
    %481 = math.tanh %480 : vector<1x32xf32>
    %482 = vector.extract_strided_slice %479 {offsets = [0, 0], sizes = [1, 32], strides = [1, 1]} : vector<1x96xf32> to vector<1x32xf32>
    %483 = vector.extract_strided_slice %479 {offsets = [0, 32], sizes = [1, 32], strides = [1, 1]} : vector<1x96xf32> to vector<1x32xf32>
    %484 = vector.extract_strided_slice %479 {offsets = [0, 64], sizes = [1, 32], strides = [1, 1]} : vector<1x96xf32> to vector<1x32xf32>
    %485 = arith.mulf %483, %469 : vector<1x32xf32>
    %486 = arith.mulf %482, %481 : vector<1x32xf32>
    %487 = arith.addf %485, %486 : vector<1x32xf32>
    %488 = math.tanh %487 : vector<1x32xf32>
    %489 = arith.mulf %484, %488 : vector<1x32xf32>
    %490 = tpu.concatenate %489, %470 in 1 : vector<1x32xf32>, vector<1x32xf32> -> vector<1x64xf32>
    %cst_200 = arith.constant dense<0.000000e+00> : vector<1x256xf32>
    %491 = tpu.matmul %490, %461, %cst_200 {dimension_numbers = #tpu.dot_dimension_numbers<[1], [0], [0], [1], [0, 0, 1, 1], [], []>} : vector<1x64xf32>, vector<64x256xf32>, vector<1x256xf32> -> vector<1x256xf32>
    %492 = vector.extract_strided_slice %491 {offsets = [0, 0], sizes = [1, 128], strides = [1, 1]} : vector<1x256xf32> to vector<1x128xf32>
    %493 = vector.extract_strided_slice %491 {offsets = [0, 128], sizes = [1, 128], strides = [1, 1]} : vector<1x256xf32> to vector<1x128xf32>
    %494 = arith.addf %493, %463 : vector<1x128xf32>
    %495 = vector.extract_strided_slice %494 {offsets = [0, 0], sizes = [1, 96], strides = [1, 1]} : vector<1x128xf32> to vector<1x96xf32>
    %496 = arith.negf %495 : vector<1x96xf32>
    %497 = math.exp %496 : vector<1x96xf32>
    %cst_201 = arith.constant 1.000000e+00 : f32
    %498 = vector.broadcast %cst_201 : f32 to vector<1x96xf32>
    %499 = arith.addf %498, %497 : vector<1x96xf32>
    %500 = arith.divf %498, %499 : vector<1x96xf32>
    %501 = vector.extract_strided_slice %494 {offsets = [0, 96], sizes = [1, 32], strides = [1, 1]} : vector<1x128xf32> to vector<1x32xf32>
    %502 = math.tanh %501 : vector<1x32xf32>
    %503 = vector.extract_strided_slice %500 {offsets = [0, 0], sizes = [1, 32], strides = [1, 1]} : vector<1x96xf32> to vector<1x32xf32>
    %504 = vector.extract_strided_slice %500 {offsets = [0, 32], sizes = [1, 32], strides = [1, 1]} : vector<1x96xf32> to vector<1x32xf32>
    %505 = vector.extract_strided_slice %500 {offsets = [0, 64], sizes = [1, 32], strides = [1, 1]} : vector<1x96xf32> to vector<1x32xf32>
    %506 = arith.mulf %504, %471 : vector<1x32xf32>
    %507 = arith.mulf %503, %502 : vector<1x32xf32>
    %508 = arith.addf %506, %507 : vector<1x32xf32>
    %509 = math.tanh %508 : vector<1x32xf32>
    %510 = arith.mulf %505, %509 : vector<1x32xf32>
    %c0_202 = arith.constant 0 : index
    %c0_203 = arith.constant 0 : index
    %511 = vector.load %arg9[%c0_202, %c0_203] : memref<4x32xf32, #tpu.memory_space<vmem>>, vector<1x32xf32>
    tpu.vector_store %arg9[%c0_202, %c0_203], %510 {strides = array<i32>} : memref<4x32xf32, #tpu.memory_space<vmem>>, vector<1x32xf32>,
    %c1_204 = arith.constant 1 : index
    %c0_205 = arith.constant 0 : index
    %512 = vector.load %arg8[%c1_204, %c0_205] : memref<32x128xf32, #tpu.memory_space<vmem>>, vector<1x128xf32>
    %513 = arith.addf %512, %492 : vector<1x128xf32>
    %514 = vector.extract_strided_slice %513 {offsets = [0, 0], sizes = [1, 96], strides = [1, 1]} : vector<1x128xf32> to vector<1x96xf32>
    %515 = arith.negf %514 : vector<1x96xf32>
    %516 = math.exp %515 : vector<1x96xf32>
    %cst_206 = arith.constant 1.000000e+00 : f32
    %517 = vector.broadcast %cst_206 : f32 to vector<1x96xf32>
    %518 = arith.addf %517, %516 : vector<1x96xf32>
    %519 = arith.divf %517, %518 : vector<1x96xf32>
    %520 = vector.extract_strided_slice %513 {offsets = [0, 96], sizes = [1, 32], strides = [1, 1]} : vector<1x128xf32> to vector<1x32xf32>
    %521 = math.tanh %520 : vector<1x32xf32>
    %522 = vector.extract_strided_slice %519 {offsets = [0, 0], sizes = [1, 32], strides = [1, 1]} : vector<1x96xf32> to vector<1x32xf32>
    %523 = vector.extract_strided_slice %519 {offsets = [0, 32], sizes = [1, 32], strides = [1, 1]} : vector<1x96xf32> to vector<1x32xf32>
    %524 = vector.extract_strided_slice %519 {offsets = [0, 64], sizes = [1, 32], strides = [1, 1]} : vector<1x96xf32> to vector<1x32xf32>
    %525 = arith.mulf %523, %487 : vector<1x32xf32>
    %526 = arith.mulf %522, %521 : vector<1x32xf32>
    %527 = arith.addf %525, %526 : vector<1x32xf32>
    %528 = math.tanh %527 : vector<1x32xf32>
    %529 = arith.mulf %524, %528 : vector<1x32xf32>
    %530 = tpu.concatenate %529, %510 in 1 : vector<1x32xf32>, vector<1x32xf32> -> vector<1x64xf32>
    %cst_207 = arith.constant dense<0.000000e+00> : vector<1x256xf32>
    %531 = tpu.matmul %530, %461, %cst_207 {dimension_numbers = #tpu.dot_dimension_numbers<[1], [0], [0], [1], [0, 0, 1, 1], [], []>} : vector<1x64xf32>, vector<64x256xf32>, vector<1x256xf32> -> vector<1x256xf32>
    %532 = vector.extract_strided_slice %531 {offsets = [0, 0], sizes = [1, 128], strides = [1, 1]} : vector<1x256xf32> to vector<1x128xf32>
    %533 = vector.extract_strided_slice %531 {offsets = [0, 128], sizes = [1, 128], strides = [1, 1]} : vector<1x256xf32> to vector<1x128xf32>
    %534 = arith.addf %533, %463 : vector<1x128xf32>
    %535 = vector.extract_strided_slice %534 {offsets = [0, 0], sizes = [1, 96], strides = [1, 1]} : vector<1x128xf32> to vector<1x96xf32>
    %536 = arith.negf %535 : vector<1x96xf32>
    %537 = math.exp %536 : vector<1x96xf32>
    %cst_208 = arith.constant 1.000000e+00 : f32
    %538 = vector.broadcast %cst_208 : f32 to vector<1x96xf32>
    %539 = arith.addf %538, %537 : vector<1x96xf32>
    %540 = arith.divf %538, %539 : vector<1x96xf32>
    %541 = vector.extract_strided_slice %534 {offsets = [0, 96], sizes = [1, 32], strides = [1, 1]} : vector<1x128xf32> to vector<1x32xf32>
    %542 = math.tanh %541 : vector<1x32xf32>
    %543 = vector.extract_strided_slice %540 {offsets = [0, 0], sizes = [1, 32], strides = [1, 1]} : vector<1x96xf32> to vector<1x32xf32>
    %544 = vector.extract_strided_slice %540 {offsets = [0, 32], sizes = [1, 32], strides = [1, 1]} : vector<1x96xf32> to vector<1x32xf32>
    %545 = vector.extract_strided_slice %540 {offsets = [0, 64], sizes = [1, 32], strides = [1, 1]} : vector<1x96xf32> to vector<1x32xf32>
    %546 = arith.mulf %544, %508 : vector<1x32xf32>
    %547 = arith.mulf %543, %542 : vector<1x32xf32>
    %548 = arith.addf %546, %547 : vector<1x32xf32>
    %549 = math.tanh %548 : vector<1x32xf32>
    %550 = arith.mulf %545, %549 : vector<1x32xf32>
    %c1_209 = arith.constant 1 : index
    %c0_210 = arith.constant 0 : index
    %551 = vector.load %arg9[%c1_209, %c0_210] : memref<4x32xf32, #tpu.memory_space<vmem>>, vector<1x32xf32>
    tpu.vector_store %arg9[%c1_209, %c0_210], %550 {strides = array<i32>} : memref<4x32xf32, #tpu.memory_space<vmem>>, vector<1x32xf32>,
    %c2_211 = arith.constant 2 : index
    %c0_212 = arith.constant 0 : index
    %552 = vector.load %arg8[%c2_211, %c0_212] : memref<32x128xf32, #tpu.memory_space<vmem>>, vector<1x128xf32>
    %553 = arith.addf %552, %532 : vector<1x128xf32>
    %554 = vector.extract_strided_slice %553 {offsets = [0, 0], sizes = [1, 96], strides = [1, 1]} : vector<1x128xf32> to vector<1x96xf32>
    %555 = arith.negf %554 : vector<1x96xf32>
    %556 = math.exp %555 : vector<1x96xf32>
    %cst_213 = arith.constant 1.000000e+00 : f32
    %557 = vector.broadcast %cst_213 : f32 to vector<1x96xf32>
    %558 = arith.addf %557, %556 : vector<1x96xf32>
    %559 = arith.divf %557, %558 : vector<1x96xf32>
    %560 = vector.extract_strided_slice %553 {offsets = [0, 96], sizes = [1, 32], strides = [1, 1]} : vector<1x128xf32> to vector<1x32xf32>
    %561 = math.tanh %560 : vector<1x32xf32>
    %562 = vector.extract_strided_slice %559 {offsets = [0, 0], sizes = [1, 32], strides = [1, 1]} : vector<1x96xf32> to vector<1x32xf32>
    %563 = vector.extract_strided_slice %559 {offsets = [0, 32], sizes = [1, 32], strides = [1, 1]} : vector<1x96xf32> to vector<1x32xf32>
    %564 = vector.extract_strided_slice %559 {offsets = [0, 64], sizes = [1, 32], strides = [1, 1]} : vector<1x96xf32> to vector<1x32xf32>
    %565 = arith.mulf %563, %527 : vector<1x32xf32>
    %566 = arith.mulf %562, %561 : vector<1x32xf32>
    %567 = arith.addf %565, %566 : vector<1x32xf32>
    %568 = math.tanh %567 : vector<1x32xf32>
    %569 = arith.mulf %564, %568 : vector<1x32xf32>
    %570 = tpu.concatenate %569, %550 in 1 : vector<1x32xf32>, vector<1x32xf32> -> vector<1x64xf32>
    %cst_214 = arith.constant dense<0.000000e+00> : vector<1x256xf32>
    %571 = tpu.matmul %570, %461, %cst_214 {dimension_numbers = #tpu.dot_dimension_numbers<[1], [0], [0], [1], [0, 0, 1, 1], [], []>} : vector<1x64xf32>, vector<64x256xf32>, vector<1x256xf32> -> vector<1x256xf32>
    %572 = vector.extract_strided_slice %571 {offsets = [0, 0], sizes = [1, 128], strides = [1, 1]} : vector<1x256xf32> to vector<1x128xf32>
    %573 = vector.extract_strided_slice %571 {offsets = [0, 128], sizes = [1, 128], strides = [1, 1]} : vector<1x256xf32> to vector<1x128xf32>
    %574 = arith.addf %573, %463 : vector<1x128xf32>
    %575 = vector.extract_strided_slice %574 {offsets = [0, 0], sizes = [1, 96], strides = [1, 1]} : vector<1x128xf32> to vector<1x96xf32>
    %576 = arith.negf %575 : vector<1x96xf32>
    %577 = math.exp %576 : vector<1x96xf32>
    %cst_215 = arith.constant 1.000000e+00 : f32
    %578 = vector.broadcast %cst_215 : f32 to vector<1x96xf32>
    %579 = arith.addf %578, %577 : vector<1x96xf32>
    %580 = arith.divf %578, %579 : vector<1x96xf32>
    %581 = vector.extract_strided_slice %574 {offsets = [0, 96], sizes = [1, 32], strides = [1, 1]} : vector<1x128xf32> to vector<1x32xf32>
    %582 = math.tanh %581 : vector<1x32xf32>
    %583 = vector.extract_strided_slice %580 {offsets = [0, 0], sizes = [1, 32], strides = [1, 1]} : vector<1x96xf32> to vector<1x32xf32>
    %584 = vector.extract_strided_slice %580 {offsets = [0, 32], sizes = [1, 32], strides = [1, 1]} : vector<1x96xf32> to vector<1x32xf32>
    %585 = vector.extract_strided_slice %580 {offsets = [0, 64], sizes = [1, 32], strides = [1, 1]} : vector<1x96xf32> to vector<1x32xf32>
    %586 = arith.mulf %584, %548 : vector<1x32xf32>
    %587 = arith.mulf %583, %582 : vector<1x32xf32>
    %588 = arith.addf %586, %587 : vector<1x32xf32>
    %589 = math.tanh %588 : vector<1x32xf32>
    %590 = arith.mulf %585, %589 : vector<1x32xf32>
    %c2_216 = arith.constant 2 : index
    %c0_217 = arith.constant 0 : index
    %591 = vector.load %arg9[%c2_216, %c0_217] : memref<4x32xf32, #tpu.memory_space<vmem>>, vector<1x32xf32>
    tpu.vector_store %arg9[%c2_216, %c0_217], %590 {strides = array<i32>} : memref<4x32xf32, #tpu.memory_space<vmem>>, vector<1x32xf32>,
    %c3_218 = arith.constant 3 : index
    %c0_219 = arith.constant 0 : index
    %592 = vector.load %arg8[%c3_218, %c0_219] : memref<32x128xf32, #tpu.memory_space<vmem>>, vector<1x128xf32>
    %593 = arith.addf %592, %572 : vector<1x128xf32>
    %594 = vector.extract_strided_slice %593 {offsets = [0, 0], sizes = [1, 96], strides = [1, 1]} : vector<1x128xf32> to vector<1x96xf32>
    %595 = arith.negf %594 : vector<1x96xf32>
    %596 = math.exp %595 : vector<1x96xf32>
    %cst_220 = arith.constant 1.000000e+00 : f32
    %597 = vector.broadcast %cst_220 : f32 to vector<1x96xf32>
    %598 = arith.addf %597, %596 : vector<1x96xf32>
    %599 = arith.divf %597, %598 : vector<1x96xf32>
    %600 = vector.extract_strided_slice %593 {offsets = [0, 96], sizes = [1, 32], strides = [1, 1]} : vector<1x128xf32> to vector<1x32xf32>
    %601 = math.tanh %600 : vector<1x32xf32>
    %602 = vector.extract_strided_slice %599 {offsets = [0, 0], sizes = [1, 32], strides = [1, 1]} : vector<1x96xf32> to vector<1x32xf32>
    %603 = vector.extract_strided_slice %599 {offsets = [0, 32], sizes = [1, 32], strides = [1, 1]} : vector<1x96xf32> to vector<1x32xf32>
    %604 = vector.extract_strided_slice %599 {offsets = [0, 64], sizes = [1, 32], strides = [1, 1]} : vector<1x96xf32> to vector<1x32xf32>
    %605 = arith.mulf %603, %567 : vector<1x32xf32>
    %606 = arith.mulf %602, %601 : vector<1x32xf32>
    %607 = arith.addf %605, %606 : vector<1x32xf32>
    %608 = math.tanh %607 : vector<1x32xf32>
    %609 = arith.mulf %604, %608 : vector<1x32xf32>
    %610 = tpu.concatenate %609, %590 in 1 : vector<1x32xf32>, vector<1x32xf32> -> vector<1x64xf32>
    %cst_221 = arith.constant dense<0.000000e+00> : vector<1x256xf32>
    %611 = tpu.matmul %610, %461, %cst_221 {dimension_numbers = #tpu.dot_dimension_numbers<[1], [0], [0], [1], [0, 0, 1, 1], [], []>} : vector<1x64xf32>, vector<64x256xf32>, vector<1x256xf32> -> vector<1x256xf32>
    %612 = vector.extract_strided_slice %611 {offsets = [0, 128], sizes = [1, 128], strides = [1, 1]} : vector<1x256xf32> to vector<1x128xf32>
    %613 = arith.addf %612, %463 : vector<1x128xf32>
    %614 = vector.extract_strided_slice %613 {offsets = [0, 0], sizes = [1, 96], strides = [1, 1]} : vector<1x128xf32> to vector<1x96xf32>
    %615 = arith.negf %614 : vector<1x96xf32>
    %616 = math.exp %615 : vector<1x96xf32>
    %cst_222 = arith.constant 1.000000e+00 : f32
    %617 = vector.broadcast %cst_222 : f32 to vector<1x96xf32>
    %618 = arith.addf %617, %616 : vector<1x96xf32>
    %619 = arith.divf %617, %618 : vector<1x96xf32>
    %620 = vector.extract_strided_slice %613 {offsets = [0, 96], sizes = [1, 32], strides = [1, 1]} : vector<1x128xf32> to vector<1x32xf32>
    %621 = math.tanh %620 : vector<1x32xf32>
    %622 = vector.extract_strided_slice %619 {offsets = [0, 0], sizes = [1, 32], strides = [1, 1]} : vector<1x96xf32> to vector<1x32xf32>
    %623 = vector.extract_strided_slice %619 {offsets = [0, 32], sizes = [1, 32], strides = [1, 1]} : vector<1x96xf32> to vector<1x32xf32>
    %624 = vector.extract_strided_slice %619 {offsets = [0, 64], sizes = [1, 32], strides = [1, 1]} : vector<1x96xf32> to vector<1x32xf32>
    %625 = arith.mulf %623, %588 : vector<1x32xf32>
    %626 = arith.mulf %622, %621 : vector<1x32xf32>
    %627 = arith.addf %625, %626 : vector<1x32xf32>
    %628 = math.tanh %627 : vector<1x32xf32>
    %629 = arith.mulf %624, %628 : vector<1x32xf32>
    %c3_223 = arith.constant 3 : index
    %c0_224 = arith.constant 0 : index
    %630 = vector.load %arg9[%c3_223, %c0_224] : memref<4x32xf32, #tpu.memory_space<vmem>>, vector<1x32xf32>
    tpu.vector_store %arg9[%c3_223, %c0_224], %629 {strides = array<i32>} : memref<4x32xf32, #tpu.memory_space<vmem>>, vector<1x32xf32>,
    %c0_225 = arith.constant 0 : index
    %c0_226 = arith.constant 0 : index
    %631 = vector.load %arg9[%c0_225, %c0_226] : memref<4x32xf32, #tpu.memory_space<vmem>>, vector<4x32xf32>
    %c0_227 = arith.constant 0 : index
    %c0_228 = arith.constant 0 : index
    %632 = vector.load %arg5[%c0_227, %c0_228] : memref<68x128xf32, #tpu.memory_space<vmem>>, vector<32x32xf32>
    %c32_229 = arith.constant 32 : index
    %c0_230 = arith.constant 0 : index
    %633 = vector.load %arg5[%c32_229, %c0_230] : memref<68x128xf32, #tpu.memory_space<vmem>>, vector<32x32xf32>
    %c64_231 = arith.constant 64 : index
    %c0_232 = arith.constant 0 : index
    %634 = vector.load %arg5[%c64_231, %c0_232] : memref<68x128xf32, #tpu.memory_space<vmem>>, vector<1x32xf32>
    %c65 = arith.constant 65 : index
    %c0_233 = arith.constant 0 : index
    %635 = vector.load %arg5[%c65, %c0_233] : memref<68x128xf32, #tpu.memory_space<vmem>>, vector<1x32xf32>
    %c66 = arith.constant 66 : index
    %c0_234 = arith.constant 0 : index
    %636 = vector.load %arg5[%c66, %c0_234] : memref<68x128xf32, #tpu.memory_space<vmem>>, vector<1x32xf32>
    %c67 = arith.constant 67 : index
    %c0_235 = arith.constant 0 : index
    %637 = vector.load %arg5[%c67, %c0_235] : memref<68x128xf32, #tpu.memory_space<vmem>>, vector<1x1xf32>
    %638 = vector.extract_strided_slice %459 {offsets = [3, 0], sizes = [1, 32], strides = [1, 1]} : vector<4x32xf32> to vector<1x32xf32>
    %cst_236 = arith.constant dense<0.000000e+00> : vector<1x32xf32>
    %639 = tpu.matmul %638, %632, %cst_236 {dimension_numbers = #tpu.dot_dimension_numbers<[1], [0], [0], [1], [0, 0, 1, 1], [], []>} : vector<1x32xf32>, vector<32x32xf32>, vector<1x32xf32> -> vector<1x32xf32>
    %640 = arith.addf %639, %634 : vector<1x32xf32>
    %cst_237 = arith.constant dense<0.000000e+00> : vector<4x32xf32>
    %641 = tpu.matmul %631, %633, %cst_237 {dimension_numbers = #tpu.dot_dimension_numbers<[1], [0], [0], [1], [0, 0, 1, 1], [], []>} : vector<4x32xf32>, vector<32x32xf32>, vector<4x32xf32> -> vector<4x32xf32>
    %642 = vector.broadcast %640 : vector<1x32xf32> to vector<4x32xf32>
    %643 = arith.addf %641, %642 : vector<4x32xf32>
    %644 = math.tanh %643 : vector<4x32xf32>
    %645 = vector.broadcast %635 : vector<1x32xf32> to vector<4x32xf32>
    %646 = arith.mulf %644, %645 : vector<4x32xf32>
    %cst_238 = arith.constant dense<0.000000e+00> : vector<4xf32>
    %647 = vector.multi_reduction <add>, %646, %cst_238 [1] : vector<4x32xf32> to vector<4xf32>
    %648 = vector.shape_cast %647 : vector<4xf32> to vector<4x1xf32>
    %cst_239 = arith.constant dense<0xFF800000> : vector<1xf32>
    %649 = vector.multi_reduction <maximumf>, %648, %cst_239 [0] : vector<4x1xf32> to vector<1xf32>
    %650 = vector.shape_cast %649 : vector<1xf32> to vector<1x1xf32>
    %651 = vector.broadcast %650 : vector<1x1xf32> to vector<4x1xf32>
    %652 = arith.subf %648, %651 : vector<4x1xf32>
    %653 = math.exp %652 : vector<4x1xf32>
    %cst_240 = arith.constant dense<0.000000e+00> : vector<1xf32>
    %654 = vector.multi_reduction <add>, %653, %cst_240 [0] : vector<4x1xf32> to vector<1xf32>
    %655 = vector.shape_cast %654 : vector<1xf32> to vector<1x1xf32>
    %656 = vector.broadcast %655 : vector<1x1xf32> to vector<4x1xf32>
    %657 = arith.divf %653, %656 : vector<4x1xf32>
    %658 = vector.broadcast %657 : vector<4x1xf32> to vector<4x32xf32>
    %659 = arith.mulf %658, %631 : vector<4x32xf32>
    %cst_241 = arith.constant dense<0.000000e+00> : vector<32xf32>
    %660 = vector.multi_reduction <add>, %659, %cst_241 [0] : vector<4x32xf32> to vector<32xf32>
    %661 = vector.shape_cast %660 : vector<32xf32> to vector<1x32xf32>
    %662 = arith.mulf %661, %636 : vector<1x32xf32>
    %cst_242 = arith.constant dense<0.000000e+00> : vector<1xf32>
    %663 = vector.multi_reduction <add>, %662, %cst_242 [1] : vector<1x32xf32> to vector<1xf32>
    %664 = vector.shape_cast %663 : vector<1xf32> to vector<1x1xf32>
    %665 = arith.addf %664, %637 : vector<1x1xf32>
    %c0_243 = arith.constant 0 : index
    %c0_244 = arith.constant 0 : index
    %666 = vector.load %arg6[%c0_243, %c0_244] : memref<1x1xf32, #tpu.memory_space<vmem>>, vector<1x1xf32>
    tpu.vector_store %arg6[%c0_243, %c0_244], %665 {strides = array<i32>} : memref<1x1xf32, #tpu.memory_space<vmem>>, vector<1x1xf32>,
    return
  }
}

</mosaic_0001>

<llo_original>
// kernel: forward.1
$region0: #{forward.1}
  #allocation0 [shape = 'u32[]', space=smem, size = 0x4, offset = 0x4, fixed_abs, tag = 'smem constant byte address 0x4 - core index']
  #allocation1 [shape = 'u32[144,128]{1,0:T(1,128)}', space=vmem, size = 0x12000, scoped, tag = 'internal scratch']
  #allocation2 [shape = 'f32[32,32]{1,0:T(8,128)}', space=vmem, size = 0x4000, scoped, tag = 'scratch operand']
  #allocation3 [shape = 'f32[32,128]{1,0:T(8,128)}', space=vmem, size = 0x4000, scoped, tag = 'scratch operand']
  #allocation4 [shape = 'f32[4,32]{1,0:T(4,128)}', space=vmem, size = 0x800, scoped, tag = 'scratch operand']
  %s0 = inlined_call_operand.vmem [shape: s32[4,8], index: 0, kind: input, shape index: {}]
  %s1 = inlined_call_operand.vmem [shape: f32[50,32], index: 1, kind: input, shape index: {}]
  %s2 = inlined_call_operand.hbm [shape: f32[64,128], index: 2, kind: input, shape index: {}]
  %s3 = inlined_call_operand.hbm [shape: f32[128,256], index: 3, kind: input, shape index: {}]
  %s4 = inlined_call_operand.vmem [shape: f32[4,128], index: 4, kind: input, shape index: {}]
  %s5 = inlined_call_operand.vmem [shape: f32[68,128], index: 5, kind: input, shape index: {}]
  %s6 = inlined_call_operand.hbm [shape: f32[1,1], index: 6, kind: output, shape index: {}]
  %s7 = sld [smem:[#allocation0]]
  $region46: #{forward.1} parent=0
    _
  %s9 = ssub.s32 1, %s7
  %s10 = scalar_select 0, %s9, %s7
  $region1: #{forward.1} parent=0
    #allocation5 [shape = 'u8[2048]{0}', space=smem, size = 0x800, scoped, tag = 'input window, operand 0, single buffered']
    #allocation6 [shape = 's32[1]{0}', space=sflag, size = 0x4, scoped, tag = 'scoped memory for forward.1']
    #allocation7 [shape = 's32[1]{0}', space=sflag, size = 0x4, scoped, tag = 'scoped memory for forward.1']
    #allocation8 [shape = 's32[1]{0}', space=sflag, size = 0x4, scoped, tag = 'scoped memory for forward.1']
    #allocation9 [shape = 'u8[32768]{0}', space=vmem, size = 0x8000, scoped, tag = 'input window, operand 2, single buffered']
    #allocation10 [shape = 'u8[131072]{0}', space=vmem, size = 0x20000, scoped, tag = 'input window, operand 3, single buffered']
    #allocation11 [shape = 's32[1]{0}', space=sflag, size = 0x4, scoped, tag = 'scoped memory for forward.1']
    #allocation12 [shape = 'u8[512]{0}', space=vmem, size = 0x400, scoped, tag = 'output window, operand 0, single buffered']
    %11 = vsyncpa [#allocation8], 0
    %12 = vsyncpa [#allocation6], 0
    %13 = vsyncpa [#allocation11], 0
    %14 = vsyncpa [#allocation7], 0
    // Predicated region
    $region2: #{forward.1} parent=1 // pred_check
      _
    $region3: #{forward.1} parent=1 // pred_check_branch
      %16 = sbr.rel (0) target = $region5
    $region4: #{forward.1} parent=1 // pred_region
      %s18 = ssub.s32 64, 64
      %19 = vsyncadd [#allocation8], %s18
      %s21 = sshll.u32 %s0, 4
      %s22 = int_to_ptr.vmem [resolvable:$true] %s21
      %24 = dma.vmem_to_smem %s22, 64, [#allocation5], [#allocation8]
    $region5: #{forward.1} parent=1 // pred_fallthru
      _
    // Predicated region
    $region6: #{forward.1} parent=1 // pred_check
      _
    $region7: #{forward.1} parent=1 // pred_check_branch
      %26 = sbr.rel (0) target = $region9
    $region8: #{forward.1} parent=1 // pred_region
      _
    $region9: #{forward.1} parent=1 // pred_fallthru
      _
    // Predicated region
    $region10: #{forward.1} parent=1 // pred_check
      _
    $region11: #{forward.1} parent=1 // pred_check_branch
      %28 = sbr.rel (0) target = $region13
    $region12: #{forward.1} parent=1 // pred_region
      %s30 = ssub.s32 1024, 1024
      %31 = vsyncadd [#allocation6], %s30
      %s32 = sshll.u32 [#allocation9], 4
      %s33 = int_to_ptr.vmem [resolvable:$true] %s32
      %38 = dma.hbm_to_vmem [thread:$0]  %s2, 1024, %s33, [#allocation6], 128, 128, 8
    $region13: #{forward.1} parent=1 // pred_fallthru
      _
    // Predicated region
    $region14: #{forward.1} parent=1 // pred_check
      _
    $region15: #{forward.1} parent=1 // pred_check_branch
      %40 = sbr.rel (0) target = $region17
    $region16: #{forward.1} parent=1 // pred_region
      %s42 = ssub.s32 4096, 4096
      %43 = vsyncadd [#allocation11], %s42
      %s44 = sshll.u32 [#allocation10], 4
      %s45 = int_to_ptr.vmem [resolvable:$true] %s44
      %50 = dma.hbm_to_vmem [thread:$0]  %s3, 4096, %s45, [#allocation11], 256, 256, 16
    $region17: #{forward.1} parent=1 // pred_fallthru
      _
    // Predicated region
    $region18: #{forward.1} parent=1 // pred_check
      _
    $region19: #{forward.1} parent=1 // pred_check_branch
      %52 = sbr.rel (0) target = $region21
    $region20: #{forward.1} parent=1 // pred_region
      _
    $region21: #{forward.1} parent=1 // pred_fallthru
      _
    // Predicated region
    $region22: #{forward.1} parent=1 // pred_check
      _
    $region23: #{forward.1} parent=1 // pred_check_branch
      %54 = sbr.rel (0) target = $region25
    $region24: #{forward.1} parent=1 // pred_region
      _
    $region25: #{forward.1} parent=1 // pred_fallthru
      _
    // Predicated region
    $region26: #{forward.1} parent=1 // pred_check
      _
    $region27: #{forward.1} parent=1 // pred_check_branch
      %56 = sbr.rel (0) target = $region29
    $region28: #{forward.1} parent=1 // pred_region
      %57 = dma.done [#allocation8], 64
    $region29: #{forward.1} parent=1 // pred_fallthru
      _
    // Predicated region
    $region30: #{forward.1} parent=1 // pred_check
      _
    $region31: #{forward.1} parent=1 // pred_check_branch
      %59 = sbr.rel (0) target = $region33
    $region32: #{forward.1} parent=1 // pred_region
      %60 = dma.done [#allocation6], 1024
    $region33: #{forward.1} parent=1 // pred_fallthru
      _
    // Predicated region
    $region34: #{forward.1} parent=1 // pred_check
      _
    $region35: #{forward.1} parent=1 // pred_check_branch
      %62 = sbr.rel (0) target = $region37
    $region36: #{forward.1} parent=1 // pred_region
      %63 = dma.done [#allocation11], 4096
    $region37: #{forward.1} parent=1 // pred_fallthru
      _
    %64 = sfence
    %s65 = sld [smem:[#allocation5]]
    %s66 = scalar_lea.vmem %s1, %s65
    %v67 = vld [vmem:[%s66] sm:$0x1]
    %vm68 = vcmask 253952
    %69 = vst.msk [vmem:[#allocation2] sm:$0x1] %vm68, %v67
    %s70 = sld [smem:[#allocation5 + $0x80]]
    %s71 = scalar_lea.vmem %s1, %s70
    %v72 = vld [vmem:[%s71] sm:$0x1]
    %73 = vst.msk [vmem:[#allocation2 + $0x1] sm:$0x1] %vm68, %v72
    %s74 = sld [smem:[#allocation5 + $0x100]]
    %s75 = scalar_lea.vmem %s1, %s74
    %v76 = vld [vmem:[%s75] sm:$0x1]
    %77 = vst.msk [vmem:[#allocation2 + $0x2] sm:$0x1] %vm68, %v76
    %s78 = sld [smem:[#allocation5 + $0x180]]
    %s79 = scalar_lea.vmem %s1, %s78
    %v80 = vld [vmem:[%s79] sm:$0x1]
    %81 = vst.msk [vmem:[#allocation2 + $0x3] sm:$0x1] %vm68, %v80
    %s82 = sld [smem:[#allocation5 + $0x1]]
    %s83 = scalar_lea.vmem %s1, %s82
    %v84 = vld [vmem:[%s83] sm:$0x1]
    %85 = vst.msk [vmem:[#allocation2 + $0x4] sm:$0x1] %vm68, %v84
    %s86 = sld [smem:[#allocation5 + $0x81]]
    %s87 = scalar_lea.vmem %s1, %s86
    %v88 = vld [vmem:[%s87] sm:$0x1]
    %89 = vst.msk [vmem:[#allocation2 + $0x5] sm:$0x1] %vm68, %v88
    %s90 = sld [smem:[#allocation5 + $0x101]]
    %s91 = scalar_lea.vmem %s1, %s90
    %v92 = vld [vmem:[%s91] sm:$0x1]
    %93 = vst.msk [vmem:[#allocation2 + $0x6] sm:$0x1] %vm68, %v92
    %s94 = sld [smem:[#allocation5 + $0x181]]
    %s95 = scalar_lea.vmem %s1, %s94
    %v96 = vld [vmem:[%s95] sm:$0x1]
    %97 = vst.msk [vmem:[#allocation2 + $0x7] sm:$0x1] %vm68, %v96
    %s98 = sld [smem:[#allocation5 + $0x2]]
    %s99 = scalar_lea.vmem %s1, %s98
    %v100 = vld [vmem:[%s99] sm:$0x1]
    %101 = vst.msk [vmem:[#allocation2 + $0x8] sm:$0x1] %vm68, %v100
    %s102 = sld [smem:[#allocation5 + $0x82]]
    %s103 = scalar_lea.vmem %s1, %s102
    %v104 = vld [vmem:[%s103] sm:$0x1]
    %105 = vst.msk [vmem:[#allocation2 + $0x9] sm:$0x1] %vm68, %v104
    %s106 = sld [smem:[#allocation5 + $0x102]]
    %s107 = scalar_lea.vmem %s1, %s106
    %v108 = vld [vmem:[%s107] sm:$0x1]
    %109 = vst.msk [vmem:[#allocation2 + $0xa] sm:$0x1] %vm68, %v108
    %s110 = sld [smem:[#allocation5 + $0x182]]
    %s111 = scalar_lea.vmem %s1, %s110
    %v112 = vld [vmem:[%s111] sm:$0x1]
    %113 = vst.msk [vmem:[#allocation2 + $0xb] sm:$0x1] %vm68, %v112
    %s114 = sld [smem:[#allocation5 + $0x3]]
    %s115 = scalar_lea.vmem %s1, %s114
    %v116 = vld [vmem:[%s115] sm:$0x1]
    %117 = vst.msk [vmem:[#allocation2 + $0xc] sm:$0x1] %vm68, %v116
    %s118 = sld [smem:[#allocation5 + $0x83]]
    %s119 = scalar_lea.vmem %s1, %s118
    %v120 = vld [vmem:[%s119] sm:$0x1]
    %121 = vst.msk [vmem:[#allocation2 + $0xd] sm:$0x1] %vm68, %v120
    %s122 = sld [smem:[#allocation5 + $0x103]]
    %s123 = scalar_lea.vmem %s1, %s122
    %v124 = vld [vmem:[%s123] sm:$0x1]
    %125 = vst.msk [vmem:[#allocation2 + $0xe] sm:$0x1] %vm68, %v124
    %s126 = sld [smem:[#allocation5 + $0x183]]
    %s127 = scalar_lea.vmem %s1, %s126
    %v128 = vld [vmem:[%s127] sm:$0x1]
    %129 = vst.msk [vmem:[#allocation2 + $0xf] sm:$0x1] %vm68, %v128
    %s130 = sld [smem:[#allocation5 + $0x4]]
    %s131 = scalar_lea.vmem %s1, %s130
    %v132 = vld [vmem:[%s131] sm:$0x1]
    %133 = vst.msk [vmem:[#allocation2 + $0x10] sm:$0x1] %vm68, %v132
    %s134 = sld [smem:[#allocation5 + $0x84]]
    %s135 = scalar_lea.vmem %s1, %s134
    %v136 = vld [vmem:[%s135] sm:$0x1]
    %137 = vst.msk [vmem:[#allocation2 + $0x11] sm:$0x1] %vm68, %v136
    %s138 = sld [smem:[#allocation5 + $0x104]]
    %s139 = scalar_lea.vmem %s1, %s138
    %v140 = vld [vmem:[%s139] sm:$0x1]
    %141 = vst.msk [vmem:[#allocation2 + $0x12] sm:$0x1] %vm68, %v140
    %s142 = sld [smem:[#allocation5 + $0x184]]
    %s143 = scalar_lea.vmem %s1, %s142
    %v144 = vld [vmem:[%s143] sm:$0x1]
    %145 = vst.msk [vmem:[#allocation2 + $0x13] sm:$0x1] %vm68, %v144
    %s146 = sld [smem:[#allocation5 + $0x5]]
    %s147 = scalar_lea.vmem %s1, %s146
    %v148 = vld [vmem:[%s147] sm:$0x1]
    %149 = vst.msk [vmem:[#allocation2 + $0x14] sm:$0x1] %vm68, %v148
    %s150 = sld [smem:[#allocation5 + $0x85]]
    %s151 = scalar_lea.vmem %s1, %s150
    %v152 = vld [vmem:[%s151] sm:$0x1]
    %153 = vst.msk [vmem:[#allocation2 + $0x15] sm:$0x1] %vm68, %v152
    %s154 = sld [smem:[#allocation5 + $0x105]]
    %s155 = scalar_lea.vmem %s1, %s154
    %v156 = vld [vmem:[%s155] sm:$0x1]
    %157 = vst.msk [vmem:[#allocation2 + $0x16] sm:$0x1] %vm68, %v156
    %s158 = sld [smem:[#allocation5 + $0x185]]
    %s159 = scalar_lea.vmem %s1, %s158
    %v160 = vld [vmem:[%s159] sm:$0x1]
    %161 = vst.msk [vmem:[#allocation2 + $0x17] sm:$0x1] %vm68, %v160
    %s162 = sld [smem:[#allocation5 + $0x6]]
    %s163 = scalar_lea.vmem %s1, %s162
    %v164 = vld [vmem:[%s163] sm:$0x1]
    %165 = vst.msk [vmem:[#allocation2 + $0x18] sm:$0x1] %vm68, %v164
    %s166 = sld [smem:[#allocation5 + $0x86]]
    %s167 = scalar_lea.vmem %s1, %s166
    %v168 = vld [vmem:[%s167] sm:$0x1]
    %169 = vst.msk [vmem:[#allocation2 + $0x19] sm:$0x1] %vm68, %v168
    %s170 = sld [smem:[#allocation5 + $0x106]]
    %s171 = scalar_lea.vmem %s1, %s170
    %v172 = vld [vmem:[%s171] sm:$0x1]
    %173 = vst.msk [vmem:[#allocation2 + $0x1a] sm:$0x1] %vm68, %v172
    %s174 = sld [smem:[#allocation5 + $0x186]]
    %s175 = scalar_lea.vmem %s1, %s174
    %v176 = vld [vmem:[%s175] sm:$0x1]
    %177 = vst.msk [vmem:[#allocation2 + $0x1b] sm:$0x1] %vm68, %v176
    %s178 = sld [smem:[#allocation5 + $0x7]]
    %s179 = scalar_lea.vmem %s1, %s178
    %v180 = vld [vmem:[%s179] sm:$0x1]
    %181 = vst.msk [vmem:[#allocation2 + $0x1c] sm:$0x1] %vm68, %v180
    %s182 = sld [smem:[#allocation5 + $0x87]]
    %s183 = scalar_lea.vmem %s1, %s182
    %v184 = vld [vmem:[%s183] sm:$0x1]
    %185 = vst.msk [vmem:[#allocation2 + $0x1d] sm:$0x1] %vm68, %v184
    %s186 = sld [smem:[#allocation5 + $0x107]]
    %s187 = scalar_lea.vmem %s1, %s186
    %v188 = vld [vmem:[%s187] sm:$0x1]
    %189 = vst.msk [vmem:[#allocation2 + $0x1e] sm:$0x1] %vm68, %v188
    %s190 = sld [smem:[#allocation5 + $0x187]]
    %s191 = scalar_lea.vmem %s1, %s190
    %v192 = vld [vmem:[%s191] sm:$0x1]
    %193 = vst.msk [vmem:[#allocation2 + $0x1f] sm:$0x1] %vm68, %v192
    %v194 = vld [vmem:[#allocation9] sm:$0xff]
    %v195 = vld [vmem:[#allocation9 + $0x8] sm:$0xff]
    %v196 = vld [vmem:[#allocation9 + $0x10] sm:$0xff]
    %v197 = vld [vmem:[#allocation9 + $0x18] sm:$0xff]
    %v198 = vld [vmem:[#allocation10] sm:$0xff]
    %v199 = vld [vmem:[#allocation10 + $0x8] sm:$0xff]
    %v200 = vld [vmem:[#allocation10 + $0x10] sm:$0xff]
    %v201 = vld [vmem:[#allocation10 + $0x18] sm:$0xff]
    %v202 = vld [vmem:[#allocation10 + $0x20] sm:$0xff]
    %v203 = vld [vmem:[#allocation10 + $0x28] sm:$0xff]
    %v204 = vld [vmem:[#allocation10 + $0x30] sm:$0xff]
    %v205 = vld [vmem:[#allocation10 + $0x38] sm:$0xff]
    %v206 = vld [vmem:[#allocation10 + $0x40] sm:$0xff]
    %v207 = vld [vmem:[#allocation10 + $0x48] sm:$0xff]
    %v208 = vld [vmem:[#allocation10 + $0x50] sm:$0xff]
    %v209 = vld [vmem:[#allocation10 + $0x58] sm:$0xff]
    %v210 = vld [vmem:[#allocation10 + $0x60] sm:$0xff]
    %v211 = vld [vmem:[#allocation10 + $0x68] sm:$0xff]
    %v212 = vld [vmem:[#allocation10 + $0x70] sm:$0xff]
    %v213 = vld [vmem:[#allocation10 + $0x78] sm:$0xff]
    %v214 = vld [vmem:[%s4] sm:$0x1]
    %v215 = vld [vmem:[%s4 + $0x1] sm:$0x1]
    %v216 = vld [vmem:[#allocation2] sm:$0xff]
    %v217 = vld [vmem:[#allocation2 + $0x8] sm:$0xff]
    %v218 = vld [vmem:[#allocation2 + $0x10] sm:$0xff]
    %v219 = vld [vmem:[#allocation2 + $0x18] sm:$0xff]
    %v220 = vlaneseq
    %v221 = vshrl.u32 %v220, 7
    %v222 = vsub.s32 0, %v221
    %v223 = vrot.slane %v214, %v222
    %vm224 = vcmask 261120
    %v226 = vsel %vm224, %v216, 0
    %v229 = vsel %vm224, %v217, 0
    %v232 = vsel %vm224, %v218, 0
    %v235 = vsel %vm224, %v219, 0
    %237 = vmatprep.subr.mxu0 0.0
    %238 = vmatpush1.msra.mxu0 %v194
    %239 = vmatprep.subr.mxu0 0.0
    %240 = vmatpush1.msra.mxu0 %v195
    %241 = vmatprep.subr.mxu0 0.0
    %242 = vmatpush1.msra.mxu0 %v196
    %243 = vmatprep.subr.mxu0 0.0
    %244 = vmatpush1.msra.mxu0 %v197
    %245 = vmatprep.subr.mxu0 0.0
    %246 = vmatpush1.msra.mxu0 0.0
    %247 = vmatprep.subr.mxu0 0.0
    %248 = vmatpush1.msra.mxu0 0.0
    %249 = vmatprep.subr.mxu0 0.0
    %250 = vmatpush1.msra.mxu0 0.0
    %251 = vmatprep.subr.mxu0 0.0
    %252 = vmatpush1.msra.mxu0 0.0
    %253 = vmatprep.subr.mxu0 0.0
    %254 = vmatpush1.msra.mxu0 0.0
    %255 = vmatprep.subr.mxu0 0.0
    %256 = vmatpush1.msra.mxu0 0.0
    %257 = vmatprep.subr.mxu0 0.0
    %258 = vmatpush1.msra.mxu0 0.0
    %259 = vmatprep.subr.mxu0 0.0
    %260 = vmatpush1.msra.mxu0 0.0
    %261 = vmatprep.subr.mxu0 0.0
    %262 = vmatpush1.msra.mxu0 0.0
    %263 = vmatprep.subr.mxu0 0.0
    %264 = vmatpush1.msra.mxu0 0.0
    %265 = vmatprep.subr.mxu0 0.0
    %266 = vmatpush1.msra.mxu0 0.0
    %267 = vmatprep.subr.mxu0 0.0
    %268 = vmatpush1.msra.mxu0 0.0
    %269 = vmatprep.subr.mxu0 0.0
    %270 = vmatpush1.msra.mxu0 0.0
    %271 = vmatprep.subr.mxu0 0.0
    %272 = vmatpush1.msra.mxu0 0.0
    %273 = vmatprep.subr.mxu0 0.0
    %274 = vmatpush1.msra.mxu0 0.0
    %275 = vmatprep.subr.mxu0 0.0
    %276 = vmatpush1.msra.mxu0 0.0
    %277 = vmatprep.subr.mxu0 0.0
    %278 = vmatpush1.msra.mxu0 0.0
    %279 = vmatprep.subr.mxu0 0.0
    %280 = vmatpush1.msra.mxu0 0.0
    %281 = vmatprep.subr.mxu0 0.0
    %282 = vmatpush1.msra.mxu0 0.0
    %283 = vmatprep.subr.mxu0 0.0
    %284 = vmatpush1.msra.mxu0 0.0
    %285 = vmatprep.subr.mxu0 0.0
    %286 = vmatpush1.msra.mxu0 0.0
    %287 = vmatprep.subr.mxu0 0.0
    %288 = vmatpush1.msra.mxu0 0.0
    %289 = vmatprep.subr.mxu0 0.0
    %290 = vmatpush1.msra.mxu0 0.0
    %291 = vmatprep.subr.mxu0 0.0
    %292 = vmatpush1.msra.mxu0 0.0
    %293 = vmatprep.subr.mxu0 0.0
    %294 = vmatpush1.msra.mxu0 0.0
    %295 = vmatprep.subr.mxu0 0.0
    %296 = vmatpush1.msra.mxu0 0.0
    %297 = vmatprep.subr.mxu0 0.0
    %298 = vmatpush1.msra.mxu0 0.0
    %299 = vmatprep.subr.mxu0 0.0
    %300 = vmatpush1.msra.mxu0 0.0
    %301 = vmatprep.mubr.f32.mxu0 0.0
    %302 = vmatmul.mubr.f32.gmra.mrb[0].mxu0 %v226
    %v303 = vpop.f32.mrb[0].mxu0
    %v304 = vadd.f32 %v223, %v303
    %v305 = vpop.f32.mrb[0].mxu0
    %306 = vmatprep.mubr.f32.mxu0 0.0
    %307 = vmatmul.mubr.f32.gmra.mrb[0].mxu0 %v229
    %v308 = vpop.f32.mrb[0].mxu0
    %v309 = vadd.f32 %v223, %v308
    %v310 = vpop.f32.mrb[0].mxu0
    %311 = vmatprep.mubr.f32.mxu0 0.0
    %312 = vmatmul.mubr.f32.gmra.mrb[0].mxu0 %v232
    %v313 = vpop.f32.mrb[0].mxu0
    %v314 = vadd.f32 %v223, %v313
    %v315 = vpop.f32.mrb[0].mxu0
    %316 = vmatprep.mubr.f32.mxu0 0.0
    %317 = vmatmul.mubr.f32.gmra.mrb[0].mxu0 %v235
    %v318 = vpop.f32.mrb[0].mxu0
    %v319 = vadd.f32 %v223, %v318
    %v320 = vpop.f32.mrb[0].mxu0
    %321 = vdwg.mxu0
    %322 = vst [vmem:[#allocation3] sm:$0xff] %v304
    %323 = vst [vmem:[#allocation3 + $0x8] sm:$0xff] %v309
    %324 = vst [vmem:[#allocation3 + $0x10] sm:$0xff] %v314
    %325 = vst [vmem:[#allocation3 + $0x18] sm:$0xff] %v319
    %v326 = vld [vmem:[#allocation3] sm:$0xf]
    %v327 = vadd.f32 %v326, 0.0
    %v328 = vxor.u32 %v327, 2147483648
    %v329 = vmul.f32 %v328, 1.442695
    %v330 = vpow.pop %v329
    %v331 = vadd.f32 %v330, 1.0
    %v332 = vrcp.pop %v331
    %v333 = vmul.f32 1.0, %v332
    %v334 = vtanh.pop %v327
    %v335 = vmul.f32 %v333, 0.0
    %337 = vrot.lane.b32.xlu0 %v334, 32
    %v338 = vpop.permute.xlu0 %337
    %v340 = vmul.f32 %v333, %v338
    %342 = vrot.lane.b32.xlu0 %v340, 32
    %v343 = vpop.permute.xlu0 %342
    %v345 = vadd.f32 %v335, %v343
    %v346 = vtanh.pop %v345
    %348 = vrot.lane.b32.xlu0 %v346, 32
    %v349 = vpop.permute.xlu0 %348
    %v351 = vmul.f32 %v333, %v349
    %353 = vrot.lane.b32.xlu0 %v351, 64
    %v354 = vpop.permute.xlu0 %353
    %v356 = vsel %vm224, %v354, 0.0
    %vm357 = vcmask 523264
    %v359 = vsel %vm357, %v356, 0
    %361 = vmatprep.subr.mxu0 %v199
    %362 = vmatpush1.msra.mxu0 %v198
    %363 = vmatprep.subr.mxu0 %v201
    %364 = vmatpush1.msra.mxu0 %v200
    %365 = vmatprep.subr.mxu0 %v203
    %366 = vmatpush1.msra.mxu0 %v202
    %367 = vmatprep.subr.mxu0 %v205
    %368 = vmatpush1.msra.mxu0 %v204
    %369 = vmatprep.subr.mxu0 %v207
    %370 = vmatpush1.msra.mxu0 %v206
    %371 = vmatprep.subr.mxu0 %v209
    %372 = vmatpush1.msra.mxu0 %v208
    %373 = vmatprep.subr.mxu0 %v211
    %374 = vmatpush1.msra.mxu0 %v210
    %375 = vmatprep.subr.mxu0 %v213
    %376 = vmatpush1.msra.mxu0 %v212
    %377 = vmatprep.subr.mxu0 0.0
    %378 = vmatpush1.msra.mxu0 0.0
    %379 = vmatprep.subr.mxu0 0.0
    %380 = vmatpush1.msra.mxu0 0.0
    %381 = vmatprep.subr.mxu0 0.0
    %382 = vmatpush1.msra.mxu0 0.0
    %383 = vmatprep.subr.mxu0 0.0
    %384 = vmatpush1.msra.mxu0 0.0
    %385 = vmatprep.subr.mxu0 0.0
    %386 = vmatpush1.msra.mxu0 0.0
    %387 = vmatprep.subr.mxu0 0.0
    %388 = vmatpush1.msra.mxu0 0.0
    %389 = vmatprep.subr.mxu0 0.0
    %390 = vmatpush1.msra.mxu0 0.0
    %391 = vmatprep.subr.mxu0 0.0
    %392 = vmatpush1.msra.mxu0 0.0
    %393 = vmatprep.subr.mxu0 0.0
    %394 = vmatpush1.msra.mxu0 0.0
    %395 = vmatprep.subr.mxu0 0.0
    %396 = vmatpush1.msra.mxu0 0.0
    %397 = vmatprep.subr.mxu0 0.0
    %398 = vmatpush1.msra.mxu0 0.0
    %399 = vmatprep.subr.mxu0 0.0
    %400 = vmatpush1.msra.mxu0 0.0
    %401 = vmatprep.subr.mxu0 0.0
    %402 = vmatpush1.msra.mxu0 0.0
    %403 = vmatprep.subr.mxu0 0.0
    %404 = vmatpush1.msra.mxu0 0.0
    %405 = vmatprep.subr.mxu0 0.0
    %406 = vmatpush1.msra.mxu0 0.0
    %407 = vmatprep.subr.mxu0 0.0
    %408 = vmatpush1.msra.mxu0 0.0
    %409 = vmatprep.subr.mxu0 0.0
    %410 = vmatpush1.msra.mxu0 0.0
    %411 = vmatprep.subr.mxu0 0.0
    %412 = vmatpush1.msra.mxu0 0.0
    %413 = vmatprep.subr.mxu0 0.0
    %414 = vmatpush1.msra.mxu0 0.0
    %415 = vmatprep.subr.mxu0 0.0
    %416 = vmatpush1.msra.mxu0 0.0
    %417 = vmatprep.subr.mxu0 0.0
    %418 = vmatpush1.msra.mxu0 0.0
    %419 = vmatprep.subr.mxu0 0.0
    %420 = vmatpush1.msra.mxu0 0.0
    %421 = vmatprep.subr.mxu0 0.0
    %422 = vmatpush1.msra.mxu0 0.0
    %423 = vmatprep.subr.mxu0 0.0
    %424 = vmatpush1.msra.mxu0 0.0
    %425 = vmatprep.mubr.f32.mxu0 0.0
    %426 = vmatmul.mubr.f32.gmra.mrb[0].mxu0 %v359
    %v427 = vpop.f32.mrb[0].mxu0
    %v428 = vadd.f32 0.0, %v427
    %v429 = vpop.f32.mrb[0].mxu0
    %v430 = vadd.f32 0.0, %v429
    %431 = vdwg.mxu0
    %v432 = vlaneseq
    %v433 = vshrl.u32 %v432, 7
    %v434 = vsub.s32 0, %v433
    %v435 = vrot.slane %v215, %v434
    %v436 = vadd.f32 %v430, %v435
    %v437 = vxor.u32 %v436, 2147483648
    %v438 = vmul.f32 %v437, 1.442695
    %v439 = vpow.pop %v438
    %v440 = vadd.f32 %v439, 1.0
    %v441 = vrcp.pop %v440
    %v442 = vmul.f32 1.0, %v441
    %v443 = vtanh.pop %v436
    %v444 = vmul.f32 %v442, 0.0
    %446 = vrot.lane.b32.xlu0 %v443, 32
    %v447 = vpop.permute.xlu0 %446
    %v449 = vmul.f32 %v442, %v447
    %451 = vrot.lane.b32.xlu0 %v449, 32
    %v452 = vpop.permute.xlu0 %451
    %v454 = vadd.f32 %v444, %v452
    %v455 = vtanh.pop %v454
    %457 = vrot.lane.b32.xlu0 %v455, 32
    %v458 = vpop.permute.xlu0 %457
    %v460 = vmul.f32 %v442, %v458
    %v461 = vld [vmem:[#allocation3 + $0x4] sm:$0xf]
    %v462 = vadd.f32 %v461, %v428
    %v463 = vxor.u32 %v462, 2147483648
    %v464 = vmul.f32 %v463, 1.442695
    %v465 = vpow.pop %v464
    %v466 = vadd.f32 %v465, 1.0
    %v467 = vrcp.pop %v466
    %v468 = vmul.f32 1.0, %v467
    %v469 = vtanh.pop %v462
    %v470 = vmul.f32 %v468, %v345
    %472 = vrot.lane.b32.xlu0 %v469, 32
    %v473 = vpop.permute.xlu0 %472
    %v475 = vmul.f32 %v468, %v473
    %477 = vrot.lane.b32.xlu0 %v475, 32
    %v478 = vpop.permute.xlu0 %477
    %v480 = vadd.f32 %v470, %v478
    %v481 = vtanh.pop %v480
    %483 = vrot.lane.b32.xlu0 %v481, 32
    %v484 = vpop.permute.xlu0 %483
    %v486 = vmul.f32 %v468, %v484
    %488 = vrot.lane.b32.xlu0 %v486, 64
    %v489 = vpop.permute.xlu0 %488
    %492 = vrot.lane.b32.xlu0 %v460, 96
    %v493 = vpop.permute.xlu0 %492
    %v495 = vsel %vm224, %v489, %v493
    %v497 = vsel %vm357, %v495, 0
    %499 = vmatprep.subr.mxu0 %v199
    %500 = vmatpush1.msra.mxu0 %v198
    %501 = vmatprep.subr.mxu0 %v201
    %502 = vmatpush1.msra.mxu0 %v200
    %503 = vmatprep.subr.mxu0 %v203
    %504 = vmatpush1.msra.mxu0 %v202
    %505 = vmatprep.subr.mxu0 %v205
    %506 = vmatpush1.msra.mxu0 %v204
    %507 = vmatprep.subr.mxu0 %v207
    %508 = vmatpush1.msra.mxu0 %v206
    %509 = vmatprep.subr.mxu0 %v209
    %510 = vmatpush1.msra.mxu0 %v208
    %511 = vmatprep.subr.mxu0 %v211
    %512 = vmatpush1.msra.mxu0 %v210
    %513 = vmatprep.subr.mxu0 %v213
    %514 = vmatpush1.msra.mxu0 %v212
    %515 = vmatprep.subr.mxu0 0.0
    %516 = vmatpush1.msra.mxu0 0.0
    %517 = vmatprep.subr.mxu0 0.0
    %518 = vmatpush1.msra.mxu0 0.0
    %519 = vmatprep.subr.mxu0 0.0
    %520 = vmatpush1.msra.mxu0 0.0
    %521 = vmatprep.subr.mxu0 0.0
    %522 = vmatpush1.msra.mxu0 0.0
    %523 = vmatprep.subr.mxu0 0.0
    %524 = vmatpush1.msra.mxu0 0.0
    %525 = vmatprep.subr.mxu0 0.0
    %526 = vmatpush1.msra.mxu0 0.0
    %527 = vmatprep.subr.mxu0 0.0
    %528 = vmatpush1.msra.mxu0 0.0
    %529 = vmatprep.subr.mxu0 0.0
    %530 = vmatpush1.msra.mxu0 0.0
    %531 = vmatprep.subr.mxu0 0.0
    %532 = vmatpush1.msra.mxu0 0.0
    %533 = vmatprep.subr.mxu0 0.0
    %534 = vmatpush1.msra.mxu0 0.0
    %535 = vmatprep.subr.mxu0 0.0
    %536 = vmatpush1.msra.mxu0 0.0
    %537 = vmatprep.subr.mxu0 0.0
    %538 = vmatpush1.msra.mxu0 0.0
    %539 = vmatprep.subr.mxu0 0.0
    %540 = vmatpush1.msra.mxu0 0.0
    %541 = vmatprep.subr.mxu0 0.0
    %542 = vmatpush1.msra.mxu0 0.0
    %543 = vmatprep.subr.mxu0 0.0
    %544 = vmatpush1.msra.mxu0 0.0
    %545 = vmatprep.subr.mxu0 0.0
    %546 = vmatpush1.msra.mxu0 0.0
    %547 = vmatprep.subr.mxu0 0.0
    %548 = vmatpush1.msra.mxu0 0.0
    %549 = vmatprep.subr.mxu0 0.0
    %550 = vmatpush1.msra.mxu0 0.0
    %551 = vmatprep.subr.mxu0 0.0
    %552 = vmatpush1.msra.mxu0 0.0
    %553 = vmatprep.subr.mxu0 0.0
    %554 = vmatpush1.msra.mxu0 0.0
    %555 = vmatprep.subr.mxu0 0.0
    %556 = vmatpush1.msra.mxu0 0.0
    %557 = vmatprep.subr.mxu0 0.0
    %558 = vmatpush1.msra.mxu0 0.0
    %559 = vmatprep.subr.mxu0 0.0
    %560 = vmatpush1.msra.mxu0 0.0
    %561 = vmatprep.subr.mxu0 0.0
    %562 = vmatpush1.msra.mxu0 0.0
    %563 = vmatprep.mubr.f32.mxu0 0.0
    %564 = vmatmul.mubr.f32.gmra.mrb[0].mxu0 %v497
    %v565 = vpop.f32.mrb[0].mxu0
    %v566 = vadd.f32 0.0, %v565
    %v567 = vpop.f32.mrb[0].mxu0
    %v568 = vadd.f32 0.0, %v567
    %569 = vdwg.mxu0
    %v570 = vadd.f32 %v568, %v435
    %v571 = vxor.u32 %v570, 2147483648
    %v572 = vmul.f32 %v571, 1.442695
    %v573 = vpow.pop %v572
    %v574 = vadd.f32 %v573, 1.0
    %v575 = vrcp.pop %v574
    %v576 = vmul.f32 1.0, %v575
    %v577 = vtanh.pop %v570
    %v578 = vmul.f32 %v576, %v454
    %580 = vrot.lane.b32.xlu0 %v577, 32
    %v581 = vpop.permute.xlu0 %580
    %v583 = vmul.f32 %v576, %v581
    %585 = vrot.lane.b32.xlu0 %v583, 32
    %v586 = vpop.permute.xlu0 %585
    %v588 = vadd.f32 %v578, %v586
    %v589 = vtanh.pop %v588
    %591 = vrot.lane.b32.xlu0 %v589, 32
    %v592 = vpop.permute.xlu0 %591
    %v594 = vmul.f32 %v576, %v592
    %v595 = vld [vmem:[#allocation3 + $0x8] sm:$0xf]
    %v596 = vadd.f32 %v595, %v566
    %v597 = vxor.u32 %v596, 2147483648
    %v598 = vmul.f32 %v597, 1.442695
    %v599 = vpow.pop %v598
    %v600 = vadd.f32 %v599, 1.0
    %v601 = vrcp.pop %v600
    %v602 = vmul.f32 1.0, %v601
    %v603 = vtanh.pop %v596
    %v604 = vmul.f32 %v602, %v480
    %606 = vrot.lane.b32.xlu0 %v603, 32
    %v607 = vpop.permute.xlu0 %606
    %v609 = vmul.f32 %v602, %v607
    %611 = vrot.lane.b32.xlu0 %v609, 32
    %v612 = vpop.permute.xlu0 %611
    %v614 = vadd.f32 %v604, %v612
    %v615 = vtanh.pop %v614
    %617 = vrot.lane.b32.xlu0 %v615, 32
    %v618 = vpop.permute.xlu0 %617
    %v620 = vmul.f32 %v602, %v618
    %622 = vrot.lane.b32.xlu0 %v620, 64
    %v623 = vpop.permute.xlu0 %622
    %626 = vrot.lane.b32.xlu0 %v594, 96
    %v627 = vpop.permute.xlu0 %626
    %v629 = vsel %vm224, %v623, %v627
    %v631 = vsel %vm357, %v629, 0
    %633 = vmatprep.subr.mxu0 %v199
    %634 = vmatpush1.msra.mxu0 %v198
    %635 = vmatprep.subr.mxu0 %v201
    %636 = vmatpush1.msra.mxu0 %v200
    %637 = vmatprep.subr.mxu0 %v203
    %638 = vmatpush1.msra.mxu0 %v202
    %639 = vmatprep.subr.mxu0 %v205
    %640 = vmatpush1.msra.mxu0 %v204
    %641 = vmatprep.subr.mxu0 %v207
    %642 = vmatpush1.msra.mxu0 %v206
    %643 = vmatprep.subr.mxu0 %v209
    %644 = vmatpush1.msra.mxu0 %v208
    %645 = vmatprep.subr.mxu0 %v211
    %646 = vmatpush1.msra.mxu0 %v210
    %647 = vmatprep.subr.mxu0 %v213
    %648 = vmatpush1.msra.mxu0 %v212
    %649 = vmatprep.subr.mxu0 0.0
    %650 = vmatpush1.msra.mxu0 0.0
    %651 = vmatprep.subr.mxu0 0.0
    %652 = vmatpush1.msra.mxu0 0.0
    %653 = vmatprep.subr.mxu0 0.0
    %654 = vmatpush1.msra.mxu0 0.0
    %655 = vmatprep.subr.mxu0 0.0
    %656 = vmatpush1.msra.mxu0 0.0
    %657 = vmatprep.subr.mxu0 0.0
    %658 = vmatpush1.msra.mxu0 0.0
    %659 = vmatprep.subr.mxu0 0.0
    %660 = vmatpush1.msra.mxu0 0.0
    %661 = vmatprep.subr.mxu0 0.0
    %662 = vmatpush1.msra.mxu0 0.0
    %663 = vmatprep.subr.mxu0 0.0
    %664 = vmatpush1.msra.mxu0 0.0
    %665 = vmatprep.subr.mxu0 0.0
    %666 = vmatpush1.msra.mxu0 0.0
    %667 = vmatprep.subr.mxu0 0.0
    %668 = vmatpush1.msra.mxu0 0.0
    %669 = vmatprep.subr.mxu0 0.0
    %670 = vmatpush1.msra.mxu0 0.0
    %671 = vmatprep.subr.mxu0 0.0
    %672 = vmatpush1.msra.mxu0 0.0
    %673 = vmatprep.subr.mxu0 0.0
    %674 = vmatpush1.msra.mxu0 0.0
    %675 = vmatprep.subr.mxu0 0.0
    %676 = vmatpush1.msra.mxu0 0.0
    %677 = vmatprep.subr.mxu0 0.0
    %678 = vmatpush1.msra.mxu0 0.0
    %679 = vmatprep.subr.mxu0 0.0
    %680 = vmatpush1.msra.mxu0 0.0
    %681 = vmatprep.subr.mxu0 0.0
    %682 = vmatpush1.msra.mxu0 0.0
    %683 = vmatprep.subr.mxu0 0.0
    %684 = vmatpush1.msra.mxu0 0.0
    %685 = vmatprep.subr.mxu0 0.0
    %686 = vmatpush1.msra.mxu0 0.0
    %687 = vmatprep.subr.mxu0 0.0
    %688 = vmatpush1.msra.mxu0 0.0
    %689 = vmatprep.subr.mxu0 0.0
    %690 = vmatpush1.msra.mxu0 0.0
    %691 = vmatprep.subr.mxu0 0.0
    %692 = vmatpush1.msra.mxu0 0.0
    %693 = vmatprep.subr.mxu0 0.0
    %694 = vmatpush1.msra.mxu0 0.0
    %695 = vmatprep.subr.mxu0 0.0
    %696 = vmatpush1.msra.mxu0 0.0
    %697 = vmatprep.mubr.f32.mxu0 0.0
    %698 = vmatmul.mubr.f32.gmra.mrb[0].mxu0 %v631
    %v699 = vpop.f32.mrb[0].mxu0
    %v700 = vadd.f32 0.0, %v699
    %v701 = vpop.f32.mrb[0].mxu0
    %v702 = vadd.f32 0.0, %v701
    %703 = vdwg.mxu0
    %v704 = vadd.f32 %v702, %v435
    %v705 = vxor.u32 %v704, 2147483648
    %v706 = vmul.f32 %v705, 1.442695
    %v707 = vpow.pop %v706
    %v708 = vadd.f32 %v707, 1.0
    %v709 = vrcp.pop %v708
    %v710 = vmul.f32 1.0, %v709
    %v711 = vtanh.pop %v704
    %v712 = vmul.f32 %v710, %v588
    %714 = vrot.lane.b32.xlu0 %v711, 32
    %v715 = vpop.permute.xlu0 %714
    %v717 = vmul.f32 %v710, %v715
    %719 = vrot.lane.b32.xlu0 %v717, 32
    %v720 = vpop.permute.xlu0 %719
    %v722 = vadd.f32 %v712, %v720
    %v723 = vtanh.pop %v722
    %725 = vrot.lane.b32.xlu0 %v723, 32
    %v726 = vpop.permute.xlu0 %725
    %v728 = vmul.f32 %v710, %v726
    %v729 = vld [vmem:[#allocation3 + $0xc] sm:$0xf]
    %v730 = vadd.f32 %v729, %v700
    %v731 = vxor.u32 %v730, 2147483648
    %v732 = vmul.f32 %v731, 1.442695
    %v733 = vpow.pop %v732
    %v734 = vadd.f32 %v733, 1.0
    %v735 = vrcp.pop %v734
    %v736 = vmul.f32 1.0, %v735
    %v737 = vtanh.pop %v730
    %v738 = vmul.f32 %v736, %v614
    %740 = vrot.lane.b32.xlu0 %v737, 32
    %v741 = vpop.permute.xlu0 %740
    %v743 = vmul.f32 %v736, %v741
    %745 = vrot.lane.b32.xlu0 %v743, 32
    %v746 = vpop.permute.xlu0 %745
    %v748 = vadd.f32 %v738, %v746
    %v749 = vtanh.pop %v748
    %751 = vrot.lane.b32.xlu0 %v749, 32
    %v752 = vpop.permute.xlu0 %751
    %v754 = vmul.f32 %v736, %v752
    %756 = vrot.lane.b32.xlu0 %v754, 64
    %v757 = vpop.permute.xlu0 %756
    %760 = vrot.lane.b32.xlu0 %v728, 96
    %v761 = vpop.permute.xlu0 %760
    %v763 = vsel %vm224, %v757, %v761
    %v765 = vsel %vm357, %v763, 0
    %767 = vmatprep.subr.mxu0 %v199
    %768 = vmatpush1.msra.mxu0 %v198
    %769 = vmatprep.subr.mxu0 %v201
    %770 = vmatpush1.msra.mxu0 %v200
    %771 = vmatprep.subr.mxu0 %v203
    %772 = vmatpush1.msra.mxu0 %v202
    %773 = vmatprep.subr.mxu0 %v205
    %774 = vmatpush1.msra.mxu0 %v204
    %775 = vmatprep.subr.mxu0 %v207
    %776 = vmatpush1.msra.mxu0 %v206
    %777 = vmatprep.subr.mxu0 %v209
    %778 = vmatpush1.msra.mxu0 %v208
    %779 = vmatprep.subr.mxu0 %v211
    %780 = vmatpush1.msra.mxu0 %v210
    %781 = vmatprep.subr.mxu0 %v213
    %782 = vmatpush1.msra.mxu0 %v212
    %783 = vmatprep.subr.mxu0 0.0
    %784 = vmatpush1.msra.mxu0 0.0
    %785 = vmatprep.subr.mxu0 0.0
    %786 = vmatpush1.msra.mxu0 0.0
    %787 = vmatprep.subr.mxu0 0.0
    %788 = vmatpush1.msra.mxu0 0.0
    %789 = vmatprep.subr.mxu0 0.0
    %790 = vmatpush1.msra.mxu0 0.0
    %791 = vmatprep.subr.mxu0 0.0
    %792 = vmatpush1.msra.mxu0 0.0
    %793 = vmatprep.subr.mxu0 0.0
    %794 = vmatpush1.msra.mxu0 0.0
    %795 = vmatprep.subr.mxu0 0.0
    %796 = vmatpush1.msra.mxu0 0.0
    %797 = vmatprep.subr.mxu0 0.0
    %798 = vmatpush1.msra.mxu0 0.0
    %799 = vmatprep.subr.mxu0 0.0
    %800 = vmatpush1.msra.mxu0 0.0
    %801 = vmatprep.subr.mxu0 0.0
    %802 = vmatpush1.msra.mxu0 0.0
    %803 = vmatprep.subr.mxu0 0.0
    %804 = vmatpush1.msra.mxu0 0.0
    %805 = vmatprep.subr.mxu0 0.0
    %806 = vmatpush1.msra.mxu0 0.0
    %807 = vmatprep.subr.mxu0 0.0
    %808 = vmatpush1.msra.mxu0 0.0
    %809 = vmatprep.subr.mxu0 0.0
    %810 = vmatpush1.msra.mxu0 0.0
    %811 = vmatprep.subr.mxu0 0.0
    %812 = vmatpush1.msra.mxu0 0.0
    %813 = vmatprep.subr.mxu0 0.0
    %814 = vmatpush1.msra.mxu0 0.0
    %815 = vmatprep.subr.mxu0 0.0
    %816 = vmatpush1.msra.mxu0 0.0
    %817 = vmatprep.subr.mxu0 0.0
    %818 = vmatpush1.msra.mxu0 0.0
    %819 = vmatprep.subr.mxu0 0.0
    %820 = vmatpush1.msra.mxu0 0.0
    %821 = vmatprep.subr.mxu0 0.0
    %822 = vmatpush1.msra.mxu0 0.0
    %823 = vmatprep.subr.mxu0 0.0
    %824 = vmatpush1.msra.mxu0 0.0
    %825 = vmatprep.subr.mxu0 0.0
    %826 = vmatpush1.msra.mxu0 0.0
    %827 = vmatprep.subr.mxu0 0.0
    %828 = vmatpush1.msra.mxu0 0.0
    %829 = vmatprep.subr.mxu0 0.0
    %830 = vmatpush1.msra.mxu0 0.0
    %831 = vmatprep.mubr.f32.mxu0 0.0
    %832 = vmatmul.mubr.f32.gmra.mrb[0].mxu0 %v765
    %v833 = vpop.f32.mrb[0].mxu0
    %v834 = vadd.f32 0.0, %v833
    %v835 = vpop.f32.mrb[0].mxu0
    %v836 = vadd.f32 0.0, %v835
    %837 = vdwg.mxu0
    %v838 = vadd.f32 %v836, %v435
    %v839 = vxor.u32 %v838, 2147483648
    %v840 = vmul.f32 %v839, 1.442695
    %v841 = vpow.pop %v840
    %v842 = vadd.f32 %v841, 1.0
    %v843 = vrcp.pop %v842
    %v844 = vmul.f32 1.0, %v843
    %v845 = vtanh.pop %v838
    %v846 = vmul.f32 %v844, %v722
    %848 = vrot.lane.b32.xlu0 %v845, 32
    %v849 = vpop.permute.xlu0 %848
    %v851 = vmul.f32 %v844, %v849
    %853 = vrot.lane.b32.xlu0 %v851, 32
    %v854 = vpop.permute.xlu0 %853
    %v856 = vadd.f32 %v846, %v854
    %v857 = vtanh.pop %v856
    %859 = vrot.lane.b32.xlu0 %v857, 32
    %v860 = vpop.permute.xlu0 %859
    %v862 = vmul.f32 %v844, %v860
    %v863 = vld [vmem:[#allocation3 + $0x10] sm:$0xf]
    %v864 = vadd.f32 %v863, %v834
    %v865 = vxor.u32 %v864, 2147483648
    %v866 = vmul.f32 %v865, 1.442695
    %v867 = vpow.pop %v866
    %v868 = vadd.f32 %v867, 1.0
    %v869 = vrcp.pop %v868
    %v870 = vmul.f32 1.0, %v869
    %v871 = vtanh.pop %v864
    %v872 = vmul.f32 %v870, %v748
    %874 = vrot.lane.b32.xlu0 %v871, 32
    %v875 = vpop.permute.xlu0 %874
    %v877 = vmul.f32 %v870, %v875
    %879 = vrot.lane.b32.xlu0 %v877, 32
    %v880 = vpop.permute.xlu0 %879
    %v882 = vadd.f32 %v872, %v880
    %v883 = vtanh.pop %v882
    %885 = vrot.lane.b32.xlu0 %v883, 32
    %v886 = vpop.permute.xlu0 %885
    %v888 = vmul.f32 %v870, %v886
    %890 = vrot.lane.b32.xlu0 %v888, 64
    %v891 = vpop.permute.xlu0 %890
    %894 = vrot.lane.b32.xlu0 %v862, 96
    %v895 = vpop.permute.xlu0 %894
    %v897 = vsel %vm224, %v891, %v895
    %v899 = vsel %vm357, %v897, 0
    %901 = vmatprep.subr.mxu0 %v199
    %902 = vmatpush1.msra.mxu0 %v198
    %903 = vmatprep.subr.mxu0 %v201
    %904 = vmatpush1.msra.mxu0 %v200
    %905 = vmatprep.subr.mxu0 %v203
    %906 = vmatpush1.msra.mxu0 %v202
    %907 = vmatprep.subr.mxu0 %v205
    %908 = vmatpush1.msra.mxu0 %v204
    %909 = vmatprep.subr.mxu0 %v207
    %910 = vmatpush1.msra.mxu0 %v206
    %911 = vmatprep.subr.mxu0 %v209
    %912 = vmatpush1.msra.mxu0 %v208
    %913 = vmatprep.subr.mxu0 %v211
    %914 = vmatpush1.msra.mxu0 %v210
    %915 = vmatprep.subr.mxu0 %v213
    %916 = vmatpush1.msra.mxu0 %v212
    %917 = vmatprep.subr.mxu0 0.0
    %918 = vmatpush1.msra.mxu0 0.0
    %919 = vmatprep.subr.mxu0 0.0
    %920 = vmatpush1.msra.mxu0 0.0
    %921 = vmatprep.subr.mxu0 0.0
    %922 = vmatpush1.msra.mxu0 0.0
    %923 = vmatprep.subr.mxu0 0.0
    %924 = vmatpush1.msra.mxu0 0.0
    %925 = vmatprep.subr.mxu0 0.0
    %926 = vmatpush1.msra.mxu0 0.0
    %927 = vmatprep.subr.mxu0 0.0
    %928 = vmatpush1.msra.mxu0 0.0
    %929 = vmatprep.subr.mxu0 0.0
    %930 = vmatpush1.msra.mxu0 0.0
    %931 = vmatprep.subr.mxu0 0.0
    %932 = vmatpush1.msra.mxu0 0.0
    %933 = vmatprep.subr.mxu0 0.0
    %934 = vmatpush1.msra.mxu0 0.0
    %935 = vmatprep.subr.mxu0 0.0
    %936 = vmatpush1.msra.mxu0 0.0
    %937 = vmatprep.subr.mxu0 0.0
    %938 = vmatpush1.msra.mxu0 0.0
    %939 = vmatprep.subr.mxu0 0.0
    %940 = vmatpush1.msra.mxu0 0.0
    %941 = vmatprep.subr.mxu0 0.0
    %942 = vmatpush1.msra.mxu0 0.0
    %943 = vmatprep.subr.mxu0 0.0
    %944 = vmatpush1.msra.mxu0 0.0
    %945 = vmatprep.subr.mxu0 0.0
    %946 = vmatpush1.msra.mxu0 0.0
    %947 = vmatprep.subr.mxu0 0.0
    %948 = vmatpush1.msra.mxu0 0.0
    %949 = vmatprep.subr.mxu0 0.0
    %950 = vmatpush1.msra.mxu0 0.0
    %951 = vmatprep.subr.mxu0 0.0
    %952 = vmatpush1.msra.mxu0 0.0
    %953 = vmatprep.subr.mxu0 0.0
    %954 = vmatpush1.msra.mxu0 0.0
    %955 = vmatprep.subr.mxu0 0.0
    %956 = vmatpush1.msra.mxu0 0.0
    %957 = vmatprep.subr.mxu0 0.0
    %958 = vmatpush1.msra.mxu0 0.0
    %959 = vmatprep.subr.mxu0 0.0
    %960 = vmatpush1.msra.mxu0 0.0
    %961 = vmatprep.subr.mxu0 0.0
    %962 = vmatpush1.msra.mxu0 0.0
    %963 = vmatprep.subr.mxu0 0.0
    %964 = vmatpush1.msra.mxu0 0.0
    %965 = vmatprep.mubr.f32.mxu0 0.0
    %966 = vmatmul.mubr.f32.gmra.mrb[0].mxu0 %v899
    %v967 = vpop.f32.mrb[0].mxu0
    %v968 = vadd.f32 0.0, %v967
    %v969 = vpop.f32.mrb[0].mxu0
    %v970 = vadd.f32 0.0, %v969
    %971 = vdwg.mxu0
    %v972 = vadd.f32 %v970, %v435
    %v973 = vxor.u32 %v972, 2147483648
    %v974 = vmul.f32 %v973, 1.442695
    %v975 = vpow.pop %v974
    %v976 = vadd.f32 %v975, 1.0
    %v977 = vrcp.pop %v976
    %v978 = vmul.f32 1.0, %v977
    %v979 = vtanh.pop %v972
    %v980 = vmul.f32 %v978, %v856
    %982 = vrot.lane.b32.xlu0 %v979, 32
    %v983 = vpop.permute.xlu0 %982
    %v985 = vmul.f32 %v978, %v983
    %987 = vrot.lane.b32.xlu0 %v985, 32
    %v988 = vpop.permute.xlu0 %987
    %v990 = vadd.f32 %v980, %v988
    %v991 = vtanh.pop %v990
    %993 = vrot.lane.b32.xlu0 %v991, 32
    %v994 = vpop.permute.xlu0 %993
    %v996 = vmul.f32 %v978, %v994
    %v997 = vld [vmem:[#allocation3 + $0x14] sm:$0xf]
    %v998 = vadd.f32 %v997, %v968
    %v999 = vxor.u32 %v998, 2147483648
    %v1000 = vmul.f32 %v999, 1.442695
    %v1001 = vpow.pop %v1000
    %v1002 = vadd.f32 %v1001, 1.0
    %v1003 = vrcp.pop %v1002
    %v1004 = vmul.f32 1.0, %v1003
    %v1005 = vtanh.pop %v998
    %v1006 = vmul.f32 %v1004, %v882
    %1008 = vrot.lane.b32.xlu0 %v1005, 32
    %v1009 = vpop.permute.xlu0 %1008
    %v1011 = vmul.f32 %v1004, %v1009
    %1013 = vrot.lane.b32.xlu0 %v1011, 32
    %v1014 = vpop.permute.xlu0 %1013
    %v1016 = vadd.f32 %v1006, %v1014
    %v1017 = vtanh.pop %v1016
    %1019 = vrot.lane.b32.xlu0 %v1017, 32
    %v1020 = vpop.permute.xlu0 %1019
    %v1022 = vmul.f32 %v1004, %v1020
    %1024 = vrot.lane.b32.xlu0 %v1022, 64
    %v1025 = vpop.permute.xlu0 %1024
    %1028 = vrot.lane.b32.xlu0 %v996, 96
    %v1029 = vpop.permute.xlu0 %1028
    %v1031 = vsel %vm224, %v1025, %v1029
    %v1033 = vsel %vm357, %v1031, 0
    %1035 = vmatprep.subr.mxu0 %v199
    %1036 = vmatpush1.msra.mxu0 %v198
    %1037 = vmatprep.subr.mxu0 %v201
    %1038 = vmatpush1.msra.mxu0 %v200
    %1039 = vmatprep.subr.mxu0 %v203
    %1040 = vmatpush1.msra.mxu0 %v202
    %1041 = vmatprep.subr.mxu0 %v205
    %1042 = vmatpush1.msra.mxu0 %v204
    %1043 = vmatprep.subr.mxu0 %v207
    %1044 = vmatpush1.msra.mxu0 %v206
    %1045 = vmatprep.subr.mxu0 %v209
    %1046 = vmatpush1.msra.mxu0 %v208
    %1047 = vmatprep.subr.mxu0 %v211
    %1048 = vmatpush1.msra.mxu0 %v210
    %1049 = vmatprep.subr.mxu0 %v213
    %1050 = vmatpush1.msra.mxu0 %v212
    %1051 = vmatprep.subr.mxu0 0.0
    %1052 = vmatpush1.msra.mxu0 0.0
    %1053 = vmatprep.subr.mxu0 0.0
    %1054 = vmatpush1.msra.mxu0 0.0
    %1055 = vmatprep.subr.mxu0 0.0
    %1056 = vmatpush1.msra.mxu0 0.0
    %1057 = vmatprep.subr.mxu0 0.0
    %1058 = vmatpush1.msra.mxu0 0.0
    %1059 = vmatprep.subr.mxu0 0.0
    %1060 = vmatpush1.msra.mxu0 0.0
    %1061 = vmatprep.subr.mxu0 0.0
    %1062 = vmatpush1.msra.mxu0 0.0
    %1063 = vmatprep.subr.mxu0 0.0
    %1064 = vmatpush1.msra.mxu0 0.0
    %1065 = vmatprep.subr.mxu0 0.0
    %1066 = vmatpush1.msra.mxu0 0.0
    %1067 = vmatprep.subr.mxu0 0.0
    %1068 = vmatpush1.msra.mxu0 0.0
    %1069 = vmatprep.subr.mxu0 0.0
    %1070 = vmatpush1.msra.mxu0 0.0
    %1071 = vmatprep.subr.mxu0 0.0
    %1072 = vmatpush1.msra.mxu0 0.0
    %1073 = vmatprep.subr.mxu0 0.0
    %1074 = vmatpush1.msra.mxu0 0.0
    %1075 = vmatprep.subr.mxu0 0.0
    %1076 = vmatpush1.msra.mxu0 0.0
    %1077 = vmatprep.subr.mxu0 0.0
    %1078 = vmatpush1.msra.mxu0 0.0
    %1079 = vmatprep.subr.mxu0 0.0
    %1080 = vmatpush1.msra.mxu0 0.0
    %1081 = vmatprep.subr.mxu0 0.0
    %1082 = vmatpush1.msra.mxu0 0.0
    %1083 = vmatprep.subr.mxu0 0.0
    %1084 = vmatpush1.msra.mxu0 0.0
    %1085 = vmatprep.subr.mxu0 0.0
    %1086 = vmatpush1.msra.mxu0 0.0
    %1087 = vmatprep.subr.mxu0 0.0
    %1088 = vmatpush1.msra.mxu0 0.0
    %1089 = vmatprep.subr.mxu0 0.0
    %1090 = vmatpush1.msra.mxu0 0.0
    %1091 = vmatprep.subr.mxu0 0.0
    %1092 = vmatpush1.msra.mxu0 0.0
    %1093 = vmatprep.subr.mxu0 0.0
    %1094 = vmatpush1.msra.mxu0 0.0
    %1095 = vmatprep.subr.mxu0 0.0
    %1096 = vmatpush1.msra.mxu0 0.0
    %1097 = vmatprep.subr.mxu0 0.0
    %1098 = vmatpush1.msra.mxu0 0.0
    %1099 = vmatprep.mubr.f32.mxu0 0.0
    %1100 = vmatmul.mubr.f32.gmra.mrb[0].mxu0 %v1033
    %v1101 = vpop.f32.mrb[0].mxu0
    %v1102 = vadd.f32 0.0, %v1101
    %v1103 = vpop.f32.mrb[0].mxu0
    %v1104 = vadd.f32 0.0, %v1103
    %1105 = vdwg.mxu0
    %v1106 = vadd.f32 %v1104, %v435
    %v1107 = vxor.u32 %v1106, 2147483648
    %v1108 = vmul.f32 %v1107, 1.442695
    %v1109 = vpow.pop %v1108
    %v1110 = vadd.f32 %v1109, 1.0
    %v1111 = vrcp.pop %v1110
    %v1112 = vmul.f32 1.0, %v1111
    %v1113 = vtanh.pop %v1106
    %v1114 = vmul.f32 %v1112, %v990
    %1116 = vrot.lane.b32.xlu0 %v1113, 32
    %v1117 = vpop.permute.xlu0 %1116
    %v1119 = vmul.f32 %v1112, %v1117
    %1121 = vrot.lane.b32.xlu0 %v1119, 32
    %v1122 = vpop.permute.xlu0 %1121
    %v1124 = vadd.f32 %v1114, %v1122
    %v1125 = vtanh.pop %v1124
    %1127 = vrot.lane.b32.xlu0 %v1125, 32
    %v1128 = vpop.permute.xlu0 %1127
    %v1130 = vmul.f32 %v1112, %v1128
    %v1131 = vld [vmem:[#allocation3 + $0x18] sm:$0xf]
    %v1132 = vadd.f32 %v1131, %v1102
    %v1133 = vxor.u32 %v1132, 2147483648
    %v1134 = vmul.f32 %v1133, 1.442695
    %v1135 = vpow.pop %v1134
    %v1136 = vadd.f32 %v1135, 1.0
    %v1137 = vrcp.pop %v1136
    %v1138 = vmul.f32 1.0, %v1137
    %v1139 = vtanh.pop %v1132
    %v1140 = vmul.f32 %v1138, %v1016
    %1142 = vrot.lane.b32.xlu0 %v1139, 32
    %v1143 = vpop.permute.xlu0 %1142
    %v1145 = vmul.f32 %v1138, %v1143
    %1147 = vrot.lane.b32.xlu0 %v1145, 32
    %v1148 = vpop.permute.xlu0 %1147
    %v1150 = vadd.f32 %v1140, %v1148
    %v1151 = vtanh.pop %v1150
    %1153 = vrot.lane.b32.xlu0 %v1151, 32
    %v1154 = vpop.permute.xlu0 %1153
    %v1156 = vmul.f32 %v1138, %v1154
    %1158 = vrot.lane.b32.xlu0 %v1156, 64
    %v1159 = vpop.permute.xlu0 %1158
    %1162 = vrot.lane.b32.xlu0 %v1130, 96
    %v1163 = vpop.permute.xlu0 %1162
    %v1165 = vsel %vm224, %v1159, %v1163
    %v1167 = vsel %vm357, %v1165, 0
    %1169 = vmatprep.subr.mxu0 %v199
    %1170 = vmatpush1.msra.mxu0 %v198
    %1171 = vmatprep.subr.mxu0 %v201
    %1172 = vmatpush1.msra.mxu0 %v200
    %1173 = vmatprep.subr.mxu0 %v203
    %1174 = vmatpush1.msra.mxu0 %v202
    %1175 = vmatprep.subr.mxu0 %v205
    %1176 = vmatpush1.msra.mxu0 %v204
    %1177 = vmatprep.subr.mxu0 %v207
    %1178 = vmatpush1.msra.mxu0 %v206
    %1179 = vmatprep.subr.mxu0 %v209
    %1180 = vmatpush1.msra.mxu0 %v208
    %1181 = vmatprep.subr.mxu0 %v211
    %1182 = vmatpush1.msra.mxu0 %v210
    %1183 = vmatprep.subr.mxu0 %v213
    %1184 = vmatpush1.msra.mxu0 %v212
    %1185 = vmatprep.subr.mxu0 0.0
    %1186 = vmatpush1.msra.mxu0 0.0
    %1187 = vmatprep.subr.mxu0 0.0
    %1188 = vmatpush1.msra.mxu0 0.0
    %1189 = vmatprep.subr.mxu0 0.0
    %1190 = vmatpush1.msra.mxu0 0.0
    %1191 = vmatprep.subr.mxu0 0.0
    %1192 = vmatpush1.msra.mxu0 0.0
    %1193 = vmatprep.subr.mxu0 0.0
    %1194 = vmatpush1.msra.mxu0 0.0
    %1195 = vmatprep.subr.mxu0 0.0
    %1196 = vmatpush1.msra.mxu0 0.0
    %1197 = vmatprep.subr.mxu0 0.0
    %1198 = vmatpush1.msra.mxu0 0.0
    %1199 = vmatprep.subr.mxu0 0.0
    %1200 = vmatpush1.msra.mxu0 0.0
    %1201 = vmatprep.subr.mxu0 0.0
    %1202 = vmatpush1.msra.mxu0 0.0
    %1203 = vmatprep.subr.mxu0 0.0
    %1204 = vmatpush1.msra.mxu0 0.0
    %1205 = vmatprep.subr.mxu0 0.0
    %1206 = vmatpush1.msra.mxu0 0.0
    %1207 = vmatprep.subr.mxu0 0.0
    %1208 = vmatpush1.msra.mxu0 0.0
    %1209 = vmatprep.subr.mxu0 0.0
    %1210 = vmatpush1.msra.mxu0 0.0
    %1211 = vmatprep.subr.mxu0 0.0
    %1212 = vmatpush1.msra.mxu0 0.0
    %1213 = vmatprep.subr.mxu0 0.0
    %1214 = vmatpush1.msra.mxu0 0.0
    %1215 = vmatprep.subr.mxu0 0.0
    %1216 = vmatpush1.msra.mxu0 0.0
    %1217 = vmatprep.subr.mxu0 0.0
    %1218 = vmatpush1.msra.mxu0 0.0
    %1219 = vmatprep.subr.mxu0 0.0
    %1220 = vmatpush1.msra.mxu0 0.0
    %1221 = vmatprep.subr.mxu0 0.0
    %1222 = vmatpush1.msra.mxu0 0.0
    %1223 = vmatprep.subr.mxu0 0.0
    %1224 = vmatpush1.msra.mxu0 0.0
    %1225 = vmatprep.subr.mxu0 0.0
    %1226 = vmatpush1.msra.mxu0 0.0
    %1227 = vmatprep.subr.mxu0 0.0
    %1228 = vmatpush1.msra.mxu0 0.0
    %1229 = vmatprep.subr.mxu0 0.0
    %1230 = vmatpush1.msra.mxu0 0.0
    %1231 = vmatprep.subr.mxu0 0.0
    %1232 = vmatpush1.msra.mxu0 0.0
    %1233 = vmatprep.mubr.f32.mxu0 0.0
    %1234 = vmatmul.mubr.f32.gmra.mrb[0].mxu0 %v1167
    %v1235 = vpop.f32.mrb[0].mxu0
    %v1236 = vadd.f32 0.0, %v1235
    %v1237 = vpop.f32.mrb[0].mxu0
    %v1238 = vadd.f32 0.0, %v1237
    %1239 = vdwg.mxu0
    %v1240 = vadd.f32 %v1238, %v435
    %v1241 = vxor.u32 %v1240, 2147483648
    %v1242 = vmul.f32 %v1241, 1.442695
    %v1243 = vpow.pop %v1242
    %v1244 = vadd.f32 %v1243, 1.0
    %v1245 = vrcp.pop %v1244
    %v1246 = vmul.f32 1.0, %v1245
    %v1247 = vtanh.pop %v1240
    %v1248 = vmul.f32 %v1246, %v1124
    %1250 = vrot.lane.b32.xlu0 %v1247, 32
    %v1251 = vpop.permute.xlu0 %1250
    %v1253 = vmul.f32 %v1246, %v1251
    %1255 = vrot.lane.b32.xlu0 %v1253, 32
    %v1256 = vpop.permute.xlu0 %1255
    %v1258 = vadd.f32 %v1248, %v1256
    %v1259 = vtanh.pop %v1258
    %1261 = vrot.lane.b32.xlu0 %v1259, 32
    %v1262 = vpop.permute.xlu0 %1261
    %v1264 = vmul.f32 %v1246, %v1262
    %v1265 = vld [vmem:[#allocation3 + $0x1c] sm:$0xf]
    %v1266 = vadd.f32 %v1265, %v1236
    %v1267 = vxor.u32 %v1266, 2147483648
    %v1268 = vmul.f32 %v1267, 1.442695
    %v1269 = vpow.pop %v1268
    %v1270 = vadd.f32 %v1269, 1.0
    %v1271 = vrcp.pop %v1270
    %v1272 = vmul.f32 1.0, %v1271
    %v1273 = vtanh.pop %v1266
    %v1274 = vmul.f32 %v1272, %v1150
    %1276 = vrot.lane.b32.xlu0 %v1273, 32
    %v1277 = vpop.permute.xlu0 %1276
    %v1279 = vmul.f32 %v1272, %v1277
    %1281 = vrot.lane.b32.xlu0 %v1279, 32
    %v1282 = vpop.permute.xlu0 %1281
    %v1284 = vadd.f32 %v1274, %v1282
    %v1285 = vtanh.pop %v1284
    %1287 = vrot.lane.b32.xlu0 %v1285, 32
    %v1288 = vpop.permute.xlu0 %1287
    %v1290 = vmul.f32 %v1272, %v1288
    %1292 = vrot.lane.b32.xlu0 %v1290, 64
    %v1293 = vpop.permute.xlu0 %1292
    %1296 = vrot.lane.b32.xlu0 %v1264, 96
    %v1297 = vpop.permute.xlu0 %1296
    %v1299 = vsel %vm224, %v1293, %v1297
    %v1301 = vsel %vm357, %v1299, 0
    %1303 = vmatprep.subr.mxu0 %v199
    %1304 = vmatpush1.msra.mxu0 %v198
    %1305 = vmatprep.subr.mxu0 %v201
    %1306 = vmatpush1.msra.mxu0 %v200
    %1307 = vmatprep.subr.mxu0 %v203
    %1308 = vmatpush1.msra.mxu0 %v202
    %1309 = vmatprep.subr.mxu0 %v205
    %1310 = vmatpush1.msra.mxu0 %v204
    %1311 = vmatprep.subr.mxu0 %v207
    %1312 = vmatpush1.msra.mxu0 %v206
    %1313 = vmatprep.subr.mxu0 %v209
    %1314 = vmatpush1.msra.mxu0 %v208
    %1315 = vmatprep.subr.mxu0 %v211
    %1316 = vmatpush1.msra.mxu0 %v210
    %1317 = vmatprep.subr.mxu0 %v213
    %1318 = vmatpush1.msra.mxu0 %v212
    %1319 = vmatprep.subr.mxu0 0.0
    %1320 = vmatpush1.msra.mxu0 0.0
    %1321 = vmatprep.subr.mxu0 0.0
    %1322 = vmatpush1.msra.mxu0 0.0
    %1323 = vmatprep.subr.mxu0 0.0
    %1324 = vmatpush1.msra.mxu0 0.0
    %1325 = vmatprep.subr.mxu0 0.0
    %1326 = vmatpush1.msra.mxu0 0.0
    %1327 = vmatprep.subr.mxu0 0.0
    %1328 = vmatpush1.msra.mxu0 0.0
    %1329 = vmatprep.subr.mxu0 0.0
    %1330 = vmatpush1.msra.mxu0 0.0
    %1331 = vmatprep.subr.mxu0 0.0
    %1332 = vmatpush1.msra.mxu0 0.0
    %1333 = vmatprep.subr.mxu0 0.0
    %1334 = vmatpush1.msra.mxu0 0.0
    %1335 = vmatprep.subr.mxu0 0.0
    %1336 = vmatpush1.msra.mxu0 0.0
    %1337 = vmatprep.subr.mxu0 0.0
    %1338 = vmatpush1.msra.mxu0 0.0
    %1339 = vmatprep.subr.mxu0 0.0
    %1340 = vmatpush1.msra.mxu0 0.0
    %1341 = vmatprep.subr.mxu0 0.0
    %1342 = vmatpush1.msra.mxu0 0.0
    %1343 = vmatprep.subr.mxu0 0.0
    %1344 = vmatpush1.msra.mxu0 0.0
    %1345 = vmatprep.subr.mxu0 0.0
    %1346 = vmatpush1.msra.mxu0 0.0
    %1347 = vmatprep.subr.mxu0 0.0
    %1348 = vmatpush1.msra.mxu0 0.0
    %1349 = vmatprep.subr.mxu0 0.0
    %1350 = vmatpush1.msra.mxu0 0.0
    %1351 = vmatprep.subr.mxu0 0.0
    %1352 = vmatpush1.msra.mxu0 0.0
    %1353 = vmatprep.subr.mxu0 0.0
    %1354 = vmatpush1.msra.mxu0 0.0
    %1355 = vmatprep.subr.mxu0 0.0
    %1356 = vmatpush1.msra.mxu0 0.0
    %1357 = vmatprep.subr.mxu0 0.0
    %1358 = vmatpush1.msra.mxu0 0.0
    %1359 = vmatprep.subr.mxu0 0.0
    %1360 = vmatpush1.msra.mxu0 0.0
    %1361 = vmatprep.subr.mxu0 0.0
    %1362 = vmatpush1.msra.mxu0 0.0
    %1363 = vmatprep.subr.mxu0 0.0
    %1364 = vmatpush1.msra.mxu0 0.0
    %1365 = vmatprep.subr.mxu0 0.0
    %1366 = vmatpush1.msra.mxu0 0.0
    %1367 = vmatprep.mubr.f32.mxu0 0.0
    %1368 = vmatmul.mubr.f32.gmra.mrb[0].mxu0 %v1301
    %v1369 = vpop.f32.mrb[0].mxu0
    %v1370 = vpop.f32.mrb[0].mxu0
    %v1371 = vadd.f32 0.0, %v1370
    %1372 = vdwg.mxu0
    %v1373 = vadd.f32 %v1371, %v435
    %v1374 = vxor.u32 %v1373, 2147483648
    %v1375 = vmul.f32 %v1374, 1.442695
    %v1376 = vpow.pop %v1375
    %v1377 = vadd.f32 %v1376, 1.0
    %v1378 = vrcp.pop %v1377
    %v1379 = vmul.f32 1.0, %v1378
    %v1380 = vtanh.pop %v1373
    %v1381 = vmul.f32 %v1379, %v1258
    %1383 = vrot.lane.b32.xlu0 %v1380, 32
    %v1384 = vpop.permute.xlu0 %1383
    %v1386 = vmul.f32 %v1379, %v1384
    %1388 = vrot.lane.b32.xlu0 %v1386, 32
    %v1389 = vpop.permute.xlu0 %1388
    %v1391 = vadd.f32 %v1381, %v1389
    %v1392 = vtanh.pop %v1391
    %1394 = vrot.lane.b32.xlu0 %v1392, 32
    %v1395 = vpop.permute.xlu0 %1394
    %v1397 = vmul.f32 %v1379, %v1395
    %v1398 = vld [vmem:[#allocation9 + $0x20] sm:$0xff]
    %v1399 = vld [vmem:[#allocation9 + $0x28] sm:$0xff]
    %v1400 = vld [vmem:[#allocation9 + $0x30] sm:$0xff]
    %v1401 = vld [vmem:[#allocation9 + $0x38] sm:$0xff]
    %v1402 = vld [vmem:[#allocation10 + $0x80] sm:$0xff]
    %v1403 = vld [vmem:[#allocation10 + $0x88] sm:$0xff]
    %v1404 = vld [vmem:[#allocation10 + $0x90] sm:$0xff]
    %v1405 = vld [vmem:[#allocation10 + $0x98] sm:$0xff]
    %v1406 = vld [vmem:[#allocation10 + $0xa0] sm:$0xff]
    %v1407 = vld [vmem:[#allocation10 + $0xa8] sm:$0xff]
    %v1408 = vld [vmem:[#allocation10 + $0xb0] sm:$0xff]
    %v1409 = vld [vmem:[#allocation10 + $0xb8] sm:$0xff]
    %v1410 = vld [vmem:[#allocation10 + $0xc0] sm:$0xff]
    %v1411 = vld [vmem:[#allocation10 + $0xc8] sm:$0xff]
    %v1412 = vld [vmem:[#allocation10 + $0xd0] sm:$0xff]
    %v1413 = vld [vmem:[#allocation10 + $0xd8] sm:$0xff]
    %v1414 = vld [vmem:[#allocation10 + $0xe0] sm:$0xff]
    %v1415 = vld [vmem:[#allocation10 + $0xe8] sm:$0xff]
    %v1416 = vld [vmem:[#allocation10 + $0xf0] sm:$0xff]
    %v1417 = vld [vmem:[#allocation10 + $0xf8] sm:$0xff]
    %v1418 = vld [vmem:[%s4 + $0x2] sm:$0x1]
    %v1419 = vld [vmem:[%s4 + $0x3] sm:$0x1]
    %v1420 = vlaneseq
    %v1421 = vshrl.u32 %v1420, 7
    %v1422 = vsub.s32 0, %v1421
    %v1423 = vrot.slane %v1418, %v1422
    %1425 = vrot.lane.b32.xlu0 %v1397, 64
    %v1426 = vpop.permute.xlu0 %1425
    %v1427 = vsel %vm224, %v1426, 0
    %1429 = vmatprep.subr.mxu0 0.0
    %1430 = vmatpush1.msra.mxu0 %v1398
    %1431 = vmatprep.subr.mxu0 0.0
    %1432 = vmatpush1.msra.mxu0 %v1399
    %1433 = vmatprep.subr.mxu0 0.0
    %1434 = vmatpush1.msra.mxu0 %v1400
    %1435 = vmatprep.subr.mxu0 0.0
    %1436 = vmatpush1.msra.mxu0 %v1401
    %1437 = vmatprep.subr.mxu0 0.0
    %1438 = vmatpush1.msra.mxu0 0.0
    %1439 = vmatprep.subr.mxu0 0.0
    %1440 = vmatpush1.msra.mxu0 0.0
    %1441 = vmatprep.subr.mxu0 0.0
    %1442 = vmatpush1.msra.mxu0 0.0
    %1443 = vmatprep.subr.mxu0 0.0
    %1444 = vmatpush1.msra.mxu0 0.0
    %1445 = vmatprep.subr.mxu0 0.0
    %1446 = vmatpush1.msra.mxu0 0.0
    %1447 = vmatprep.subr.mxu0 0.0
    %1448 = vmatpush1.msra.mxu0 0.0
    %1449 = vmatprep.subr.mxu0 0.0
    %1450 = vmatpush1.msra.mxu0 0.0
    %1451 = vmatprep.subr.mxu0 0.0
    %1452 = vmatpush1.msra.mxu0 0.0
    %1453 = vmatprep.subr.mxu0 0.0
    %1454 = vmatpush1.msra.mxu0 0.0
    %1455 = vmatprep.subr.mxu0 0.0
    %1456 = vmatpush1.msra.mxu0 0.0
    %1457 = vmatprep.subr.mxu0 0.0
    %1458 = vmatpush1.msra.mxu0 0.0
    %1459 = vmatprep.subr.mxu0 0.0
    %1460 = vmatpush1.msra.mxu0 0.0
    %1461 = vmatprep.subr.mxu0 0.0
    %1462 = vmatpush1.msra.mxu0 0.0
    %1463 = vmatprep.subr.mxu0 0.0
    %1464 = vmatpush1.msra.mxu0 0.0
    %1465 = vmatprep.subr.mxu0 0.0
    %1466 = vmatpush1.msra.mxu0 0.0
    %1467 = vmatprep.subr.mxu0 0.0
    %1468 = vmatpush1.msra.mxu0 0.0
    %1469 = vmatprep.subr.mxu0 0.0
    %1470 = vmatpush1.msra.mxu0 0.0
    %1471 = vmatprep.subr.mxu0 0.0
    %1472 = vmatpush1.msra.mxu0 0.0
    %1473 = vmatprep.subr.mxu0 0.0
    %1474 = vmatpush1.msra.mxu0 0.0
    %1475 = vmatprep.subr.mxu0 0.0
    %1476 = vmatpush1.msra.mxu0 0.0
    %1477 = vmatprep.subr.mxu0 0.0
    %1478 = vmatpush1.msra.mxu0 0.0
    %1479 = vmatprep.subr.mxu0 0.0
    %1480 = vmatpush1.msra.mxu0 0.0
    %1481 = vmatprep.subr.mxu0 0.0
    %1482 = vmatpush1.msra.mxu0 0.0
    %1483 = vmatprep.subr.mxu0 0.0
    %1484 = vmatpush1.msra.mxu0 0.0
    %1485 = vmatprep.subr.mxu0 0.0
    %1486 = vmatpush1.msra.mxu0 0.0
    %1487 = vmatprep.subr.mxu0 0.0
    %1488 = vmatpush1.msra.mxu0 0.0
    %1489 = vmatprep.subr.mxu0 0.0
    %1490 = vmatpush1.msra.mxu0 0.0
    %1491 = vmatprep.subr.mxu0 0.0
    %1492 = vmatpush1.msra.mxu0 0.0
    %1493 = vmatprep.mubr.f32.mxu0 0.0
    %1494 = vmatmul.mubr.f32.gmra.mrb[0].mxu0 %v1427
    %v1495 = vpop.f32.mrb[0].mxu0
    %v1496 = vadd.f32 %v1423, %v1495
    %v1497 = vpop.f32.mrb[0].mxu0
    %1498 = vdwg.mxu0
    %1499 = vst [vmem:[#allocation3] sm:$0xf] %v1496
    %v1500 = vld [vmem:[#allocation3] sm:$0x1]
    %v1501 = vadd.f32 %v1500, 0.0
    %v1502 = vxor.u32 %v1501, 2147483648
    %v1503 = vmul.f32 %v1502, 1.442695
    %v1504 = vpow.pop %v1503
    %v1505 = vadd.f32 %v1504, 1.0
    %v1506 = vrcp.pop %v1505
    %v1507 = vmul.f32 1.0, %v1506
    %v1508 = vtanh.pop %v1501
    %v1509 = vmul.f32 %v1507, 0.0
    %1511 = vrot.lane.b32.xlu0 %v1508, 32
    %v1512 = vpop.permute.xlu0 %1511
    %v1514 = vmul.f32 %v1507, %v1512
    %1516 = vrot.lane.b32.xlu0 %v1514, 32
    %v1517 = vpop.permute.xlu0 %1516
    %v1519 = vadd.f32 %v1509, %v1517
    %v1520 = vtanh.pop %v1519
    %1522 = vrot.lane.b32.xlu0 %v1520, 32
    %v1523 = vpop.permute.xlu0 %1522
    %v1525 = vmul.f32 %v1507, %v1523
    %1527 = vrot.lane.b32.xlu0 %v1525, 64
    %v1528 = vpop.permute.xlu0 %1527
    %v1530 = vsel %vm224, %v1528, 0.0
    %v1532 = vsel %vm357, %v1530, 0
    %1534 = vmatprep.subr.mxu0 %v1403
    %1535 = vmatpush1.msra.mxu0 %v1402
    %1536 = vmatprep.subr.mxu0 %v1405
    %1537 = vmatpush1.msra.mxu0 %v1404
    %1538 = vmatprep.subr.mxu0 %v1407
    %1539 = vmatpush1.msra.mxu0 %v1406
    %1540 = vmatprep.subr.mxu0 %v1409
    %1541 = vmatpush1.msra.mxu0 %v1408
    %1542 = vmatprep.subr.mxu0 %v1411
    %1543 = vmatpush1.msra.mxu0 %v1410
    %1544 = vmatprep.subr.mxu0 %v1413
    %1545 = vmatpush1.msra.mxu0 %v1412
    %1546 = vmatprep.subr.mxu0 %v1415
    %1547 = vmatpush1.msra.mxu0 %v1414
    %1548 = vmatprep.subr.mxu0 %v1417
    %1549 = vmatpush1.msra.mxu0 %v1416
    %1550 = vmatprep.subr.mxu0 0.0
    %1551 = vmatpush1.msra.mxu0 0.0
    %1552 = vmatprep.subr.mxu0 0.0
    %1553 = vmatpush1.msra.mxu0 0.0
    %1554 = vmatprep.subr.mxu0 0.0
    %1555 = vmatpush1.msra.mxu0 0.0
    %1556 = vmatprep.subr.mxu0 0.0
    %1557 = vmatpush1.msra.mxu0 0.0
    %1558 = vmatprep.subr.mxu0 0.0
    %1559 = vmatpush1.msra.mxu0 0.0
    %1560 = vmatprep.subr.mxu0 0.0
    %1561 = vmatpush1.msra.mxu0 0.0
    %1562 = vmatprep.subr.mxu0 0.0
    %1563 = vmatpush1.msra.mxu0 0.0
    %1564 = vmatprep.subr.mxu0 0.0
    %1565 = vmatpush1.msra.mxu0 0.0
    %1566 = vmatprep.subr.mxu0 0.0
    %1567 = vmatpush1.msra.mxu0 0.0
    %1568 = vmatprep.subr.mxu0 0.0
    %1569 = vmatpush1.msra.mxu0 0.0
    %1570 = vmatprep.subr.mxu0 0.0
    %1571 = vmatpush1.msra.mxu0 0.0
    %1572 = vmatprep.subr.mxu0 0.0
    %1573 = vmatpush1.msra.mxu0 0.0
    %1574 = vmatprep.subr.mxu0 0.0
    %1575 = vmatpush1.msra.mxu0 0.0
    %1576 = vmatprep.subr.mxu0 0.0
    %1577 = vmatpush1.msra.mxu0 0.0
    %1578 = vmatprep.subr.mxu0 0.0
    %1579 = vmatpush1.msra.mxu0 0.0
    %1580 = vmatprep.subr.mxu0 0.0
    %1581 = vmatpush1.msra.mxu0 0.0
    %1582 = vmatprep.subr.mxu0 0.0
    %1583 = vmatpush1.msra.mxu0 0.0
    %1584 = vmatprep.subr.mxu0 0.0
    %1585 = vmatpush1.msra.mxu0 0.0
    %1586 = vmatprep.subr.mxu0 0.0
    %1587 = vmatpush1.msra.mxu0 0.0
    %1588 = vmatprep.subr.mxu0 0.0
    %1589 = vmatpush1.msra.mxu0 0.0
    %1590 = vmatprep.subr.mxu0 0.0
    %1591 = vmatpush1.msra.mxu0 0.0
    %1592 = vmatprep.subr.mxu0 0.0
    %1593 = vmatpush1.msra.mxu0 0.0
    %1594 = vmatprep.subr.mxu0 0.0
    %1595 = vmatpush1.msra.mxu0 0.0
    %1596 = vmatprep.subr.mxu0 0.0
    %1597 = vmatpush1.msra.mxu0 0.0
    %1598 = vmatprep.mubr.f32.mxu0 0.0
    %1599 = vmatmul.mubr.f32.gmra.mrb[0].mxu0 %v1532
    %v1600 = vpop.f32.mrb[0].mxu0
    %v1601 = vadd.f32 0.0, %v1600
    %v1602 = vpop.f32.mrb[0].mxu0
    %v1603 = vadd.f32 0.0, %v1602
    %1604 = vdwg.mxu0
    %v1605 = vadd.f32 %v1603, %v1419
    %v1606 = vxor.u32 %v1605, 2147483648
    %v1607 = vmul.f32 %v1606, 1.442695
    %v1608 = vpow.pop %v1607
    %v1609 = vadd.f32 %v1608, 1.0
    %v1610 = vrcp.pop %v1609
    %v1611 = vmul.f32 1.0, %v1610
    %v1612 = vtanh.pop %v1605
    %v1613 = vmul.f32 %v1611, 0.0
    %1615 = vrot.lane.b32.xlu0 %v1612, 32
    %v1616 = vpop.permute.xlu0 %1615
    %v1618 = vmul.f32 %v1611, %v1616
    %1620 = vrot.lane.b32.xlu0 %v1618, 32
    %v1621 = vpop.permute.xlu0 %1620
    %v1623 = vadd.f32 %v1613, %v1621
    %v1624 = vtanh.pop %v1623
    %1626 = vrot.lane.b32.xlu0 %v1624, 32
    %v1627 = vpop.permute.xlu0 %1626
    %v1629 = vmul.f32 %v1611, %v1627
    %1631 = vrot.lane.b32.xlu0 %v1629, 64
    %v1632 = vpop.permute.xlu0 %1631
    %1634 = vst.msk [vmem:[#allocation4] sm:$0x1] %vm68, %v1632
    %v1635 = vld [vmem:[#allocation3 + $0x1] sm:$0x1]
    %v1636 = vadd.f32 %v1635, %v1601
    %v1637 = vxor.u32 %v1636, 2147483648
    %v1638 = vmul.f32 %v1637, 1.442695
    %v1639 = vpow.pop %v1638
    %v1640 = vadd.f32 %v1639, 1.0
    %v1641 = vrcp.pop %v1640
    %v1642 = vmul.f32 1.0, %v1641
    %v1643 = vtanh.pop %v1636
    %v1644 = vmul.f32 %v1642, %v1519
    %1646 = vrot.lane.b32.xlu0 %v1643, 32
    %v1647 = vpop.permute.xlu0 %1646
    %v1649 = vmul.f32 %v1642, %v1647
    %1651 = vrot.lane.b32.xlu0 %v1649, 32
    %v1652 = vpop.permute.xlu0 %1651
    %v1654 = vadd.f32 %v1644, %v1652
    %v1655 = vtanh.pop %v1654
    %1657 = vrot.lane.b32.xlu0 %v1655, 32
    %v1658 = vpop.permute.xlu0 %1657
    %v1660 = vmul.f32 %v1642, %v1658
    %1662 = vrot.lane.b32.xlu0 %v1660, 64
    %v1663 = vpop.permute.xlu0 %1662
    %1665 = vrot.lane.b32.xlu0 %v1629, 96
    %v1666 = vpop.permute.xlu0 %1665
    %v1668 = vsel %vm224, %v1663, %v1666
    %v1670 = vsel %vm357, %v1668, 0
    %1672 = vmatprep.subr.mxu0 %v1403
    %1673 = vmatpush1.msra.mxu0 %v1402
    %1674 = vmatprep.subr.mxu0 %v1405
    %1675 = vmatpush1.msra.mxu0 %v1404
    %1676 = vmatprep.subr.mxu0 %v1407
    %1677 = vmatpush1.msra.mxu0 %v1406
    %1678 = vmatprep.subr.mxu0 %v1409
    %1679 = vmatpush1.msra.mxu0 %v1408
    %1680 = vmatprep.subr.mxu0 %v1411
    %1681 = vmatpush1.msra.mxu0 %v1410
    %1682 = vmatprep.subr.mxu0 %v1413
    %1683 = vmatpush1.msra.mxu0 %v1412
    %1684 = vmatprep.subr.mxu0 %v1415
    %1685 = vmatpush1.msra.mxu0 %v1414
    %1686 = vmatprep.subr.mxu0 %v1417
    %1687 = vmatpush1.msra.mxu0 %v1416
    %1688 = vmatprep.subr.mxu0 0.0
    %1689 = vmatpush1.msra.mxu0 0.0
    %1690 = vmatprep.subr.mxu0 0.0
    %1691 = vmatpush1.msra.mxu0 0.0
    %1692 = vmatprep.subr.mxu0 0.0
    %1693 = vmatpush1.msra.mxu0 0.0
    %1694 = vmatprep.subr.mxu0 0.0
    %1695 = vmatpush1.msra.mxu0 0.0
    %1696 = vmatprep.subr.mxu0 0.0
    %1697 = vmatpush1.msra.mxu0 0.0
    %1698 = vmatprep.subr.mxu0 0.0
    %1699 = vmatpush1.msra.mxu0 0.0
    %1700 = vmatprep.subr.mxu0 0.0
    %1701 = vmatpush1.msra.mxu0 0.0
    %1702 = vmatprep.subr.mxu0 0.0
    %1703 = vmatpush1.msra.mxu0 0.0
    %1704 = vmatprep.subr.mxu0 0.0
    %1705 = vmatpush1.msra.mxu0 0.0
    %1706 = vmatprep.subr.mxu0 0.0
    %1707 = vmatpush1.msra.mxu0 0.0
    %1708 = vmatprep.subr.mxu0 0.0
    %1709 = vmatpush1.msra.mxu0 0.0
    %1710 = vmatprep.subr.mxu0 0.0
    %1711 = vmatpush1.msra.mxu0 0.0
    %1712 = vmatprep.subr.mxu0 0.0
    %1713 = vmatpush1.msra.mxu0 0.0
    %1714 = vmatprep.subr.mxu0 0.0
    %1715 = vmatpush1.msra.mxu0 0.0
    %1716 = vmatprep.subr.mxu0 0.0
    %1717 = vmatpush1.msra.mxu0 0.0
    %1718 = vmatprep.subr.mxu0 0.0
    %1719 = vmatpush1.msra.mxu0 0.0
    %1720 = vmatprep.subr.mxu0 0.0
    %1721 = vmatpush1.msra.mxu0 0.0
    %1722 = vmatprep.subr.mxu0 0.0
    %1723 = vmatpush1.msra.mxu0 0.0
    %1724 = vmatprep.subr.mxu0 0.0
    %1725 = vmatpush1.msra.mxu0 0.0
    %1726 = vmatprep.subr.mxu0 0.0
    %1727 = vmatpush1.msra.mxu0 0.0
    %1728 = vmatprep.subr.mxu0 0.0
    %1729 = vmatpush1.msra.mxu0 0.0
    %1730 = vmatprep.subr.mxu0 0.0
    %1731 = vmatpush1.msra.mxu0 0.0
    %1732 = vmatprep.subr.mxu0 0.0
    %1733 = vmatpush1.msra.mxu0 0.0
    %1734 = vmatprep.subr.mxu0 0.0
    %1735 = vmatpush1.msra.mxu0 0.0
    %1736 = vmatprep.mubr.f32.mxu0 0.0
    %1737 = vmatmul.mubr.f32.gmra.mrb[0].mxu0 %v1670
    %v1738 = vpop.f32.mrb[0].mxu0
    %v1739 = vadd.f32 0.0, %v1738
    %v1740 = vpop.f32.mrb[0].mxu0
    %v1741 = vadd.f32 0.0, %v1740
    %1742 = vdwg.mxu0
    %v1743 = vadd.f32 %v1741, %v1419
    %v1744 = vxor.u32 %v1743, 2147483648
    %v1745 = vmul.f32 %v1744, 1.442695
    %v1746 = vpow.pop %v1745
    %v1747 = vadd.f32 %v1746, 1.0
    %v1748 = vrcp.pop %v1747
    %v1749 = vmul.f32 1.0, %v1748
    %v1750 = vtanh.pop %v1743
    %v1751 = vmul.f32 %v1749, %v1623
    %1753 = vrot.lane.b32.xlu0 %v1750, 32
    %v1754 = vpop.permute.xlu0 %1753
    %v1756 = vmul.f32 %v1749, %v1754
    %1758 = vrot.lane.b32.xlu0 %v1756, 32
    %v1759 = vpop.permute.xlu0 %1758
    %v1761 = vadd.f32 %v1751, %v1759
    %v1762 = vtanh.pop %v1761
    %1764 = vrot.lane.b32.xlu0 %v1762, 32
    %v1765 = vpop.permute.xlu0 %1764
    %v1767 = vmul.f32 %v1749, %v1765
    %1769 = vrot.lane.b32.xlu0 %v1767, 64
    %v1770 = vpop.permute.xlu0 %1769
    %1772 = vst.msk [vmem:[#allocation4 + $0x1] sm:$0x1] %vm68, %v1770
    %v1773 = vld [vmem:[#allocation3 + $0x2] sm:$0x1]
    %v1774 = vadd.f32 %v1773, %v1739
    %v1775 = vxor.u32 %v1774, 2147483648
    %v1776 = vmul.f32 %v1775, 1.442695
    %v1777 = vpow.pop %v1776
    %v1778 = vadd.f32 %v1777, 1.0
    %v1779 = vrcp.pop %v1778
    %v1780 = vmul.f32 1.0, %v1779
    %v1781 = vtanh.pop %v1774
    %v1782 = vmul.f32 %v1780, %v1654
    %1784 = vrot.lane.b32.xlu0 %v1781, 32
    %v1785 = vpop.permute.xlu0 %1784
    %v1787 = vmul.f32 %v1780, %v1785
    %1789 = vrot.lane.b32.xlu0 %v1787, 32
    %v1790 = vpop.permute.xlu0 %1789
    %v1792 = vadd.f32 %v1782, %v1790
    %v1793 = vtanh.pop %v1792
    %1795 = vrot.lane.b32.xlu0 %v1793, 32
    %v1796 = vpop.permute.xlu0 %1795
    %v1798 = vmul.f32 %v1780, %v1796
    %1800 = vrot.lane.b32.xlu0 %v1798, 64
    %v1801 = vpop.permute.xlu0 %1800
    %1803 = vrot.lane.b32.xlu0 %v1767, 96
    %v1804 = vpop.permute.xlu0 %1803
    %v1806 = vsel %vm224, %v1801, %v1804
    %v1808 = vsel %vm357, %v1806, 0
    %1810 = vmatprep.subr.mxu0 %v1403
    %1811 = vmatpush1.msra.mxu0 %v1402
    %1812 = vmatprep.subr.mxu0 %v1405
    %1813 = vmatpush1.msra.mxu0 %v1404
    %1814 = vmatprep.subr.mxu0 %v1407
    %1815 = vmatpush1.msra.mxu0 %v1406
    %1816 = vmatprep.subr.mxu0 %v1409
    %1817 = vmatpush1.msra.mxu0 %v1408
    %1818 = vmatprep.subr.mxu0 %v1411
    %1819 = vmatpush1.msra.mxu0 %v1410
    %1820 = vmatprep.subr.mxu0 %v1413
    %1821 = vmatpush1.msra.mxu0 %v1412
    %1822 = vmatprep.subr.mxu0 %v1415
    %1823 = vmatpush1.msra.mxu0 %v1414
    %1824 = vmatprep.subr.mxu0 %v1417
    %1825 = vmatpush1.msra.mxu0 %v1416
    %1826 = vmatprep.subr.mxu0 0.0
    %1827 = vmatpush1.msra.mxu0 0.0
    %1828 = vmatprep.subr.mxu0 0.0
    %1829 = vmatpush1.msra.mxu0 0.0
    %1830 = vmatprep.subr.mxu0 0.0
    %1831 = vmatpush1.msra.mxu0 0.0
    %1832 = vmatprep.subr.mxu0 0.0
    %1833 = vmatpush1.msra.mxu0 0.0
    %1834 = vmatprep.subr.mxu0 0.0
    %1835 = vmatpush1.msra.mxu0 0.0
    %1836 = vmatprep.subr.mxu0 0.0
    %1837 = vmatpush1.msra.mxu0 0.0
    %1838 = vmatprep.subr.mxu0 0.0
    %1839 = vmatpush1.msra.mxu0 0.0
    %1840 = vmatprep.subr.mxu0 0.0
    %1841 = vmatpush1.msra.mxu0 0.0
    %1842 = vmatprep.subr.mxu0 0.0
    %1843 = vmatpush1.msra.mxu0 0.0
    %1844 = vmatprep.subr.mxu0 0.0
    %1845 = vmatpush1.msra.mxu0 0.0
    %1846 = vmatprep.subr.mxu0 0.0
    %1847 = vmatpush1.msra.mxu0 0.0
    %1848 = vmatprep.subr.mxu0 0.0
    %1849 = vmatpush1.msra.mxu0 0.0
    %1850 = vmatprep.subr.mxu0 0.0
    %1851 = vmatpush1.msra.mxu0 0.0
    %1852 = vmatprep.subr.mxu0 0.0
    %1853 = vmatpush1.msra.mxu0 0.0
    %1854 = vmatprep.subr.mxu0 0.0
    %1855 = vmatpush1.msra.mxu0 0.0
    %1856 = vmatprep.subr.mxu0 0.0
    %1857 = vmatpush1.msra.mxu0 0.0
    %1858 = vmatprep.subr.mxu0 0.0
    %1859 = vmatpush1.msra.mxu0 0.0
    %1860 = vmatprep.subr.mxu0 0.0
    %1861 = vmatpush1.msra.mxu0 0.0
    %1862 = vmatprep.subr.mxu0 0.0
    %1863 = vmatpush1.msra.mxu0 0.0
    %1864 = vmatprep.subr.mxu0 0.0
    %1865 = vmatpush1.msra.mxu0 0.0
    %1866 = vmatprep.subr.mxu0 0.0
    %1867 = vmatpush1.msra.mxu0 0.0
    %1868 = vmatprep.subr.mxu0 0.0
    %1869 = vmatpush1.msra.mxu0 0.0
    %1870 = vmatprep.subr.mxu0 0.0
    %1871 = vmatpush1.msra.mxu0 0.0
    %1872 = vmatprep.subr.mxu0 0.0
    %1873 = vmatpush1.msra.mxu0 0.0
    %1874 = vmatprep.mubr.f32.mxu0 0.0
    %1875 = vmatmul.mubr.f32.gmra.mrb[0].mxu0 %v1808
    %v1876 = vpop.f32.mrb[0].mxu0
    %v1877 = vadd.f32 0.0, %v1876
    %v1878 = vpop.f32.mrb[0].mxu0
    %v1879 = vadd.f32 0.0, %v1878
    %1880 = vdwg.mxu0
    %v1881 = vadd.f32 %v1879, %v1419
    %v1882 = vxor.u32 %v1881, 2147483648
    %v1883 = vmul.f32 %v1882, 1.442695
    %v1884 = vpow.pop %v1883
    %v1885 = vadd.f32 %v1884, 1.0
    %v1886 = vrcp.pop %v1885
    %v1887 = vmul.f32 1.0, %v1886
    %v1888 = vtanh.pop %v1881
    %v1889 = vmul.f32 %v1887, %v1761
    %1891 = vrot.lane.b32.xlu0 %v1888, 32
    %v1892 = vpop.permute.xlu0 %1891
    %v1894 = vmul.f32 %v1887, %v1892
    %1896 = vrot.lane.b32.xlu0 %v1894, 32
    %v1897 = vpop.permute.xlu0 %1896
    %v1899 = vadd.f32 %v1889, %v1897
    %v1900 = vtanh.pop %v1899
    %1902 = vrot.lane.b32.xlu0 %v1900, 32
    %v1903 = vpop.permute.xlu0 %1902
    %v1905 = vmul.f32 %v1887, %v1903
    %1907 = vrot.lane.b32.xlu0 %v1905, 64
    %v1908 = vpop.permute.xlu0 %1907
    %1910 = vst.msk [vmem:[#allocation4 + $0x2] sm:$0x1] %vm68, %v1908
    %v1911 = vld [vmem:[#allocation3 + $0x3] sm:$0x1]
    %v1912 = vadd.f32 %v1911, %v1877
    %v1913 = vxor.u32 %v1912, 2147483648
    %v1914 = vmul.f32 %v1913, 1.442695
    %v1915 = vpow.pop %v1914
    %v1916 = vadd.f32 %v1915, 1.0
    %v1917 = vrcp.pop %v1916
    %v1918 = vmul.f32 1.0, %v1917
    %v1919 = vtanh.pop %v1912
    %v1920 = vmul.f32 %v1918, %v1792
    %1922 = vrot.lane.b32.xlu0 %v1919, 32
    %v1923 = vpop.permute.xlu0 %1922
    %v1925 = vmul.f32 %v1918, %v1923
    %1927 = vrot.lane.b32.xlu0 %v1925, 32
    %v1928 = vpop.permute.xlu0 %1927
    %v1930 = vadd.f32 %v1920, %v1928
    %v1931 = vtanh.pop %v1930
    %1933 = vrot.lane.b32.xlu0 %v1931, 32
    %v1934 = vpop.permute.xlu0 %1933
    %v1936 = vmul.f32 %v1918, %v1934
    %1938 = vrot.lane.b32.xlu0 %v1936, 64
    %v1939 = vpop.permute.xlu0 %1938
    %1941 = vrot.lane.b32.xlu0 %v1905, 96
    %v1942 = vpop.permute.xlu0 %1941
    %v1944 = vsel %vm224, %v1939, %v1942
    %v1946 = vsel %vm357, %v1944, 0
    %1948 = vmatprep.subr.mxu0 %v1403
    %1949 = vmatpush1.msra.mxu0 %v1402
    %1950 = vmatprep.subr.mxu0 %v1405
    %1951 = vmatpush1.msra.mxu0 %v1404
    %1952 = vmatprep.subr.mxu0 %v1407
    %1953 = vmatpush1.msra.mxu0 %v1406
    %1954 = vmatprep.subr.mxu0 %v1409
    %1955 = vmatpush1.msra.mxu0 %v1408
    %1956 = vmatprep.subr.mxu0 %v1411
    %1957 = vmatpush1.msra.mxu0 %v1410
    %1958 = vmatprep.subr.mxu0 %v1413
    %1959 = vmatpush1.msra.mxu0 %v1412
    %1960 = vmatprep.subr.mxu0 %v1415
    %1961 = vmatpush1.msra.mxu0 %v1414
    %1962 = vmatprep.subr.mxu0 %v1417
    %1963 = vmatpush1.msra.mxu0 %v1416
    %1964 = vmatprep.subr.mxu0 0.0
    %1965 = vmatpush1.msra.mxu0 0.0
    %1966 = vmatprep.subr.mxu0 0.0
    %1967 = vmatpush1.msra.mxu0 0.0
    %1968 = vmatprep.subr.mxu0 0.0
    %1969 = vmatpush1.msra.mxu0 0.0
    %1970 = vmatprep.subr.mxu0 0.0
    %1971 = vmatpush1.msra.mxu0 0.0
    %1972 = vmatprep.subr.mxu0 0.0
    %1973 = vmatpush1.msra.mxu0 0.0
    %1974 = vmatprep.subr.mxu0 0.0
    %1975 = vmatpush1.msra.mxu0 0.0
    %1976 = vmatprep.subr.mxu0 0.0
    %1977 = vmatpush1.msra.mxu0 0.0
    %1978 = vmatprep.subr.mxu0 0.0
    %1979 = vmatpush1.msra.mxu0 0.0
    %1980 = vmatprep.subr.mxu0 0.0
    %1981 = vmatpush1.msra.mxu0 0.0
    %1982 = vmatprep.subr.mxu0 0.0
    %1983 = vmatpush1.msra.mxu0 0.0
    %1984 = vmatprep.subr.mxu0 0.0
    %1985 = vmatpush1.msra.mxu0 0.0
    %1986 = vmatprep.subr.mxu0 0.0
    %1987 = vmatpush1.msra.mxu0 0.0
    %1988 = vmatprep.subr.mxu0 0.0
    %1989 = vmatpush1.msra.mxu0 0.0
    %1990 = vmatprep.subr.mxu0 0.0
    %1991 = vmatpush1.msra.mxu0 0.0
    %1992 = vmatprep.subr.mxu0 0.0
    %1993 = vmatpush1.msra.mxu0 0.0
    %1994 = vmatprep.subr.mxu0 0.0
    %1995 = vmatpush1.msra.mxu0 0.0
    %1996 = vmatprep.subr.mxu0 0.0
    %1997 = vmatpush1.msra.mxu0 0.0
    %1998 = vmatprep.subr.mxu0 0.0
    %1999 = vmatpush1.msra.mxu0 0.0
    %2000 = vmatprep.subr.mxu0 0.0
    %2001 = vmatpush1.msra.mxu0 0.0
    %2002 = vmatprep.subr.mxu0 0.0
    %2003 = vmatpush1.msra.mxu0 0.0
    %2004 = vmatprep.subr.mxu0 0.0
    %2005 = vmatpush1.msra.mxu0 0.0
    %2006 = vmatprep.subr.mxu0 0.0
    %2007 = vmatpush1.msra.mxu0 0.0
    %2008 = vmatprep.subr.mxu0 0.0
    %2009 = vmatpush1.msra.mxu0 0.0
    %2010 = vmatprep.subr.mxu0 0.0
    %2011 = vmatpush1.msra.mxu0 0.0
    %2012 = vmatprep.mubr.f32.mxu0 0.0
    %2013 = vmatmul.mubr.f32.gmra.mrb[0].mxu0 %v1946
    %v2014 = vpop.f32.mrb[0].mxu0
    %v2015 = vpop.f32.mrb[0].mxu0
    %v2016 = vadd.f32 0.0, %v2015
    %2017 = vdwg.mxu0
    %v2018 = vadd.f32 %v2016, %v1419
    %v2019 = vxor.u32 %v2018, 2147483648
    %v2020 = vmul.f32 %v2019, 1.442695
    %v2021 = vpow.pop %v2020
    %v2022 = vadd.f32 %v2021, 1.0
    %v2023 = vrcp.pop %v2022
    %v2024 = vmul.f32 1.0, %v2023
    %v2025 = vtanh.pop %v2018
    %v2026 = vmul.f32 %v2024, %v1899
    %2028 = vrot.lane.b32.xlu0 %v2025, 32
    %v2029 = vpop.permute.xlu0 %2028
    %v2031 = vmul.f32 %v2024, %v2029
    %2033 = vrot.lane.b32.xlu0 %v2031, 32
    %v2034 = vpop.permute.xlu0 %2033
    %v2036 = vadd.f32 %v2026, %v2034
    %v2037 = vtanh.pop %v2036
    %2039 = vrot.lane.b32.xlu0 %v2037, 32
    %v2040 = vpop.permute.xlu0 %2039
    %v2042 = vmul.f32 %v2024, %v2040
    %2044 = vrot.lane.b32.xlu0 %v2042, 64
    %v2045 = vpop.permute.xlu0 %2044
    %2047 = vst.msk [vmem:[#allocation4 + $0x3] sm:$0x1] %vm68, %v2045
    %v2048 = vld [vmem:[#allocation4] sm:$0xf]
    %v2049 = vld [vmem:[%s5] sm:$0xff]
    %v2050 = vld [vmem:[%s5 + $0x8] sm:$0xff]
    %v2051 = vld [vmem:[%s5 + $0x10] sm:$0xff]
    %v2052 = vld [vmem:[%s5 + $0x18] sm:$0xff]
    %v2053 = vld [vmem:[%s5 + $0x20] sm:$0xff]
    %v2054 = vld [vmem:[%s5 + $0x28] sm:$0xff]
    %v2055 = vld [vmem:[%s5 + $0x30] sm:$0xff]
    %v2056 = vld [vmem:[%s5 + $0x38] sm:$0xff]
    %v2057 = vld [vmem:[%s5 + $0x40] sm:$0x1]
    %v2058 = vld [vmem:[%s5 + $0x41] sm:$0x1]
    %v2059 = vld [vmem:[%s5 + $0x42] sm:$0x1]
    %v2060 = vld [vmem:[%s5 + $0x43] sm:$0x1]
    %v2061 = vrot.slane %v1397, 3
    %2062 = vrot.lane.b32.xlu0 %v2061, 64
    %v2063 = vpop.permute.xlu0 %2062
    %v2064 = vsel %vm224, %v2063, 0
    %2066 = vmatprep.subr.mxu0 0.0
    %2067 = vmatpush1.msra.mxu0 %v2049
    %2068 = vmatprep.subr.mxu0 0.0
    %2069 = vmatpush1.msra.mxu0 %v2050
    %2070 = vmatprep.subr.mxu0 0.0
    %2071 = vmatpush1.msra.mxu0 %v2051
    %2072 = vmatprep.subr.mxu0 0.0
    %2073 = vmatpush1.msra.mxu0 %v2052
    %2074 = vmatprep.subr.mxu0 0.0
    %2075 = vmatpush1.msra.mxu0 0.0
    %2076 = vmatprep.subr.mxu0 0.0
    %2077 = vmatpush1.msra.mxu0 0.0
    %2078 = vmatprep.subr.mxu0 0.0
    %2079 = vmatpush1.msra.mxu0 0.0
    %2080 = vmatprep.subr.mxu0 0.0
    %2081 = vmatpush1.msra.mxu0 0.0
    %2082 = vmatprep.subr.mxu0 0.0
    %2083 = vmatpush1.msra.mxu0 0.0
    %2084 = vmatprep.subr.mxu0 0.0
    %2085 = vmatpush1.msra.mxu0 0.0
    %2086 = vmatprep.subr.mxu0 0.0
    %2087 = vmatpush1.msra.mxu0 0.0
    %2088 = vmatprep.subr.mxu0 0.0
    %2089 = vmatpush1.msra.mxu0 0.0
    %2090 = vmatprep.subr.mxu0 0.0
    %2091 = vmatpush1.msra.mxu0 0.0
    %2092 = vmatprep.subr.mxu0 0.0
    %2093 = vmatpush1.msra.mxu0 0.0
    %2094 = vmatprep.subr.mxu0 0.0
    %2095 = vmatpush1.msra.mxu0 0.0
    %2096 = vmatprep.subr.mxu0 0.0
    %2097 = vmatpush1.msra.mxu0 0.0
    %2098 = vmatprep.subr.mxu0 0.0
    %2099 = vmatpush1.msra.mxu0 0.0
    %2100 = vmatprep.subr.mxu0 0.0
    %2101 = vmatpush1.msra.mxu0 0.0
    %2102 = vmatprep.subr.mxu0 0.0
    %2103 = vmatpush1.msra.mxu0 0.0
    %2104 = vmatprep.subr.mxu0 0.0
    %2105 = vmatpush1.msra.mxu0 0.0
    %2106 = vmatprep.subr.mxu0 0.0
    %2107 = vmatpush1.msra.mxu0 0.0
    %2108 = vmatprep.subr.mxu0 0.0
    %2109 = vmatpush1.msra.mxu0 0.0
    %2110 = vmatprep.subr.mxu0 0.0
    %2111 = vmatpush1.msra.mxu0 0.0
    %2112 = vmatprep.subr.mxu0 0.0
    %2113 = vmatpush1.msra.mxu0 0.0
    %2114 = vmatprep.subr.mxu0 0.0
    %2115 = vmatpush1.msra.mxu0 0.0
    %2116 = vmatprep.subr.mxu0 0.0
    %2117 = vmatpush1.msra.mxu0 0.0
    %2118 = vmatprep.subr.mxu0 0.0
    %2119 = vmatpush1.msra.mxu0 0.0
    %2120 = vmatprep.subr.mxu0 0.0
    %2121 = vmatpush1.msra.mxu0 0.0
    %2122 = vmatprep.subr.mxu0 0.0
    %2123 = vmatpush1.msra.mxu0 0.0
    %2124 = vmatprep.subr.mxu0 0.0
    %2125 = vmatpush1.msra.mxu0 0.0
    %2126 = vmatprep.subr.mxu0 0.0
    %2127 = vmatpush1.msra.mxu0 0.0
    %2128 = vmatprep.subr.mxu0 0.0
    %2129 = vmatpush1.msra.mxu0 0.0
    %2130 = vmatprep.mubr.f32.mxu0 0.0
    %2131 = vmatmul.mubr.f32.gmra.mrb[0].mxu0 %v2064
    %v2132 = vpop.f32.mrb[0].mxu0
    %v2133 = vadd.f32 %v2057, %v2132
    %v2134 = vpop.f32.mrb[0].mxu0
    %2135 = vdwg.mxu0
    %v2136 = vlaneseq
    %v2137 = vshrl.u32 %v2136, 7
    %v2138 = vsub.s32 0, %v2137
    %v2139 = vrot.slane %v2133, %v2138
    %v2141 = vsel %vm224, %v2048, 0
    %2143 = vmatprep.subr.mxu0 0.0
    %2144 = vmatpush1.msra.mxu0 %v2053
    %2145 = vmatprep.subr.mxu0 0.0
    %2146 = vmatpush1.msra.mxu0 %v2054
    %2147 = vmatprep.subr.mxu0 0.0
    %2148 = vmatpush1.msra.mxu0 %v2055
    %2149 = vmatprep.subr.mxu0 0.0
    %2150 = vmatpush1.msra.mxu0 %v2056
    %2151 = vmatprep.subr.mxu0 0.0
    %2152 = vmatpush1.msra.mxu0 0.0
    %2153 = vmatprep.subr.mxu0 0.0
    %2154 = vmatpush1.msra.mxu0 0.0
    %2155 = vmatprep.subr.mxu0 0.0
    %2156 = vmatpush1.msra.mxu0 0.0
    %2157 = vmatprep.subr.mxu0 0.0
    %2158 = vmatpush1.msra.mxu0 0.0
    %2159 = vmatprep.subr.mxu0 0.0
    %2160 = vmatpush1.msra.mxu0 0.0
    %2161 = vmatprep.subr.mxu0 0.0
    %2162 = vmatpush1.msra.mxu0 0.0
    %2163 = vmatprep.subr.mxu0 0.0
    %2164 = vmatpush1.msra.mxu0 0.0
    %2165 = vmatprep.subr.mxu0 0.0
    %2166 = vmatpush1.msra.mxu0 0.0
    %2167 = vmatprep.subr.mxu0 0.0
    %2168 = vmatpush1.msra.mxu0 0.0
    %2169 = vmatprep.subr.mxu0 0.0
    %2170 = vmatpush1.msra.mxu0 0.0
    %2171 = vmatprep.subr.mxu0 0.0
    %2172 = vmatpush1.msra.mxu0 0.0
    %2173 = vmatprep.subr.mxu0 0.0
    %2174 = vmatpush1.msra.mxu0 0.0
    %2175 = vmatprep.subr.mxu0 0.0
    %2176 = vmatpush1.msra.mxu0 0.0
    %2177 = vmatprep.subr.mxu0 0.0
    %2178 = vmatpush1.msra.mxu0 0.0
    %2179 = vmatprep.subr.mxu0 0.0
    %2180 = vmatpush1.msra.mxu0 0.0
    %2181 = vmatprep.subr.mxu0 0.0
    %2182 = vmatpush1.msra.mxu0 0.0
    %2183 = vmatprep.subr.mxu0 0.0
    %2184 = vmatpush1.msra.mxu0 0.0
    %2185 = vmatprep.subr.mxu0 0.0
    %2186 = vmatpush1.msra.mxu0 0.0
    %2187 = vmatprep.subr.mxu0 0.0
    %2188 = vmatpush1.msra.mxu0 0.0
    %2189 = vmatprep.subr.mxu0 0.0
    %2190 = vmatpush1.msra.mxu0 0.0
    %2191 = vmatprep.subr.mxu0 0.0
    %2192 = vmatpush1.msra.mxu0 0.0
    %2193 = vmatprep.subr.mxu0 0.0
    %2194 = vmatpush1.msra.mxu0 0.0
    %2195 = vmatprep.subr.mxu0 0.0
    %2196 = vmatpush1.msra.mxu0 0.0
    %2197 = vmatprep.subr.mxu0 0.0
    %2198 = vmatpush1.msra.mxu0 0.0
    %2199 = vmatprep.subr.mxu0 0.0
    %2200 = vmatpush1.msra.mxu0 0.0
    %2201 = vmatprep.subr.mxu0 0.0
    %2202 = vmatpush1.msra.mxu0 0.0
    %2203 = vmatprep.subr.mxu0 0.0
    %2204 = vmatpush1.msra.mxu0 0.0
    %2205 = vmatprep.subr.mxu0 0.0
    %2206 = vmatpush1.msra.mxu0 0.0
    %2207 = vmatprep.mubr.f32.mxu0 0.0
    %2208 = vmatmul.mubr.f32.gmra.mrb[0].mxu0 %v2141
    %v2209 = vpop.f32.mrb[0].mxu0
    %v2210 = vadd.f32 %v2139, %v2209
    %v2211 = vpop.f32.mrb[0].mxu0
    %2212 = vdwg.mxu0
    %v2213 = vtanh.pop %v2210
    %v2214 = vlaneseq
    %v2215 = vshrl.u32 %v2214, 7
    %v2216 = vsub.s32 0, %v2215
    %v2217 = vrot.slane %v2058, %v2216
    %v2218 = vmul.f32 %v2213, %v2217
    %vm2219 = vcmask 257024
    %v2220 = vsel %vm2219, %v2218, 0.0
    %2221 = vadd.xlane.f32.xlu0 %v2220
    %v2222 = vpop.xlane.xlu0 %2221
    %vm2223 = vcmask 1043456
    %v2224 = vsel %vm2223, %v2222, -inf
    %v2225 = vrot.slane %v2224, 4
    %v2226 = vmax.f32 %v2224, %v2225
    %v2227 = vrot.slane %v2226, 2
    %v2228 = vmax.f32 %v2226, %v2227
    %v2229 = vrot.slane %v2228, 1
    %v2230 = vmax.f32 %v2228, %v2229
    %v2231 = vsub.f32 %v2222, %v2230
    %v2232 = vmul.f32 %v2231, 1.442695
    %v2233 = vpow.pop %v2232
    %v2234 = vsel %vm2223, %v2233, 0.0
    %v2235 = vrot.slane %v2234, 4
    %v2236 = vadd.f32 %v2234, %v2235
    %v2237 = vrot.slane %v2236, 2
    %v2238 = vadd.f32 %v2236, %v2237
    %v2239 = vrot.slane %v2238, 1
    %v2240 = vadd.f32 %v2238, %v2239
    %v2241 = vrcp.pop %v2240
    %v2242 = vmul.f32 %v2233, %v2241
    %v2243 = vmul.f32 %v2242, %v2048
    %v2244 = vsel %vm2219, %v2243, 0.0
    %v2245 = vrot.slane %v2244, 4
    %v2246 = vadd.f32 %v2244, %v2245
    %v2247 = vrot.slane %v2246, 2
    %v2248 = vadd.f32 %v2246, %v2247
    %v2249 = vrot.slane %v2248, 1
    %v2250 = vadd.f32 %v2248, %v2249
    %v2251 = vmul.f32 %v2250, %v2059
    %v2252 = vsel %vm68, %v2251, 0.0
    %2253 = vadd.xlane.f32.xlu0 %v2252
    %v2254 = vpop.xlane.xlu0 %2253
    %v2255 = vadd.f32 %v2254, %v2060
    %vm2256 = vcmask 0
    %2257 = vst.msk [vmem:[#allocation12] sm:$0x1] %vm2256, %v2255
    // Predicated region
    $region38: #{forward.1} parent=1 // pred_check
      _
    $region39: #{forward.1} parent=1 // pred_check_branch
      %2259 = sbr.rel (0) target = $region41
    $region40: #{forward.1} parent=1 // pred_region
      %s2261 = ssub.s32 16, 16
      %2262 = vsyncadd [#allocation7], %s2261
      %s2264 = sshll.u32 [#allocation12], 4
      %s2265 = int_to_ptr.vmem [resolvable:$true] %s2264
      %2267 = dma.vmem_to_hbm [thread:$0]  %s2265, 16, %s6, [#allocation7]
    $region41: #{forward.1} parent=1 // pred_fallthru
      _
    // Predicated region
    $region42: #{forward.1} parent=1 // pred_check
      _
    $region43: #{forward.1} parent=1 // pred_check_branch
      %2269 = sbr.rel (0) target = $region45
    $region44: #{forward.1} parent=1 // pred_region
      %2270 = dma.done [#allocation7], 16
    $region45: #{forward.1} parent=1 // pred_fallthru
      _
    %2271 = vsyncpa [#allocation6], 1
    %2272 = vsyncpa [#allocation11], 1
    %2273 = vsyncpa [#allocation7], 1
    %2274 = vsyncpa [#allocation8], 1

</llo_original>
